<compile_context>
chip_gen: v6e
topology: v6e:2x2x1
jax: 0.10.0
libtpu: 0.0.40
codegen_flags: <defaults>
</compile_context>

<pallas_src>
import jax
import jax.numpy as jnp
from jax import lax
from jax.experimental import pallas as pl
from jax.experimental.pallas import tpu as pltpu


def _pick_row_tile(Ho, Wo, target_pixels=2048):
    """Largest divisor of Ho whose tile (rows * Wo) stays <= target_pixels."""
    cap = max(1, target_pixels // max(Wo, 1))
    best = 1
    for d in range(1, Ho + 1):
        if Ho % d == 0 and d <= cap:
            best = d
    return best


def conv_layer_forward(x, weight, bias, stride, *,
                       compute_dtype=jnp.bfloat16, target_tile_pixels=2048):
    """ReflectionPad2d(K//2) + Conv2d(weight, bias, stride). x is NCHW."""
    N, Cin, H, W = x.shape
    Cout, Cin_w, K, K2 = weight.shape
    assert Cin_w == Cin and K == K2
    assert stride >= 1
    pad = K // 2
    # ReflectionPad2d requires the pad to be smaller than the spatial dims.
    assert pad < H and pad < W, "reflection pad must be < spatial dims"

    out_dtype = x.dtype

    # ---- glue (pure layout, cheap): reflection pad + NCHW -> NHWC ----
    xp = jnp.pad(x, ((0, 0), (0, 0), (pad, pad), (pad, pad)), mode="reflect")
    Hp, Wp = H + 2 * pad, W + 2 * pad
    Ho = (Hp - K) // stride + 1
    Wo = (Wp - K) // stride + 1

    xh = xp.transpose(0, 2, 3, 1).astype(compute_dtype)      # (N, Hp, Wp, Cin)
    xh = xh.reshape(N * Hp, Wp, Cin)                         # image rows stacked

    # Lane-dense output channels: pad Cout up to a multiple of 128.
    Cp = ((Cout + 127) // 128) * 128
    # Weights as (K*K, Cin, Cp): slice [ki*K + kj] is the (Cin, Cout) tap
    # matrix, matching
    #   out[..., co] = sum_{ki,kj,ci} x[.., h*s+ki, w*s+kj, ci] * W[co, ci, ki, kj].
    wmat = weight.transpose(2, 3, 1, 0).reshape(K * K, Cin, Cout)
    wmat = jnp.pad(wmat, ((0, 0), (0, 0), (0, Cp - Cout))).astype(compute_dtype)
    bmat = jnp.pad(bias.astype(jnp.float32).reshape(1, Cout),
                   ((0, 0), (0, Cp - Cout)))

    # ---- tiling ----
    tho = _pick_row_tile(Ho, Wo, target_tile_pixels)          # output rows / step
    nT = Ho // tho
    cols_span = (Wo - 1) * stride + 1                         # padded cols touched

    def kernel(x_ref, w_ref, b_ref, o_ref):
        # x_ref: (Hp, Wp, Cin)  whole padded image, resident across the t axis
        # w_ref: (K*K, Cin, Cp) bf16; b_ref: (1, Cp) f32; o_ref: (tho, Wo, Cp)
        t = pl.program_id(1)
        row0 = pl.multiple_of(t * (tho * stride), tho * stride)
        # Accumulator initialized with the bias (f32); hoisted out of tap loops.
        acc = jnp.broadcast_to(b_ref[...], (tho * Wo, Cp)).astype(jnp.float32)
        for ki in range(K):
            # Output rows r of this tile read padded rows row0 + r*stride + ki.
            if stride == 1:
                rows = x_ref[pl.ds(row0 + ki, tho), :, :]      # (tho, Wp, Cin)
            else:
                rows = x_ref[pl.ds(row0 + ki, tho, stride=stride), :, :]
            for kj in range(K):
                if stride == 1:
                    win = rows[:, kj:kj + Wo, :]               # (tho, Wo, Cin)
                else:
                    win = lax.slice(rows, (0, kj, 0),
                                    (tho, kj + cols_span, Cin),
                                    (1, stride, 1))
                patch = win.reshape(tho * Wo, Cin)             # bf16, VMEM/vregs
                acc = acc + jnp.dot(patch, w_ref[ki * K + kj],
                                    preferred_element_type=jnp.float32)
        o_ref[...] = acc.reshape(tho, Wo, Cp).astype(o_ref.dtype)

    # VMEM budget (double-buffered blocks) with headroom, capped v7x-safe.
    itemsize_c = jnp.dtype(compute_dtype).itemsize
    img_bytes = Hp * Wp * Cin * itemsize_c
    w_bytes = K * K * Cin * Cp * itemsize_c
    out_tile_bytes = tho * Wo * Cp * jnp.dtype(out_dtype).itemsize
    per_step = img_bytes + w_bytes + Cp * 4 + out_tile_bytes
    vmem_limit = int(min(max(4 * per_step + (8 << 20), 32 << 20), 48 << 20))

    cost = pl.CostEstimate(
        flops=int(2 * N * Ho * Wo * K * K * Cin * Cp),
        transcendentals=0,
        bytes_accessed=int(xh.size * itemsize_c + wmat.size * itemsize_c
                           + bmat.size * 4
                           + N * Ho * Wo * Cp * jnp.dtype(out_dtype).itemsize),
    )

    # TODO(synk): for images too large to keep a whole padded image in VMEM,
    # switch the input to memory_space=pl.ANY and manually DMA halo row-windows
    # (double-buffered make_async_copy) instead of the per-image BlockSpec.
    out = pl.pallas_call(
        kernel,
        out_shape=jax.ShapeDtypeStruct((N * Ho, Wo, Cp), out_dtype),
        grid_spec=pltpu.PrefetchScalarGridSpec(
            num_scalar_prefetch=0,
            grid=(N, nT),
            in_specs=[
                pl.BlockSpec((Hp, Wp, Cin), lambda n, t: (n, 0, 0)),      # image
                pl.BlockSpec((K * K, Cin, Cp), lambda n, t: (0, 0, 0)),   # weights
                pl.BlockSpec((1, Cp), lambda n, t: (0, 0)),               # bias
            ],
            out_specs=pl.BlockSpec((tho, Wo, Cp),
                                   lambda n, t: (n * nT + t, 0, 0)),
        ),
        compiler_params=pltpu.CompilerParams(
            dimension_semantics=("parallel", "parallel"),
            vmem_limit_bytes=vmem_limit,
        ),
        cost_estimate=cost,
    )(xh, wmat, bmat)

    # (N*Ho, Wo, Cp) -> drop channel padding -> NCHW at the module boundary.
    y = out.reshape(N, Ho, Wo, Cp)[..., :Cout]
    return y.transpose(0, 3, 1, 2)


if __name__ == "__main__":
    # Module config (small, consistent with ConvLayer's forward).
    in_channels, out_channels, kernel_size, stride = 4, 8, 3, 1
    N, H, W = 2, 16, 16

    key = jax.random.PRNGKey(0)
    kx, kw, kb = jax.random.split(key, 3)

    x = jax.random.normal(kx, (N, in_channels, H, W), dtype=jnp.float32)

    # Deterministic PyTorch-like uniform init for Conv2d params.
    fan_in = in_channels * kernel_size * kernel_size
    bound = 1.0 / jnp.sqrt(fan_in)
    weight = jax.random.uniform(
        kw, (out_channels, in_channels, kernel_size, kernel_size),
        minval=-bound, maxval=bound, dtype=jnp.float32)
    bias = jax.random.uniform(
        kb, (out_channels,), minval=-bound, maxval=bound, dtype=jnp.float32)

    out = conv_layer_forward(x, weight, bias, stride)
    out = jax.block_until_ready(out)

    # Reference: reflection pad + VALID conv in plain JAX/XLA (f32).
    pad = kernel_size // 2
    xp = jnp.pad(x, ((0, 0), (0, 0), (pad, pad), (pad, pad)), mode="reflect")
    ref = lax.conv_general_dilated(
        xp, weight, window_strides=(stride, stride), padding="VALID",
        dimension_numbers=("NCHW", "OIHW", "NCHW"),
    ) + bias[None, :, None, None]

    assert out.shape == ref.shape, (out.shape, ref.shape)
    # bf16 matmul inputs with f32 accumulation -> tolerance loosened accordingly.
    max_err = float(jnp.max(jnp.abs(out - ref)))
    assert jnp.allclose(out, ref, atol=5e-2, rtol=5e-2), max_err

    print("KERNEL_OK")
</pallas_src>

<mosaic_0001>
module attributes {stable_mosaic.version = 11 : i64} {
  func.func @kernel(%arg0: i32, %arg1: i32, %arg2: memref<18x18x4xbf16, #tpu.memory_space<vmem>>, %arg3: memref<9x4x128xbf16, #tpu.memory_space<vmem>>, %arg4: memref<1x128xf32, #tpu.memory_space<vmem>>, %arg5: memref<16x16x128xf32, #tpu.memory_space<vmem>>) attributes {dimension_semantics = [#tpu.dimension_semantics<parallel>, #tpu.dimension_semantics<parallel>], iteration_bounds = array<i64: 2, 1>, scalar_prefetch = 0 : i64, scratch_operands = 0 : i64, tpu.core_type = #tpu.core_type<tc>, window_params = [{transform_indices = @transform_0, window_bounds = array<i64: 18, 18, 4>}, {pipeline_mode = #tpu.pipeline_mode<synchronous>, transform_indices = @transform_1, window_bounds = array<i64: 9, 4, 128>}, {pipeline_mode = #tpu.pipeline_mode<synchronous>, transform_indices = @transform_2, window_bounds = array<i64: 1, 128>}, {transform_indices = @transform_3, window_bounds = array<i64: 16, 16, 128>}]} {
    %c16_i32 = arith.constant 16 : i32
    %0 = arith.muli %arg1, %c16_i32 : i32
    %1 = tpu.assume_multiple %0, 16 : i32
    %c0 = arith.constant 0 : index
    %c0_0 = arith.constant 0 : index
    %2 = vector.load %arg4[%c0, %c0_0] : memref<1x128xf32, #tpu.memory_space<vmem>>, vector<1x128xf32>
    %3 = vector.shape_cast %2 : vector<1x128xf32> to vector<1x128xf32>
    %4 = vector.broadcast %3 : vector<1x128xf32> to vector<256x128xf32>
    %c0_i32 = arith.constant 0 : i32
    %5 = arith.addi %1, %c0_i32 : i32
    %6 = arith.index_cast %5 : i32 to index
    %c0_1 = arith.constant 0 : index
    %c0_2 = arith.constant 0 : index
    %7 = vector.load %arg2[%6, %c0_1, %c0_2] : memref<18x18x4xbf16, #tpu.memory_space<vmem>>, vector<16x18x4xbf16>
    %8 = vector.extract_strided_slice %7 {offsets = [0, 0, 0], sizes = [16, 16, 4], strides = [1, 1, 1]} : vector<16x18x4xbf16> to vector<16x16x4xbf16>
    %9 = vector.shape_cast %8 : vector<16x16x4xbf16> to vector<256x4xbf16>
    %c0_3 = arith.constant 0 : index
    %c0_4 = arith.constant 0 : index
    %c0_5 = arith.constant 0 : index
    %10 = vector.load %arg3[%c0_3, %c0_4, %c0_5] : memref<9x4x128xbf16, #tpu.memory_space<vmem>>, vector<1x4x128xbf16>
    %11 = vector.shape_cast %10 : vector<1x4x128xbf16> to vector<4x128xbf16>
    %cst = arith.constant dense<0.000000e+00> : vector<256x128xf32>
    %12 = tpu.matmul %9, %11, %cst {dimension_numbers = #tpu.dot_dimension_numbers<[1], [0], [0], [1], [0, 0, 1, 1], [], []>} : vector<256x4xbf16>, vector<4x128xbf16>, vector<256x128xf32> -> vector<256x128xf32>
    %13 = arith.addf %4, %12 : vector<256x128xf32>
    %14 = vector.extract_strided_slice %7 {offsets = [0, 1, 0], sizes = [16, 16, 4], strides = [1, 1, 1]} : vector<16x18x4xbf16> to vector<16x16x4xbf16>
    %15 = vector.shape_cast %14 : vector<16x16x4xbf16> to vector<256x4xbf16>
    %c1 = arith.constant 1 : index
    %c0_6 = arith.constant 0 : index
    %c0_7 = arith.constant 0 : index
    %16 = vector.load %arg3[%c1, %c0_6, %c0_7] : memref<9x4x128xbf16, #tpu.memory_space<vmem>>, vector<1x4x128xbf16>
    %17 = vector.shape_cast %16 : vector<1x4x128xbf16> to vector<4x128xbf16>
    %cst_8 = arith.constant dense<0.000000e+00> : vector<256x128xf32>
    %18 = tpu.matmul %15, %17, %cst_8 {dimension_numbers = #tpu.dot_dimension_numbers<[1], [0], [0], [1], [0, 0, 1, 1], [], []>} : vector<256x4xbf16>, vector<4x128xbf16>, vector<256x128xf32> -> vector<256x128xf32>
    %19 = arith.addf %13, %18 : vector<256x128xf32>
    %20 = vector.extract_strided_slice %7 {offsets = [0, 2, 0], sizes = [16, 16, 4], strides = [1, 1, 1]} : vector<16x18x4xbf16> to vector<16x16x4xbf16>
    %21 = vector.shape_cast %20 : vector<16x16x4xbf16> to vector<256x4xbf16>
    %c2 = arith.constant 2 : index
    %c0_9 = arith.constant 0 : index
    %c0_10 = arith.constant 0 : index
    %22 = vector.load %arg3[%c2, %c0_9, %c0_10] : memref<9x4x128xbf16, #tpu.memory_space<vmem>>, vector<1x4x128xbf16>
    %23 = vector.shape_cast %22 : vector<1x4x128xbf16> to vector<4x128xbf16>
    %cst_11 = arith.constant dense<0.000000e+00> : vector<256x128xf32>
    %24 = tpu.matmul %21, %23, %cst_11 {dimension_numbers = #tpu.dot_dimension_numbers<[1], [0], [0], [1], [0, 0, 1, 1], [], []>} : vector<256x4xbf16>, vector<4x128xbf16>, vector<256x128xf32> -> vector<256x128xf32>
    %25 = arith.addf %19, %24 : vector<256x128xf32>
    %c1_i32 = arith.constant 1 : i32
    %26 = arith.addi %1, %c1_i32 : i32
    %27 = arith.index_cast %26 : i32 to index
    %c0_12 = arith.constant 0 : index
    %c0_13 = arith.constant 0 : index
    %28 = vector.load %arg2[%27, %c0_12, %c0_13] : memref<18x18x4xbf16, #tpu.memory_space<vmem>>, vector<16x18x4xbf16>
    %29 = vector.extract_strided_slice %28 {offsets = [0, 0, 0], sizes = [16, 16, 4], strides = [1, 1, 1]} : vector<16x18x4xbf16> to vector<16x16x4xbf16>
    %30 = vector.shape_cast %29 : vector<16x16x4xbf16> to vector<256x4xbf16>
    %c3 = arith.constant 3 : index
    %c0_14 = arith.constant 0 : index
    %c0_15 = arith.constant 0 : index
    %31 = vector.load %arg3[%c3, %c0_14, %c0_15] : memref<9x4x128xbf16, #tpu.memory_space<vmem>>, vector<1x4x128xbf16>
    %32 = vector.shape_cast %31 : vector<1x4x128xbf16> to vector<4x128xbf16>
    %cst_16 = arith.constant dense<0.000000e+00> : vector<256x128xf32>
    %33 = tpu.matmul %30, %32, %cst_16 {dimension_numbers = #tpu.dot_dimension_numbers<[1], [0], [0], [1], [0, 0, 1, 1], [], []>} : vector<256x4xbf16>, vector<4x128xbf16>, vector<256x128xf32> -> vector<256x128xf32>
    %34 = arith.addf %25, %33 : vector<256x128xf32>
    %35 = vector.extract_strided_slice %28 {offsets = [0, 1, 0], sizes = [16, 16, 4], strides = [1, 1, 1]} : vector<16x18x4xbf16> to vector<16x16x4xbf16>
    %36 = vector.shape_cast %35 : vector<16x16x4xbf16> to vector<256x4xbf16>
    %c4 = arith.constant 4 : index
    %c0_17 = arith.constant 0 : index
    %c0_18 = arith.constant 0 : index
    %37 = vector.load %arg3[%c4, %c0_17, %c0_18] : memref<9x4x128xbf16, #tpu.memory_space<vmem>>, vector<1x4x128xbf16>
    %38 = vector.shape_cast %37 : vector<1x4x128xbf16> to vector<4x128xbf16>
    %cst_19 = arith.constant dense<0.000000e+00> : vector<256x128xf32>
    %39 = tpu.matmul %36, %38, %cst_19 {dimension_numbers = #tpu.dot_dimension_numbers<[1], [0], [0], [1], [0, 0, 1, 1], [], []>} : vector<256x4xbf16>, vector<4x128xbf16>, vector<256x128xf32> -> vector<256x128xf32>
    %40 = arith.addf %34, %39 : vector<256x128xf32>
    %41 = vector.extract_strided_slice %28 {offsets = [0, 2, 0], sizes = [16, 16, 4], strides = [1, 1, 1]} : vector<16x18x4xbf16> to vector<16x16x4xbf16>
    %42 = vector.shape_cast %41 : vector<16x16x4xbf16> to vector<256x4xbf16>
    %c5 = arith.constant 5 : index
    %c0_20 = arith.constant 0 : index
    %c0_21 = arith.constant 0 : index
    %43 = vector.load %arg3[%c5, %c0_20, %c0_21] : memref<9x4x128xbf16, #tpu.memory_space<vmem>>, vector<1x4x128xbf16>
    %44 = vector.shape_cast %43 : vector<1x4x128xbf16> to vector<4x128xbf16>
    %cst_22 = arith.constant dense<0.000000e+00> : vector<256x128xf32>
    %45 = tpu.matmul %42, %44, %cst_22 {dimension_numbers = #tpu.dot_dimension_numbers<[1], [0], [0], [1], [0, 0, 1, 1], [], []>} : vector<256x4xbf16>, vector<4x128xbf16>, vector<256x128xf32> -> vector<256x128xf32>
    %46 = arith.addf %40, %45 : vector<256x128xf32>
    %c2_i32 = arith.constant 2 : i32
    %47 = arith.addi %1, %c2_i32 : i32
    %48 = arith.index_cast %47 : i32 to index
    %c0_23 = arith.constant 0 : index
    %c0_24 = arith.constant 0 : index
    %49 = vector.load %arg2[%48, %c0_23, %c0_24] : memref<18x18x4xbf16, #tpu.memory_space<vmem>>, vector<16x18x4xbf16>
    %50 = vector.extract_strided_slice %49 {offsets = [0, 0, 0], sizes = [16, 16, 4], strides = [1, 1, 1]} : vector<16x18x4xbf16> to vector<16x16x4xbf16>
    %51 = vector.shape_cast %50 : vector<16x16x4xbf16> to vector<256x4xbf16>
    %c6 = arith.constant 6 : index
    %c0_25 = arith.constant 0 : index
    %c0_26 = arith.constant 0 : index
    %52 = vector.load %arg3[%c6, %c0_25, %c0_26] : memref<9x4x128xbf16, #tpu.memory_space<vmem>>, vector<1x4x128xbf16>
    %53 = vector.shape_cast %52 : vector<1x4x128xbf16> to vector<4x128xbf16>
    %cst_27 = arith.constant dense<0.000000e+00> : vector<256x128xf32>
    %54 = tpu.matmul %51, %53, %cst_27 {dimension_numbers = #tpu.dot_dimension_numbers<[1], [0], [0], [1], [0, 0, 1, 1], [], []>} : vector<256x4xbf16>, vector<4x128xbf16>, vector<256x128xf32> -> vector<256x128xf32>
    %55 = arith.addf %46, %54 : vector<256x128xf32>
    %56 = vector.extract_strided_slice %49 {offsets = [0, 1, 0], sizes = [16, 16, 4], strides = [1, 1, 1]} : vector<16x18x4xbf16> to vector<16x16x4xbf16>
    %57 = vector.shape_cast %56 : vector<16x16x4xbf16> to vector<256x4xbf16>
    %c7 = arith.constant 7 : index
    %c0_28 = arith.constant 0 : index
    %c0_29 = arith.constant 0 : index
    %58 = vector.load %arg3[%c7, %c0_28, %c0_29] : memref<9x4x128xbf16, #tpu.memory_space<vmem>>, vector<1x4x128xbf16>
    %59 = vector.shape_cast %58 : vector<1x4x128xbf16> to vector<4x128xbf16>
    %cst_30 = arith.constant dense<0.000000e+00> : vector<256x128xf32>
    %60 = tpu.matmul %57, %59, %cst_30 {dimension_numbers = #tpu.dot_dimension_numbers<[1], [0], [0], [1], [0, 0, 1, 1], [], []>} : vector<256x4xbf16>, vector<4x128xbf16>, vector<256x128xf32> -> vector<256x128xf32>
    %61 = arith.addf %55, %60 : vector<256x128xf32>
    %62 = vector.extract_strided_slice %49 {offsets = [0, 2, 0], sizes = [16, 16, 4], strides = [1, 1, 1]} : vector<16x18x4xbf16> to vector<16x16x4xbf16>
    %63 = vector.shape_cast %62 : vector<16x16x4xbf16> to vector<256x4xbf16>
    %c8 = arith.constant 8 : index
    %c0_31 = arith.constant 0 : index
    %c0_32 = arith.constant 0 : index
    %64 = vector.load %arg3[%c8, %c0_31, %c0_32] : memref<9x4x128xbf16, #tpu.memory_space<vmem>>, vector<1x4x128xbf16>
    %65 = vector.shape_cast %64 : vector<1x4x128xbf16> to vector<4x128xbf16>
    %cst_33 = arith.constant dense<0.000000e+00> : vector<256x128xf32>
    %66 = tpu.matmul %63, %65, %cst_33 {dimension_numbers = #tpu.dot_dimension_numbers<[1], [0], [0], [1], [0, 0, 1, 1], [], []>} : vector<256x4xbf16>, vector<4x128xbf16>, vector<256x128xf32> -> vector<256x128xf32>
    %67 = arith.addf %61, %66 : vector<256x128xf32>
    %68 = vector.shape_cast %67 : vector<256x128xf32> to vector<16x16x128xf32>
    %c0_34 = arith.constant 0 : index
    %c0_35 = arith.constant 0 : index
    %c0_36 = arith.constant 0 : index
    %69 = vector.load %arg5[%c0_34, %c0_35, %c0_36] : memref<16x16x128xf32, #tpu.memory_space<vmem>>, vector<16x16x128xf32>
    tpu.vector_store %arg5[%c0_34, %c0_35, %c0_36], %68 {strides = array<i32>} : memref<16x16x128xf32, #tpu.memory_space<vmem>>, vector<16x16x128xf32>,
    return
  }
  func.func @transform_0(%arg0: i32, %arg1: i32) -> (i32, i32, i32) {
    %c0_i32 = arith.constant 0 : i32
    %c0_i32_0 = arith.constant 0 : i32
    %c0_i32_1 = arith.constant 0 : i32
    return %arg0, %c0_i32, %c0_i32_0 : i32, i32, i32
  }
  func.func @transform_1(%arg0: i32, %arg1: i32) -> (i32, i32, i32) {
    %c0_i32 = arith.constant 0 : i32
    %c0_i32_0 = arith.constant 0 : i32
    %c0_i32_1 = arith.constant 0 : i32
    %c0_i32_2 = arith.constant 0 : i32
    return %c0_i32, %c0_i32_0, %c0_i32_1 : i32, i32, i32
  }
  func.func @transform_2(%arg0: i32, %arg1: i32) -> (i32, i32) {
    %c0_i32 = arith.constant 0 : i32
    %c0_i32_0 = arith.constant 0 : i32
    %c0_i32_1 = arith.constant 0 : i32
    return %c0_i32, %c0_i32_0 : i32, i32
  }
  func.func @transform_3(%arg0: i32, %arg1: i32) -> (i32, i32, i32) {
    %c1_i32 = arith.constant 1 : i32
    %0 = arith.muli %arg0, %c1_i32 : i32
    %1 = arith.addi %0, %arg1 : i32
    %c0_i32 = arith.constant 0 : i32
    %c0_i32_0 = arith.constant 0 : i32
    %c0_i32_1 = arith.constant 0 : i32
    return %1, %c0_i32, %c0_i32_0 : i32, i32, i32
  }
}

</mosaic_0001>

<llo_original>
// kernel: tpu_custom_call.1
$region0: #{tpu_custom_call.1}
  #allocation0 [shape = 'u32[]', space=smem, size = 0x4, offset = 0x4, fixed_abs, tag = 'smem constant byte address 0x4 - core index']
  #allocation1 [shape = 'u32[144,128]{1,0:T(1,128)}', space=vmem, size = 0x12000, scoped, tag = 'internal scratch']
  %s0 = inlined_call_operand.vmem [shape: bf16[36,18,4], index: 0, kind: input, shape index: {}]
  %s1 = inlined_call_operand.vmem [shape: bf16[9,4,128], index: 1, kind: input, shape index: {}]
  %s2 = inlined_call_operand.vmem [shape: f32[1,128], index: 2, kind: input, shape index: {}]
  %s3 = inlined_call_operand.hbm [shape: f32[32,16,128], index: 3, kind: output, shape index: {}]
  %s4 = sld [smem:[#allocation0]]
  $region45: #{tpu_custom_call.1} parent=0
    _
  %s6 = ssub.s32 1, %s4
  %s7 = scalar_select 0, %s6, %s4
  $region1: #{tpu_custom_call.1} parent=0
    #allocation2 [shape = 'u8[262144]{0}', space=vmem, size = 0x40000, scoped, tag = 'output window, operand 0']
    #allocation3 [shape = 's32[2]{0}', space=sflag, size = 0x8, scoped, tag = 'scoped memory for tpu_custom_call.1']
    %8 = vsyncpa [#allocation3], 0
    %s9 = scalar_lea.sflag [#allocation3], 1
    %10 = vsyncpa %s9, 0
    loop: start=0, step=1, limit=4
    $region2: #{tpu_custom_call.1} parent=1 // loop_pre_header
      _
    $region3: #{tpu_custom_call.1} parent=1 // loop_header
      %s12 = sphi 0, %s16
      %p13 = scmp.ge.s32.totalorder %s12, 4
      %s19 = sphi 0, %s31
      %s20 = sphi 0, %s27
      %s21 = sphi 0, %s19
      %s22 = sphi 0, %s20
      %s23 = sphi 0, %s21
      %s24 = sphi 0, %s22
      %s34 = sphi 0, %s36
      %s37 = sphi 0, %s34
      %s38 = sphi 0, %s37
      %s54 = sphi 0, %s38
      %s58 = sphi 0, %s58
      %s60 = sphi 0, %s58
      %s61 = sphi 0, %s60
      %s75 = sphi 0, %s61
      %s79 = sphi 0, %s79
      %s81 = sphi 0, %s79
      %s82 = sphi 0, %s81
      %s96 = sphi 0, %s82
      %s104 = sphi 0, %s106
      %s107 = sphi 0, %s104
      %s108 = sphi 0, %s107
      %s124 = sphi 0, %s108
    $region4: #{tpu_custom_call.1} parent=1 // loop_header_branch
      %15 = sbr.rel (%p13) target = $region8
    $region5: #{tpu_custom_call.1} parent=1 // loop_body
      %s17 = ssub.s32 %s12, 1
      %s18 = ssub.s32 %s12, 2
      %s25 = sadd.s32 1, %s20
      %p26 = scmp.ge.s32.totalorder %s25, 1
      %s27 = scalar_select %p26, 0, %s25
      %s28 = sadd.s32 1, %s19
      %s29 = scalar_select %p26, %s28, %s19
      %p30 = scmp.ge.s32.totalorder %s29, 2
      %s31 = scalar_select %p30, 0, %s29
      %s32 = ssub.s32 %s19, %s31
      %p33 = scmp.eq.s32.totalorder %s32, 0
      %s35 = sadd.s32 %s34, 1
      %s36 = scalar_select %p33, %s34, %s35
      %p39 = pneg %p33
      %p40 = scmp.eq.s32.totalorder %s12, 1
      %p41 = por %p39, %p40
      %p42 = scmp.ne.s32.totalorder %s34, %s37
      %p43 = scmp.eq.s32.totalorder %s12, 0
      %p44 = por %p42, %p43
      %p45 = scmp.ne.s32.totalorder %s34, %s37
      %p46 = scmp.eq.s32.totalorder %s17, 1
      %p47 = por %p45, %p46
      %p48 = scmp.ne.s32.totalorder %s37, %s38
      %p49 = scmp.eq.s32.totalorder %s17, 0
      %p50 = por %p48, %p49
      %p51 = scmp.ne.s32.totalorder %s37, %s38
      %p52 = scmp.eq.s32.totalorder %s18, 1
      %p53 = por %p51, %p52
      %p55 = scmp.ne.s32.totalorder %s38, %s54
      %p56 = scmp.eq.s32.totalorder %s18, 0
      %p57 = por %p55, %p56
      %s59 = sadd.s32 %s58, 1
      %p62 = scmp.eq.s32.totalorder %s12, 1
      %p63 = scmp.ne.s32.totalorder %s58, %s60
      %p64 = scmp.eq.s32.totalorder %s12, 0
      %p65 = por %p63, %p64
      %p66 = scmp.ne.s32.totalorder %s58, %s60
      %p67 = scmp.eq.s32.totalorder %s17, 1
      %p68 = por %p66, %p67
      %p69 = scmp.ne.s32.totalorder %s60, %s61
      %p70 = scmp.eq.s32.totalorder %s17, 0
      %p71 = por %p69, %p70
      %p72 = scmp.ne.s32.totalorder %s60, %s61
      %p73 = scmp.eq.s32.totalorder %s18, 1
      %p74 = por %p72, %p73
      %p76 = scmp.ne.s32.totalorder %s61, %s75
      %p77 = scmp.eq.s32.totalorder %s18, 0
      %p78 = por %p76, %p77
      %s80 = sadd.s32 %s79, 1
      %p83 = scmp.eq.s32.totalorder %s12, 1
      %p84 = scmp.ne.s32.totalorder %s79, %s81
      %p85 = scmp.eq.s32.totalorder %s12, 0
      %p86 = por %p84, %p85
      %p87 = scmp.ne.s32.totalorder %s79, %s81
      %p88 = scmp.eq.s32.totalorder %s17, 1
      %p89 = por %p87, %p88
      %p90 = scmp.ne.s32.totalorder %s81, %s82
      %p91 = scmp.eq.s32.totalorder %s17, 0
      %p92 = por %p90, %p91
      %p93 = scmp.ne.s32.totalorder %s81, %s82
      %p94 = scmp.eq.s32.totalorder %s18, 1
      %p95 = por %p93, %p94
      %p97 = scmp.ne.s32.totalorder %s82, %s96
      %p98 = scmp.eq.s32.totalorder %s18, 0
      %p99 = por %p97, %p98
      %s100 = sadd.s32 %s19, %s20
      %s101 = sadd.s32 %s31, %s27
      %s102 = ssub.s32 %s100, %s101
      %p103 = scmp.eq.s32.totalorder %s102, 0
      %s105 = sadd.s32 %s104, 1
      %s106 = scalar_select %p103, %s104, %s105
      %p109 = pneg %p103
      %p110 = scmp.eq.s32.totalorder %s12, 1
      %p111 = por %p109, %p110
      %p112 = scmp.ne.s32.totalorder %s104, %s107
      %p113 = scmp.eq.s32.totalorder %s12, 0
      %p114 = por %p112, %p113
      %p115 = scmp.ne.s32.totalorder %s104, %s107
      %p116 = scmp.eq.s32.totalorder %s17, 1
      %p117 = por %p115, %p116
      %p118 = scmp.ne.s32.totalorder %s107, %s108
      %p119 = scmp.eq.s32.totalorder %s17, 0
      %p120 = por %p118, %p119
      %p121 = scmp.ne.s32.totalorder %s107, %s108
      %p122 = scmp.eq.s32.totalorder %s18, 1
      %p123 = por %p121, %p122
      %p125 = scmp.ne.s32.totalorder %s108, %s124
      %p126 = scmp.eq.s32.totalorder %s18, 0
      %p127 = por %p125, %p126
      %p128 = scmp.le.s32.totalorder 1, %s12
      %p129 = scmp.lt.s32.totalorder %s12, 3
      %p130 = pnand %p128, %p129
      %p131 = pneg %p130
      // Predicated region
      $region9: #{tpu_custom_call.1} parent=5 // pred_check
        _
      $region10: #{tpu_custom_call.1} parent=5 // pred_check_branch
        %133 = sbr.rel (%p130) target = $region12
      $region11: #{tpu_custom_call.1} parent=5 // pred_region
        %s134 = ssub.s32 %s12, 1
        // Predicated region
        $region13: #{tpu_custom_call.1} parent=11 // pred_check
          %p135 = pneg %p71
        $region14: #{tpu_custom_call.1} parent=11 // pred_check_branch
          %137 = sbr.rel (%p135) target = $region16
        $region15: #{tpu_custom_call.1} parent=11 // pred_region
          _
        $region16: #{tpu_custom_call.1} parent=11 // pred_fallthru
          _
        // Predicated region
        $region17: #{tpu_custom_call.1} parent=11 // pred_check
          %p138 = pneg %p92
        $region18: #{tpu_custom_call.1} parent=11 // pred_check_branch
          %140 = sbr.rel (%p138) target = $region20
        $region19: #{tpu_custom_call.1} parent=11 // pred_region
          _
        $region20: #{tpu_custom_call.1} parent=11 // pred_fallthru
          _
      $region12: #{tpu_custom_call.1} parent=5 // pred_fallthru
        _
      %p141 = scmp.lt.s32.totalorder %s12, 2
      // Predicated region
      $region21: #{tpu_custom_call.1} parent=5 // pred_check
        %p142 = pneg %p141
      $region22: #{tpu_custom_call.1} parent=5 // pred_check_branch
        %144 = sbr.rel (%p142) target = $region24
      $region23: #{tpu_custom_call.1} parent=5 // pred_region
        // Predicated region
        $region25: #{tpu_custom_call.1} parent=23 // pred_check
          %p145 = pneg %p44
        $region26: #{tpu_custom_call.1} parent=23 // pred_check_branch
          %147 = sbr.rel (%p145) target = $region28
        $region27: #{tpu_custom_call.1} parent=23 // pred_region
          %s148 = smul.u32 18, %s19
          %p149 = scmp.lt.s32.totalorder %s148, 35
          %s150 = scalar_select %p149, %s148, 35
          %s151 = smul.addr %s150, 3
          %s152 = smul.addr %s151, 4
          %s153 = scalar_lea.vmem %s0, %s152
          %s154 = smul.u32 18, %s19
        $region28: #{tpu_custom_call.1} parent=23 // pred_fallthru
          _
      $region24: #{tpu_custom_call.1} parent=5 // pred_fallthru
        _
      %p155 = scmp.le.s32.totalorder 1, %s12
      %p156 = scmp.lt.s32.totalorder %s12, 3
      %p157 = pnand %p155, %p156
      %p158 = pneg %p157
      // Predicated region
      $region29: #{tpu_custom_call.1} parent=5 // pred_check
        _
      $region30: #{tpu_custom_call.1} parent=5 // pred_check_branch
        %160 = sbr.rel (%p157) target = $region32
      $region31: #{tpu_custom_call.1} parent=5 // pred_region
        %s161 = ssub.s32 %s12, 1
        %s162 = smul.u32 18, %s21
        %p163 = scmp.lt.s32.totalorder %s162, 35
        %s164 = scalar_select %p163, %s162, 35
        %s165 = smul.addr %s164, 3
        %s166 = smul.addr %s165, 4
        %s167 = scalar_lea.vmem %s0, %s166
        %p168 = pneg %p50
        %p169 = pneg %p47
        %p170 = pneg %p71
        %p171 = pneg %p68
        %p172 = pneg %p92
        %p173 = pneg %p89
        %p174 = pneg %p120
        %p175 = pneg %p117
        %s176 = sand.u32 %s107, 1
        %s177 = scalar_lea.sflag [#allocation3], %s176
        %s178 = sand.u32 %s107, 1
        %s179 = smul.addr %s178, 256
        %s180 = scalar_lea.vmem [#allocation2], %s179
        %s181 = smul.u32 18, %s21
        %p182 = scmp.lt.s32.totalorder %s181, 35
        %s183 = scalar_select %p182, %s181, 35
        %s184 = smul.addr %s183, 3
        %s185 = smul.addr %s184, 4
        %s186 = scalar_lea.vmem %s0, %s185
        %s187 = smul.u32 18, %s21
        %s188 = sadd.s32 %s21, %s22
        %s189 = smul.u32 16, %s188
        %s191 = smul.u32 %s22, 16
        %v192 = vld [vmem:[%s2] sm:$0x1]
        %v194 = vlaneseq
        %v195 = vshrl.u32 %v194, 7
        %v196 = vsub.s32 0, %v195
        %v197 = vrot.slane %v192, %v196
        %s199 = smul.u32 %s191, 3
        %s200 = smul.addr %s199, 4
        %s201 = scalar_lea.vmem %s186, %s200
        %v202 = vld [vmem:[%s201] sm:$0xf]
        %v203 = vld [vmem:[%s201 + $0x4] sm:$0xf]
        %v204 = vld [vmem:[%s201 + $0x8] sm:$0x1]
        %v205 = vld [vmem:[%s201 + $0xc] sm:$0xf]
        %v206 = vld [vmem:[%s201 + $0x10] sm:$0xf]
        %v207 = vld [vmem:[%s201 + $0x14] sm:$0x1]
        %v208 = vld [vmem:[%s201 + $0x18] sm:$0xf]
        %v209 = vld [vmem:[%s201 + $0x1c] sm:$0xf]
        %v210 = vld [vmem:[%s201 + $0x20] sm:$0x1]
        %v211 = vld [vmem:[%s201 + $0x24] sm:$0xf]
        %v212 = vld [vmem:[%s201 + $0x28] sm:$0xf]
        %v213 = vld [vmem:[%s201 + $0x2c] sm:$0x1]
        %v214 = vld [vmem:[%s201 + $0x30] sm:$0xf]
        %v215 = vld [vmem:[%s201 + $0x34] sm:$0xf]
        %v216 = vld [vmem:[%s201 + $0x38] sm:$0x1]
        %v217 = vld [vmem:[%s201 + $0x3c] sm:$0xf]
        %v218 = vld [vmem:[%s201 + $0x40] sm:$0xf]
        %v219 = vld [vmem:[%s201 + $0x44] sm:$0x1]
        %v220 = vld [vmem:[%s201 + $0x48] sm:$0xf]
        %v221 = vld [vmem:[%s201 + $0x4c] sm:$0xf]
        %v222 = vld [vmem:[%s201 + $0x50] sm:$0x1]
        %v223 = vld [vmem:[%s201 + $0x54] sm:$0xf]
        %v224 = vld [vmem:[%s201 + $0x58] sm:$0xf]
        %v225 = vld [vmem:[%s201 + $0x5c] sm:$0x1]
        %v226 = vld [vmem:[%s201 + $0x60] sm:$0xf]
        %v227 = vld [vmem:[%s201 + $0x64] sm:$0xf]
        %v228 = vld [vmem:[%s201 + $0x68] sm:$0x1]
        %v229 = vld [vmem:[%s201 + $0x6c] sm:$0xf]
        %v230 = vld [vmem:[%s201 + $0x70] sm:$0xf]
        %v231 = vld [vmem:[%s201 + $0x74] sm:$0x1]
        %v232 = vld [vmem:[%s201 + $0x78] sm:$0xf]
        %v233 = vld [vmem:[%s201 + $0x7c] sm:$0xf]
        %v234 = vld [vmem:[%s201 + $0x80] sm:$0x1]
        %v235 = vld [vmem:[%s201 + $0x84] sm:$0xf]
        %v236 = vld [vmem:[%s201 + $0x88] sm:$0xf]
        %v237 = vld [vmem:[%s201 + $0x8c] sm:$0x1]
        %v238 = vld [vmem:[%s201 + $0x90] sm:$0xf]
        %v239 = vld [vmem:[%s201 + $0x94] sm:$0xf]
        %v240 = vld [vmem:[%s201 + $0x98] sm:$0x1]
        %v241 = vld [vmem:[%s201 + $0x9c] sm:$0xf]
        %v242 = vld [vmem:[%s201 + $0xa0] sm:$0xf]
        %v243 = vld [vmem:[%s201 + $0xa4] sm:$0x1]
        %v244 = vld [vmem:[%s201 + $0xa8] sm:$0xf]
        %v245 = vld [vmem:[%s201 + $0xac] sm:$0xf]
        %v246 = vld [vmem:[%s201 + $0xb0] sm:$0x1]
        %v247 = vld [vmem:[%s201 + $0xb4] sm:$0xf]
        %v248 = vld [vmem:[%s201 + $0xb8] sm:$0xf]
        %v249 = vld [vmem:[%s201 + $0xbc] sm:$0x1]
        %v250 = vld [vmem:[%s1] sm:$0x3]
        %v283 = vunpack.c.l.b16 %v202
        %v284 = vunpack.c.l.b16 %v203
        %v285 = vunpack.c.l.b16 %v205
        %v286 = vunpack.c.l.b16 %v206
        %v287 = vunpack.c.l.b16 %v208
        %v288 = vunpack.c.l.b16 %v209
        %v289 = vunpack.c.l.b16 %v211
        %v290 = vunpack.c.l.b16 %v212
        %v291 = vunpack.c.l.b16 %v214
        %v292 = vunpack.c.l.b16 %v215
        %v293 = vunpack.c.l.b16 %v217
        %v294 = vunpack.c.l.b16 %v218
        %v295 = vunpack.c.l.b16 %v220
        %v296 = vunpack.c.l.b16 %v221
        %v297 = vunpack.c.l.b16 %v223
        %v298 = vunpack.c.l.b16 %v224
        %v299 = vunpack.c.l.b16 %v226
        %v300 = vunpack.c.l.b16 %v227
        %v301 = vunpack.c.l.b16 %v229
        %v302 = vunpack.c.l.b16 %v230
        %v303 = vunpack.c.l.b16 %v232
        %v304 = vunpack.c.l.b16 %v233
        %v305 = vunpack.c.l.b16 %v235
        %v306 = vunpack.c.l.b16 %v236
        %v307 = vunpack.c.l.b16 %v238
        %v308 = vunpack.c.l.b16 %v239
        %v309 = vunpack.c.l.b16 %v241
        %v310 = vunpack.c.l.b16 %v242
        %v311 = vunpack.c.l.b16 %v244
        %v312 = vunpack.c.l.b16 %v245
        %v313 = vunpack.c.l.b16 %v247
        %v314 = vunpack.c.l.b16 %v248
        %v315 = vpack.c.b16 %v284, %v283
        %v316 = vpack.c.b16 %v286, %v285
        %v317 = vpack.c.b16 %v288, %v287
        %v318 = vpack.c.b16 %v290, %v289
        %v319 = vpack.c.b16 %v292, %v291
        %v320 = vpack.c.b16 %v294, %v293
        %v321 = vpack.c.b16 %v296, %v295
        %v322 = vpack.c.b16 %v298, %v297
        %v323 = vpack.c.b16 %v300, %v299
        %v324 = vpack.c.b16 %v302, %v301
        %v325 = vpack.c.b16 %v304, %v303
        %v326 = vpack.c.b16 %v306, %v305
        %v327 = vpack.c.b16 %v308, %v307
        %v328 = vpack.c.b16 %v310, %v309
        %v329 = vpack.c.b16 %v312, %v311
        %v330 = vpack.c.b16 %v314, %v313
        %vm331 = vcmask 31744
        %v333 = vsel %vm331, %v315, 0
        %v336 = vsel %vm331, %v316, 0
        %v339 = vsel %vm331, %v317, 0
        %v342 = vsel %vm331, %v318, 0
        %v345 = vsel %vm331, %v319, 0
        %v348 = vsel %vm331, %v320, 0
        %v351 = vsel %vm331, %v321, 0
        %v354 = vsel %vm331, %v322, 0
        %v357 = vsel %vm331, %v323, 0
        %v360 = vsel %vm331, %v324, 0
        %v363 = vsel %vm331, %v325, 0
        %v366 = vsel %vm331, %v326, 0
        %v369 = vsel %vm331, %v327, 0
        %v372 = vsel %vm331, %v328, 0
        %v375 = vsel %vm331, %v329, 0
        %v378 = vsel %vm331, %v330, 0
        %vm380 = vcmask 1041408
        %v382 = vsel %vm380, %v250, 0
        %384 = vmatprep.subr.bf16.mxu0 0
        %385 = vmatpush1.bf16.msra.mxu0 0
        %386 = vmatprep.subr.bf16.mxu0 0
        %387 = vmatpush1.bf16.msra.mxu0 0
        %388 = vmatprep.subr.bf16.mxu0 0
        %389 = vmatpush1.bf16.msra.mxu0 0
        %390 = vmatprep.subr.bf16.mxu0 0
        %391 = vmatpush1.bf16.msra.mxu0 0
        %392 = vmatprep.subr.bf16.mxu0 0
        %393 = vmatpush1.bf16.msra.mxu0 0
        %394 = vmatprep.subr.bf16.mxu0 0
        %395 = vmatpush1.bf16.msra.mxu0 0
        %396 = vmatprep.subr.bf16.mxu0 0
        %397 = vmatpush1.bf16.msra.mxu0 0
        %398 = vmatprep.subr.bf16.mxu0 0
        %399 = vmatpush1.bf16.msra.mxu0 %v382
        %400 = vmatprep.subr.bf16.mxu0 0
        %401 = vmatpush2.bf16.msra.mxu0 0
        %402 = vmatprep.subr.bf16.mxu0 0
        %403 = vmatpush2.bf16.msra.mxu0 0
        %404 = vmatprep.subr.bf16.mxu0 0
        %405 = vmatpush2.bf16.msra.mxu0 0
        %406 = vmatprep.subr.bf16.mxu0 0
        %407 = vmatpush2.bf16.msra.mxu0 0
        %408 = vmatprep.subr.bf16.mxu0 0
        %409 = vmatpush2.bf16.msra.mxu0 0
        %410 = vmatprep.subr.bf16.mxu0 0
        %411 = vmatpush2.bf16.msra.mxu0 0
        %412 = vmatprep.subr.bf16.mxu0 0
        %413 = vmatpush2.bf16.msra.mxu0 0
        %414 = vmatprep.subr.bf16.mxu0 0
        %415 = vmatpush2.bf16.msra.mxu0 0
        %416 = vmatprep.mubr.bf16.mxu0 0
        %417 = vmatmul.mubr.bf16.gmra.mxu0 %v333
        %v418 = vpop.f32.mrf.mxu0
        %v419 = vadd.f32 0.0, %v418
        %v420 = vpop.f32.mrf.mxu0
        %v421 = vpop.f32.mrf.mxu0
        %v422 = vadd.f32 0.0, %v421
        %v423 = vpop.f32.mrf.mxu0
        %424 = vmatprep.mubr.bf16.mxu0 0
        %425 = vmatmul.mubr.bf16.gmra.mxu0 %v336
        %v426 = vpop.f32.mrf.mxu0
        %v427 = vadd.f32 0.0, %v426
        %v428 = vpop.f32.mrf.mxu0
        %v429 = vpop.f32.mrf.mxu0
        %v430 = vadd.f32 0.0, %v429
        %v431 = vpop.f32.mrf.mxu0
        %432 = vmatprep.mubr.bf16.mxu0 0
        %433 = vmatmul.mubr.bf16.gmra.mxu0 %v339
        %v434 = vpop.f32.mrf.mxu0
        %v435 = vadd.f32 0.0, %v434
        %v436 = vpop.f32.mrf.mxu0
        %v437 = vpop.f32.mrf.mxu0
        %v438 = vadd.f32 0.0, %v437
        %v439 = vpop.f32.mrf.mxu0
        %440 = vmatprep.mubr.bf16.mxu0 0
        %441 = vmatmul.mubr.bf16.gmra.mxu0 %v342
        %v442 = vpop.f32.mrf.mxu0
        %v443 = vadd.f32 0.0, %v442
        %v444 = vpop.f32.mrf.mxu0
        %v445 = vpop.f32.mrf.mxu0
        %v446 = vadd.f32 0.0, %v445
        %v447 = vpop.f32.mrf.mxu0
        %448 = vmatprep.mubr.bf16.mxu0 0
        %449 = vmatmul.mubr.bf16.gmra.mxu0 %v345
        %v450 = vpop.f32.mrf.mxu0
        %v451 = vadd.f32 0.0, %v450
        %v452 = vpop.f32.mrf.mxu0
        %v453 = vpop.f32.mrf.mxu0
        %v454 = vadd.f32 0.0, %v453
        %v455 = vpop.f32.mrf.mxu0
        %456 = vmatprep.mubr.bf16.mxu0 0
        %457 = vmatmul.mubr.bf16.gmra.mxu0 %v348
        %v458 = vpop.f32.mrf.mxu0
        %v459 = vadd.f32 0.0, %v458
        %v460 = vpop.f32.mrf.mxu0
        %v461 = vpop.f32.mrf.mxu0
        %v462 = vadd.f32 0.0, %v461
        %v463 = vpop.f32.mrf.mxu0
        %464 = vmatprep.mubr.bf16.mxu0 0
        %465 = vmatmul.mubr.bf16.gmra.mxu0 %v351
        %v466 = vpop.f32.mrf.mxu0
        %v467 = vadd.f32 0.0, %v466
        %v468 = vpop.f32.mrf.mxu0
        %v469 = vpop.f32.mrf.mxu0
        %v470 = vadd.f32 0.0, %v469
        %v471 = vpop.f32.mrf.mxu0
        %472 = vmatprep.mubr.bf16.mxu0 0
        %473 = vmatmul.mubr.bf16.gmra.mxu0 %v354
        %v474 = vpop.f32.mrf.mxu0
        %v475 = vadd.f32 0.0, %v474
        %v476 = vpop.f32.mrf.mxu0
        %v477 = vpop.f32.mrf.mxu0
        %v478 = vadd.f32 0.0, %v477
        %v479 = vpop.f32.mrf.mxu0
        %480 = vmatprep.mubr.bf16.mxu0 0
        %481 = vmatmul.mubr.bf16.gmra.mxu0 %v357
        %v482 = vpop.f32.mrf.mxu0
        %v483 = vadd.f32 0.0, %v482
        %v484 = vpop.f32.mrf.mxu0
        %v485 = vpop.f32.mrf.mxu0
        %v486 = vadd.f32 0.0, %v485
        %v487 = vpop.f32.mrf.mxu0
        %488 = vmatprep.mubr.bf16.mxu0 0
        %489 = vmatmul.mubr.bf16.gmra.mxu0 %v360
        %v490 = vpop.f32.mrf.mxu0
        %v491 = vadd.f32 0.0, %v490
        %v492 = vpop.f32.mrf.mxu0
        %v493 = vpop.f32.mrf.mxu0
        %v494 = vadd.f32 0.0, %v493
        %v495 = vpop.f32.mrf.mxu0
        %496 = vmatprep.mubr.bf16.mxu0 0
        %497 = vmatmul.mubr.bf16.gmra.mxu0 %v363
        %v498 = vpop.f32.mrf.mxu0
        %v499 = vadd.f32 0.0, %v498
        %v500 = vpop.f32.mrf.mxu0
        %v501 = vpop.f32.mrf.mxu0
        %v502 = vadd.f32 0.0, %v501
        %v503 = vpop.f32.mrf.mxu0
        %504 = vmatprep.mubr.bf16.mxu0 0
        %505 = vmatmul.mubr.bf16.gmra.mxu0 %v366
        %v506 = vpop.f32.mrf.mxu0
        %v507 = vadd.f32 0.0, %v506
        %v508 = vpop.f32.mrf.mxu0
        %v509 = vpop.f32.mrf.mxu0
        %v510 = vadd.f32 0.0, %v509
        %v511 = vpop.f32.mrf.mxu0
        %512 = vmatprep.mubr.bf16.mxu0 0
        %513 = vmatmul.mubr.bf16.gmra.mxu0 %v369
        %v514 = vpop.f32.mrf.mxu0
        %v515 = vadd.f32 0.0, %v514
        %v516 = vpop.f32.mrf.mxu0
        %v517 = vpop.f32.mrf.mxu0
        %v518 = vadd.f32 0.0, %v517
        %v519 = vpop.f32.mrf.mxu0
        %520 = vmatprep.mubr.bf16.mxu0 0
        %521 = vmatmul.mubr.bf16.gmra.mxu0 %v372
        %v522 = vpop.f32.mrf.mxu0
        %v523 = vadd.f32 0.0, %v522
        %v524 = vpop.f32.mrf.mxu0
        %v525 = vpop.f32.mrf.mxu0
        %v526 = vadd.f32 0.0, %v525
        %v527 = vpop.f32.mrf.mxu0
        %528 = vmatprep.mubr.bf16.mxu0 0
        %529 = vmatmul.mubr.bf16.gmra.mxu0 %v375
        %v530 = vpop.f32.mrf.mxu0
        %v531 = vadd.f32 0.0, %v530
        %v532 = vpop.f32.mrf.mxu0
        %v533 = vpop.f32.mrf.mxu0
        %v534 = vadd.f32 0.0, %v533
        %v535 = vpop.f32.mrf.mxu0
        %536 = vmatprep.mubr.bf16.mxu0 0
        %537 = vmatmul.mubr.bf16.gmra.mxu0 %v378
        %v538 = vpop.f32.mrf.mxu0
        %v539 = vadd.f32 0.0, %v538
        %v540 = vpop.f32.mrf.mxu0
        %v541 = vpop.f32.mrf.mxu0
        %v542 = vadd.f32 0.0, %v541
        %v543 = vpop.f32.mrf.mxu0
        %544 = vdwg.mxu0
        %v545 = vadd.f32 %v197, %v419
        %v546 = vadd.f32 %v197, %v422
        %v547 = vadd.f32 %v197, %v427
        %v548 = vadd.f32 %v197, %v430
        %v549 = vadd.f32 %v197, %v435
        %v550 = vadd.f32 %v197, %v438
        %v551 = vadd.f32 %v197, %v443
        %v552 = vadd.f32 %v197, %v446
        %v553 = vadd.f32 %v197, %v451
        %v554 = vadd.f32 %v197, %v454
        %v555 = vadd.f32 %v197, %v459
        %v556 = vadd.f32 %v197, %v462
        %v557 = vadd.f32 %v197, %v467
        %v558 = vadd.f32 %v197, %v470
        %v559 = vadd.f32 %v197, %v475
        %v560 = vadd.f32 %v197, %v478
        %v561 = vadd.f32 %v197, %v483
        %v562 = vadd.f32 %v197, %v486
        %v563 = vadd.f32 %v197, %v491
        %v564 = vadd.f32 %v197, %v494
        %v565 = vadd.f32 %v197, %v499
        %v566 = vadd.f32 %v197, %v502
        %v567 = vadd.f32 %v197, %v507
        %v568 = vadd.f32 %v197, %v510
        %v569 = vadd.f32 %v197, %v515
        %v570 = vadd.f32 %v197, %v518
        %v571 = vadd.f32 %v197, %v523
        %v572 = vadd.f32 %v197, %v526
        %v573 = vadd.f32 %v197, %v531
        %v574 = vadd.f32 %v197, %v534
        %v575 = vadd.f32 %v197, %v539
        %v576 = vadd.f32 %v197, %v542
        %vm577 = vsmask.f32 3328
        %vm578 = vsmask.f32 7440
        %vm579 = vmor %vm577, %vm578
        %v581 = vshrl.u32 %v202, 16
        %v583 = vrot.slane %v581, 4
        %v584 = vshll.u32 %v202, 16
        %v586 = vrot.slane %v584, 5
        %v587 = vor.u32 %v583, %v586
        %v588 = vrot.slane %v587, 4
        %v590 = vshll.u32 %v203, 16
        %v592 = vrot.slane %v590, 5
        %v593 = vsel %vm579, %v588, %v592
        %v594 = vshrl.u32 %v203, 16
        %v596 = vrot.slane %v594, 4
        %v597 = vor.u32 %v596, %v592
        %v598 = vrot.slane %v597, 4
        %v600 = vshll.u32 %v204, 16
        %v602 = vrot.slane %v600, 5
        %v603 = vsel %vm579, %v598, %v602
        %v605 = vshrl.u32 %v205, 16
        %v607 = vrot.slane %v605, 4
        %v608 = vshll.u32 %v205, 16
        %v610 = vrot.slane %v608, 5
        %v611 = vor.u32 %v607, %v610
        %v612 = vrot.slane %v611, 4
        %v614 = vshll.u32 %v206, 16
        %v616 = vrot.slane %v614, 5
        %v617 = vsel %vm579, %v612, %v616
        %v618 = vshrl.u32 %v206, 16
        %v620 = vrot.slane %v618, 4
        %v621 = vor.u32 %v620, %v616
        %v622 = vrot.slane %v621, 4
        %v624 = vshll.u32 %v207, 16
        %v626 = vrot.slane %v624, 5
        %v627 = vsel %vm579, %v622, %v626
        %v629 = vshrl.u32 %v208, 16
        %v631 = vrot.slane %v629, 4
        %v632 = vshll.u32 %v208, 16
        %v634 = vrot.slane %v632, 5
        %v635 = vor.u32 %v631, %v634
        %v636 = vrot.slane %v635, 4
        %v638 = vshll.u32 %v209, 16
        %v640 = vrot.slane %v638, 5
        %v641 = vsel %vm579, %v636, %v640
        %v642 = vshrl.u32 %v209, 16
        %v644 = vrot.slane %v642, 4
        %v645 = vor.u32 %v644, %v640
        %v646 = vrot.slane %v645, 4
        %v648 = vshll.u32 %v210, 16
        %v650 = vrot.slane %v648, 5
        %v651 = vsel %vm579, %v646, %v650
        %v653 = vshrl.u32 %v211, 16
        %v655 = vrot.slane %v653, 4
        %v656 = vshll.u32 %v211, 16
        %v658 = vrot.slane %v656, 5
        %v659 = vor.u32 %v655, %v658
        %v660 = vrot.slane %v659, 4
        %v662 = vshll.u32 %v212, 16
        %v664 = vrot.slane %v662, 5
        %v665 = vsel %vm579, %v660, %v664
        %v666 = vshrl.u32 %v212, 16
        %v668 = vrot.slane %v666, 4
        %v669 = vor.u32 %v668, %v664
        %v670 = vrot.slane %v669, 4
        %v672 = vshll.u32 %v213, 16
        %v674 = vrot.slane %v672, 5
        %v675 = vsel %vm579, %v670, %v674
        %v677 = vshrl.u32 %v214, 16
        %v679 = vrot.slane %v677, 4
        %v680 = vshll.u32 %v214, 16
        %v682 = vrot.slane %v680, 5
        %v683 = vor.u32 %v679, %v682
        %v684 = vrot.slane %v683, 4
        %v686 = vshll.u32 %v215, 16
        %v688 = vrot.slane %v686, 5
        %v689 = vsel %vm579, %v684, %v688
        %v690 = vshrl.u32 %v215, 16
        %v692 = vrot.slane %v690, 4
        %v693 = vor.u32 %v692, %v688
        %v694 = vrot.slane %v693, 4
        %v696 = vshll.u32 %v216, 16
        %v698 = vrot.slane %v696, 5
        %v699 = vsel %vm579, %v694, %v698
        %v701 = vshrl.u32 %v217, 16
        %v703 = vrot.slane %v701, 4
        %v704 = vshll.u32 %v217, 16
        %v706 = vrot.slane %v704, 5
        %v707 = vor.u32 %v703, %v706
        %v708 = vrot.slane %v707, 4
        %v710 = vshll.u32 %v218, 16
        %v712 = vrot.slane %v710, 5
        %v713 = vsel %vm579, %v708, %v712
        %v714 = vshrl.u32 %v218, 16
        %v716 = vrot.slane %v714, 4
        %v717 = vor.u32 %v716, %v712
        %v718 = vrot.slane %v717, 4
        %v720 = vshll.u32 %v219, 16
        %v722 = vrot.slane %v720, 5
        %v723 = vsel %vm579, %v718, %v722
        %v725 = vshrl.u32 %v220, 16
        %v727 = vrot.slane %v725, 4
        %v728 = vshll.u32 %v220, 16
        %v730 = vrot.slane %v728, 5
        %v731 = vor.u32 %v727, %v730
        %v732 = vrot.slane %v731, 4
        %v734 = vshll.u32 %v221, 16
        %v736 = vrot.slane %v734, 5
        %v737 = vsel %vm579, %v732, %v736
        %v738 = vshrl.u32 %v221, 16
        %v740 = vrot.slane %v738, 4
        %v741 = vor.u32 %v740, %v736
        %v742 = vrot.slane %v741, 4
        %v744 = vshll.u32 %v222, 16
        %v746 = vrot.slane %v744, 5
        %v747 = vsel %vm579, %v742, %v746
        %v749 = vshrl.u32 %v223, 16
        %v751 = vrot.slane %v749, 4
        %v752 = vshll.u32 %v223, 16
        %v754 = vrot.slane %v752, 5
        %v755 = vor.u32 %v751, %v754
        %v756 = vrot.slane %v755, 4
        %v758 = vshll.u32 %v224, 16
        %v760 = vrot.slane %v758, 5
        %v761 = vsel %vm579, %v756, %v760
        %v762 = vshrl.u32 %v224, 16
        %v764 = vrot.slane %v762, 4
        %v765 = vor.u32 %v764, %v760
        %v766 = vrot.slane %v765, 4
        %v768 = vshll.u32 %v225, 16
        %v770 = vrot.slane %v768, 5
        %v771 = vsel %vm579, %v766, %v770
        %v773 = vshrl.u32 %v226, 16
        %v775 = vrot.slane %v773, 4
        %v776 = vshll.u32 %v226, 16
        %v778 = vrot.slane %v776, 5
        %v779 = vor.u32 %v775, %v778
        %v780 = vrot.slane %v779, 4
        %v782 = vshll.u32 %v227, 16
        %v784 = vrot.slane %v782, 5
        %v785 = vsel %vm579, %v780, %v784
        %v786 = vshrl.u32 %v227, 16
        %v788 = vrot.slane %v786, 4
        %v789 = vor.u32 %v788, %v784
        %v790 = vrot.slane %v789, 4
        %v792 = vshll.u32 %v228, 16
        %v794 = vrot.slane %v792, 5
        %v795 = vsel %vm579, %v790, %v794
        %v797 = vshrl.u32 %v229, 16
        %v799 = vrot.slane %v797, 4
        %v800 = vshll.u32 %v229, 16
        %v802 = vrot.slane %v800, 5
        %v803 = vor.u32 %v799, %v802
        %v804 = vrot.slane %v803, 4
        %v806 = vshll.u32 %v230, 16
        %v808 = vrot.slane %v806, 5
        %v809 = vsel %vm579, %v804, %v808
        %v810 = vshrl.u32 %v230, 16
        %v812 = vrot.slane %v810, 4
        %v813 = vor.u32 %v812, %v808
        %v814 = vrot.slane %v813, 4
        %v816 = vshll.u32 %v231, 16
        %v818 = vrot.slane %v816, 5
        %v819 = vsel %vm579, %v814, %v818
        %v821 = vshrl.u32 %v232, 16
        %v823 = vrot.slane %v821, 4
        %v824 = vshll.u32 %v232, 16
        %v826 = vrot.slane %v824, 5
        %v827 = vor.u32 %v823, %v826
        %v828 = vrot.slane %v827, 4
        %v830 = vshll.u32 %v233, 16
        %v832 = vrot.slane %v830, 5
        %v833 = vsel %vm579, %v828, %v832
        %v834 = vshrl.u32 %v233, 16
        %v836 = vrot.slane %v834, 4
        %v837 = vor.u32 %v836, %v832
        %v838 = vrot.slane %v837, 4
        %v840 = vshll.u32 %v234, 16
        %v842 = vrot.slane %v840, 5
        %v843 = vsel %vm579, %v838, %v842
        %v845 = vshrl.u32 %v235, 16
        %v847 = vrot.slane %v845, 4
        %v848 = vshll.u32 %v235, 16
        %v850 = vrot.slane %v848, 5
        %v851 = vor.u32 %v847, %v850
        %v852 = vrot.slane %v851, 4
        %v854 = vshll.u32 %v236, 16
        %v856 = vrot.slane %v854, 5
        %v857 = vsel %vm579, %v852, %v856
        %v858 = vshrl.u32 %v236, 16
        %v860 = vrot.slane %v858, 4
        %v861 = vor.u32 %v860, %v856
        %v862 = vrot.slane %v861, 4
        %v864 = vshll.u32 %v237, 16
        %v866 = vrot.slane %v864, 5
        %v867 = vsel %vm579, %v862, %v866
        %v869 = vshrl.u32 %v238, 16
        %v871 = vrot.slane %v869, 4
        %v872 = vshll.u32 %v238, 16
        %v874 = vrot.slane %v872, 5
        %v875 = vor.u32 %v871, %v874
        %v876 = vrot.slane %v875, 4
        %v878 = vshll.u32 %v239, 16
        %v880 = vrot.slane %v878, 5
        %v881 = vsel %vm579, %v876, %v880
        %v882 = vshrl.u32 %v239, 16
        %v884 = vrot.slane %v882, 4
        %v885 = vor.u32 %v884, %v880
        %v886 = vrot.slane %v885, 4
        %v888 = vshll.u32 %v240, 16
        %v890 = vrot.slane %v888, 5
        %v891 = vsel %vm579, %v886, %v890
        %v893 = vshrl.u32 %v241, 16
        %v895 = vrot.slane %v893, 4
        %v896 = vshll.u32 %v241, 16
        %v898 = vrot.slane %v896, 5
        %v899 = vor.u32 %v895, %v898
        %v900 = vrot.slane %v899, 4
        %v902 = vshll.u32 %v242, 16
        %v904 = vrot.slane %v902, 5
        %v905 = vsel %vm579, %v900, %v904
        %v906 = vshrl.u32 %v242, 16
        %v908 = vrot.slane %v906, 4
        %v909 = vor.u32 %v908, %v904
        %v910 = vrot.slane %v909, 4
        %v912 = vshll.u32 %v243, 16
        %v914 = vrot.slane %v912, 5
        %v915 = vsel %vm579, %v910, %v914
        %v917 = vshrl.u32 %v244, 16
        %v919 = vrot.slane %v917, 4
        %v920 = vshll.u32 %v244, 16
        %v922 = vrot.slane %v920, 5
        %v923 = vor.u32 %v919, %v922
        %v924 = vrot.slane %v923, 4
        %v926 = vshll.u32 %v245, 16
        %v928 = vrot.slane %v926, 5
        %v929 = vsel %vm579, %v924, %v928
        %v930 = vshrl.u32 %v245, 16
        %v932 = vrot.slane %v930, 4
        %v933 = vor.u32 %v932, %v928
        %v934 = vrot.slane %v933, 4
        %v936 = vshll.u32 %v246, 16
        %v938 = vrot.slane %v936, 5
        %v939 = vsel %vm579, %v934, %v938
        %v941 = vshrl.u32 %v247, 16
        %v943 = vrot.slane %v941, 4
        %v944 = vshll.u32 %v247, 16
        %v946 = vrot.slane %v944, 5
        %v947 = vor.u32 %v943, %v946
        %v948 = vrot.slane %v947, 4
        %v950 = vshll.u32 %v248, 16
        %v952 = vrot.slane %v950, 5
        %v953 = vsel %vm579, %v948, %v952
        %v954 = vshrl.u32 %v248, 16
        %v956 = vrot.slane %v954, 4
        %v957 = vor.u32 %v956, %v952
        %v958 = vrot.slane %v957, 4
        %v960 = vshll.u32 %v249, 16
        %v962 = vrot.slane %v960, 5
        %v963 = vsel %vm579, %v958, %v962
        %s964 = scalar_lea.vmem %s1, 2
        %v965 = vld [vmem:[%s964] sm:$0x3]
        %v966 = vunpack.c.l.b16 %v593
        %v967 = vunpack.c.l.b16 %v603
        %v968 = vunpack.c.l.b16 %v617
        %v969 = vunpack.c.l.b16 %v627
        %v970 = vunpack.c.l.b16 %v641
        %v971 = vunpack.c.l.b16 %v651
        %v972 = vunpack.c.l.b16 %v665
        %v973 = vunpack.c.l.b16 %v675
        %v974 = vunpack.c.l.b16 %v689
        %v975 = vunpack.c.l.b16 %v699
        %v976 = vunpack.c.l.b16 %v713
        %v977 = vunpack.c.l.b16 %v723
        %v978 = vunpack.c.l.b16 %v737
        %v979 = vunpack.c.l.b16 %v747
        %v980 = vunpack.c.l.b16 %v761
        %v981 = vunpack.c.l.b16 %v771
        %v982 = vunpack.c.l.b16 %v785
        %v983 = vunpack.c.l.b16 %v795
        %v984 = vunpack.c.l.b16 %v809
        %v985 = vunpack.c.l.b16 %v819
        %v986 = vunpack.c.l.b16 %v833
        %v987 = vunpack.c.l.b16 %v843
        %v988 = vunpack.c.l.b16 %v857
        %v989 = vunpack.c.l.b16 %v867
        %v990 = vunpack.c.l.b16 %v881
        %v991 = vunpack.c.l.b16 %v891
        %v992 = vunpack.c.l.b16 %v905
        %v993 = vunpack.c.l.b16 %v915
        %v994 = vunpack.c.l.b16 %v929
        %v995 = vunpack.c.l.b16 %v939
        %v996 = vunpack.c.l.b16 %v953
        %v997 = vunpack.c.l.b16 %v963
        %v998 = vpack.c.b16 %v967, %v966
        %v999 = vpack.c.b16 %v969, %v968
        %v1000 = vpack.c.b16 %v971, %v970
        %v1001 = vpack.c.b16 %v973, %v972
        %v1002 = vpack.c.b16 %v975, %v974
        %v1003 = vpack.c.b16 %v977, %v976
        %v1004 = vpack.c.b16 %v979, %v978
        %v1005 = vpack.c.b16 %v981, %v980
        %v1006 = vpack.c.b16 %v983, %v982
        %v1007 = vpack.c.b16 %v985, %v984
        %v1008 = vpack.c.b16 %v987, %v986
        %v1009 = vpack.c.b16 %v989, %v988
        %v1010 = vpack.c.b16 %v991, %v990
        %v1011 = vpack.c.b16 %v993, %v992
        %v1012 = vpack.c.b16 %v995, %v994
        %v1013 = vpack.c.b16 %v997, %v996
        %v1015 = vsel %vm331, %v998, 0
        %v1018 = vsel %vm331, %v999, 0
        %v1021 = vsel %vm331, %v1000, 0
        %v1024 = vsel %vm331, %v1001, 0
        %v1027 = vsel %vm331, %v1002, 0
        %v1030 = vsel %vm331, %v1003, 0
        %v1033 = vsel %vm331, %v1004, 0
        %v1036 = vsel %vm331, %v1005, 0
        %v1039 = vsel %vm331, %v1006, 0
        %v1042 = vsel %vm331, %v1007, 0
        %v1045 = vsel %vm331, %v1008, 0
        %v1048 = vsel %vm331, %v1009, 0
        %v1051 = vsel %vm331, %v1010, 0
        %v1054 = vsel %vm331, %v1011, 0
        %v1057 = vsel %vm331, %v1012, 0
        %v1060 = vsel %vm331, %v1013, 0
        %v1063 = vsel %vm380, %v965, 0
        %1065 = vmatprep.subr.bf16.mxu0 0
        %1066 = vmatpush1.bf16.msra.mxu0 0
        %1067 = vmatprep.subr.bf16.mxu0 0
        %1068 = vmatpush1.bf16.msra.mxu0 0
        %1069 = vmatprep.subr.bf16.mxu0 0
        %1070 = vmatpush1.bf16.msra.mxu0 0
        %1071 = vmatprep.subr.bf16.mxu0 0
        %1072 = vmatpush1.bf16.msra.mxu0 0
        %1073 = vmatprep.subr.bf16.mxu0 0
        %1074 = vmatpush1.bf16.msra.mxu0 0
        %1075 = vmatprep.subr.bf16.mxu0 0
        %1076 = vmatpush1.bf16.msra.mxu0 0
        %1077 = vmatprep.subr.bf16.mxu0 0
        %1078 = vmatpush1.bf16.msra.mxu0 0
        %1079 = vmatprep.subr.bf16.mxu0 0
        %1080 = vmatpush1.bf16.msra.mxu0 %v1063
        %1081 = vmatprep.subr.bf16.mxu0 0
        %1082 = vmatpush2.bf16.msra.mxu0 0
        %1083 = vmatprep.subr.bf16.mxu0 0
        %1084 = vmatpush2.bf16.msra.mxu0 0
        %1085 = vmatprep.subr.bf16.mxu0 0
        %1086 = vmatpush2.bf16.msra.mxu0 0
        %1087 = vmatprep.subr.bf16.mxu0 0
        %1088 = vmatpush2.bf16.msra.mxu0 0
        %1089 = vmatprep.subr.bf16.mxu0 0
        %1090 = vmatpush2.bf16.msra.mxu0 0
        %1091 = vmatprep.subr.bf16.mxu0 0
        %1092 = vmatpush2.bf16.msra.mxu0 0
        %1093 = vmatprep.subr.bf16.mxu0 0
        %1094 = vmatpush2.bf16.msra.mxu0 0
        %1095 = vmatprep.subr.bf16.mxu0 0
        %1096 = vmatpush2.bf16.msra.mxu0 0
        %1097 = vmatprep.mubr.bf16.mxu0 0
        %1098 = vmatmul.mubr.bf16.gmra.mxu0 %v1015
        %v1099 = vpop.f32.mrf.mxu0
        %v1100 = vadd.f32 0.0, %v1099
        %v1101 = vpop.f32.mrf.mxu0
        %v1102 = vpop.f32.mrf.mxu0
        %v1103 = vadd.f32 0.0, %v1102
        %v1104 = vpop.f32.mrf.mxu0
        %1105 = vmatprep.mubr.bf16.mxu0 0
        %1106 = vmatmul.mubr.bf16.gmra.mxu0 %v1018
        %v1107 = vpop.f32.mrf.mxu0
        %v1108 = vadd.f32 0.0, %v1107
        %v1109 = vpop.f32.mrf.mxu0
        %v1110 = vpop.f32.mrf.mxu0
        %v1111 = vadd.f32 0.0, %v1110
        %v1112 = vpop.f32.mrf.mxu0
        %1113 = vmatprep.mubr.bf16.mxu0 0
        %1114 = vmatmul.mubr.bf16.gmra.mxu0 %v1021
        %v1115 = vpop.f32.mrf.mxu0
        %v1116 = vadd.f32 0.0, %v1115
        %v1117 = vpop.f32.mrf.mxu0
        %v1118 = vpop.f32.mrf.mxu0
        %v1119 = vadd.f32 0.0, %v1118
        %v1120 = vpop.f32.mrf.mxu0
        %1121 = vmatprep.mubr.bf16.mxu0 0
        %1122 = vmatmul.mubr.bf16.gmra.mxu0 %v1024
        %v1123 = vpop.f32.mrf.mxu0
        %v1124 = vadd.f32 0.0, %v1123
        %v1125 = vpop.f32.mrf.mxu0
        %v1126 = vpop.f32.mrf.mxu0
        %v1127 = vadd.f32 0.0, %v1126
        %v1128 = vpop.f32.mrf.mxu0
        %1129 = vmatprep.mubr.bf16.mxu0 0
        %1130 = vmatmul.mubr.bf16.gmra.mxu0 %v1027
        %v1131 = vpop.f32.mrf.mxu0
        %v1132 = vadd.f32 0.0, %v1131
        %v1133 = vpop.f32.mrf.mxu0
        %v1134 = vpop.f32.mrf.mxu0
        %v1135 = vadd.f32 0.0, %v1134
        %v1136 = vpop.f32.mrf.mxu0
        %1137 = vmatprep.mubr.bf16.mxu0 0
        %1138 = vmatmul.mubr.bf16.gmra.mxu0 %v1030
        %v1139 = vpop.f32.mrf.mxu0
        %v1140 = vadd.f32 0.0, %v1139
        %v1141 = vpop.f32.mrf.mxu0
        %v1142 = vpop.f32.mrf.mxu0
        %v1143 = vadd.f32 0.0, %v1142
        %v1144 = vpop.f32.mrf.mxu0
        %1145 = vmatprep.mubr.bf16.mxu0 0
        %1146 = vmatmul.mubr.bf16.gmra.mxu0 %v1033
        %v1147 = vpop.f32.mrf.mxu0
        %v1148 = vadd.f32 0.0, %v1147
        %v1149 = vpop.f32.mrf.mxu0
        %v1150 = vpop.f32.mrf.mxu0
        %v1151 = vadd.f32 0.0, %v1150
        %v1152 = vpop.f32.mrf.mxu0
        %1153 = vmatprep.mubr.bf16.mxu0 0
        %1154 = vmatmul.mubr.bf16.gmra.mxu0 %v1036
        %v1155 = vpop.f32.mrf.mxu0
        %v1156 = vadd.f32 0.0, %v1155
        %v1157 = vpop.f32.mrf.mxu0
        %v1158 = vpop.f32.mrf.mxu0
        %v1159 = vadd.f32 0.0, %v1158
        %v1160 = vpop.f32.mrf.mxu0
        %1161 = vmatprep.mubr.bf16.mxu0 0
        %1162 = vmatmul.mubr.bf16.gmra.mxu0 %v1039
        %v1163 = vpop.f32.mrf.mxu0
        %v1164 = vadd.f32 0.0, %v1163
        %v1165 = vpop.f32.mrf.mxu0
        %v1166 = vpop.f32.mrf.mxu0
        %v1167 = vadd.f32 0.0, %v1166
        %v1168 = vpop.f32.mrf.mxu0
        %1169 = vmatprep.mubr.bf16.mxu0 0
        %1170 = vmatmul.mubr.bf16.gmra.mxu0 %v1042
        %v1171 = vpop.f32.mrf.mxu0
        %v1172 = vadd.f32 0.0, %v1171
        %v1173 = vpop.f32.mrf.mxu0
        %v1174 = vpop.f32.mrf.mxu0
        %v1175 = vadd.f32 0.0, %v1174
        %v1176 = vpop.f32.mrf.mxu0
        %1177 = vmatprep.mubr.bf16.mxu0 0
        %1178 = vmatmul.mubr.bf16.gmra.mxu0 %v1045
        %v1179 = vpop.f32.mrf.mxu0
        %v1180 = vadd.f32 0.0, %v1179
        %v1181 = vpop.f32.mrf.mxu0
        %v1182 = vpop.f32.mrf.mxu0
        %v1183 = vadd.f32 0.0, %v1182
        %v1184 = vpop.f32.mrf.mxu0
        %1185 = vmatprep.mubr.bf16.mxu0 0
        %1186 = vmatmul.mubr.bf16.gmra.mxu0 %v1048
        %v1187 = vpop.f32.mrf.mxu0
        %v1188 = vadd.f32 0.0, %v1187
        %v1189 = vpop.f32.mrf.mxu0
        %v1190 = vpop.f32.mrf.mxu0
        %v1191 = vadd.f32 0.0, %v1190
        %v1192 = vpop.f32.mrf.mxu0
        %1193 = vmatprep.mubr.bf16.mxu0 0
        %1194 = vmatmul.mubr.bf16.gmra.mxu0 %v1051
        %v1195 = vpop.f32.mrf.mxu0
        %v1196 = vadd.f32 0.0, %v1195
        %v1197 = vpop.f32.mrf.mxu0
        %v1198 = vpop.f32.mrf.mxu0
        %v1199 = vadd.f32 0.0, %v1198
        %v1200 = vpop.f32.mrf.mxu0
        %1201 = vmatprep.mubr.bf16.mxu0 0
        %1202 = vmatmul.mubr.bf16.gmra.mxu0 %v1054
        %v1203 = vpop.f32.mrf.mxu0
        %v1204 = vadd.f32 0.0, %v1203
        %v1205 = vpop.f32.mrf.mxu0
        %v1206 = vpop.f32.mrf.mxu0
        %v1207 = vadd.f32 0.0, %v1206
        %v1208 = vpop.f32.mrf.mxu0
        %1209 = vmatprep.mubr.bf16.mxu0 0
        %1210 = vmatmul.mubr.bf16.gmra.mxu0 %v1057
        %v1211 = vpop.f32.mrf.mxu0
        %v1212 = vadd.f32 0.0, %v1211
        %v1213 = vpop.f32.mrf.mxu0
        %v1214 = vpop.f32.mrf.mxu0
        %v1215 = vadd.f32 0.0, %v1214
        %v1216 = vpop.f32.mrf.mxu0
        %1217 = vmatprep.mubr.bf16.mxu0 0
        %1218 = vmatmul.mubr.bf16.gmra.mxu0 %v1060
        %v1219 = vpop.f32.mrf.mxu0
        %v1220 = vadd.f32 0.0, %v1219
        %v1221 = vpop.f32.mrf.mxu0
        %v1222 = vpop.f32.mrf.mxu0
        %v1223 = vadd.f32 0.0, %v1222
        %v1224 = vpop.f32.mrf.mxu0
        %1225 = vdwg.mxu0
        %v1226 = vadd.f32 %v545, %v1100
        %v1227 = vadd.f32 %v546, %v1103
        %v1228 = vadd.f32 %v547, %v1108
        %v1229 = vadd.f32 %v548, %v1111
        %v1230 = vadd.f32 %v549, %v1116
        %v1231 = vadd.f32 %v550, %v1119
        %v1232 = vadd.f32 %v551, %v1124
        %v1233 = vadd.f32 %v552, %v1127
        %v1234 = vadd.f32 %v553, %v1132
        %v1235 = vadd.f32 %v554, %v1135
        %v1236 = vadd.f32 %v555, %v1140
        %v1237 = vadd.f32 %v556, %v1143
        %v1238 = vadd.f32 %v557, %v1148
        %v1239 = vadd.f32 %v558, %v1151
        %v1240 = vadd.f32 %v559, %v1156
        %v1241 = vadd.f32 %v560, %v1159
        %v1242 = vadd.f32 %v561, %v1164
        %v1243 = vadd.f32 %v562, %v1167
        %v1244 = vadd.f32 %v563, %v1172
        %v1245 = vadd.f32 %v564, %v1175
        %v1246 = vadd.f32 %v565, %v1180
        %v1247 = vadd.f32 %v566, %v1183
        %v1248 = vadd.f32 %v567, %v1188
        %v1249 = vadd.f32 %v568, %v1191
        %v1250 = vadd.f32 %v569, %v1196
        %v1251 = vadd.f32 %v570, %v1199
        %v1252 = vadd.f32 %v571, %v1204
        %v1253 = vadd.f32 %v572, %v1207
        %v1254 = vadd.f32 %v573, %v1212
        %v1255 = vadd.f32 %v574, %v1215
        %v1256 = vadd.f32 %v575, %v1220
        %v1257 = vadd.f32 %v576, %v1223
        %vm1274 = vcmask 1042432
        %vm1275 = vcmask 1046532
        %vm1276 = vmor %vm1274, %vm1275
        %v1277 = vrot.slane %v202, 5
        %v1278 = vrot.slane %v1277, 4
        %v1279 = vrot.slane %v203, 5
        %v1280 = vsel %vm1276, %v1278, %v1279
        %v1281 = vrot.slane %v1279, 4
        %v1282 = vrot.slane %v204, 5
        %v1283 = vsel %vm1276, %v1281, %v1282
        %v1284 = vrot.slane %v205, 5
        %v1285 = vrot.slane %v1284, 4
        %v1286 = vrot.slane %v206, 5
        %v1287 = vsel %vm1276, %v1285, %v1286
        %v1288 = vrot.slane %v1286, 4
        %v1289 = vrot.slane %v207, 5
        %v1290 = vsel %vm1276, %v1288, %v1289
        %v1291 = vrot.slane %v208, 5
        %v1292 = vrot.slane %v1291, 4
        %v1293 = vrot.slane %v209, 5
        %v1294 = vsel %vm1276, %v1292, %v1293
        %v1295 = vrot.slane %v1293, 4
        %v1296 = vrot.slane %v210, 5
        %v1297 = vsel %vm1276, %v1295, %v1296
        %v1298 = vrot.slane %v211, 5
        %v1299 = vrot.slane %v1298, 4
        %v1300 = vrot.slane %v212, 5
        %v1301 = vsel %vm1276, %v1299, %v1300
        %v1302 = vrot.slane %v1300, 4
        %v1303 = vrot.slane %v213, 5
        %v1304 = vsel %vm1276, %v1302, %v1303
        %v1305 = vrot.slane %v214, 5
        %v1306 = vrot.slane %v1305, 4
        %v1307 = vrot.slane %v215, 5
        %v1308 = vsel %vm1276, %v1306, %v1307
        %v1309 = vrot.slane %v1307, 4
        %v1310 = vrot.slane %v216, 5
        %v1311 = vsel %vm1276, %v1309, %v1310
        %v1312 = vrot.slane %v217, 5
        %v1313 = vrot.slane %v1312, 4
        %v1314 = vrot.slane %v218, 5
        %v1315 = vsel %vm1276, %v1313, %v1314
        %v1316 = vrot.slane %v1314, 4
        %v1317 = vrot.slane %v219, 5
        %v1318 = vsel %vm1276, %v1316, %v1317
        %v1319 = vrot.slane %v220, 5
        %v1320 = vrot.slane %v1319, 4
        %v1321 = vrot.slane %v221, 5
        %v1322 = vsel %vm1276, %v1320, %v1321
        %v1323 = vrot.slane %v1321, 4
        %v1324 = vrot.slane %v222, 5
        %v1325 = vsel %vm1276, %v1323, %v1324
        %v1326 = vrot.slane %v223, 5
        %v1327 = vrot.slane %v1326, 4
        %v1328 = vrot.slane %v224, 5
        %v1329 = vsel %vm1276, %v1327, %v1328
        %v1330 = vrot.slane %v1328, 4
        %v1331 = vrot.slane %v225, 5
        %v1332 = vsel %vm1276, %v1330, %v1331
        %v1333 = vrot.slane %v226, 5
        %v1334 = vrot.slane %v1333, 4
        %v1335 = vrot.slane %v227, 5
        %v1336 = vsel %vm1276, %v1334, %v1335
        %v1337 = vrot.slane %v1335, 4
        %v1338 = vrot.slane %v228, 5
        %v1339 = vsel %vm1276, %v1337, %v1338
        %v1340 = vrot.slane %v229, 5
        %v1341 = vrot.slane %v1340, 4
        %v1342 = vrot.slane %v230, 5
        %v1343 = vsel %vm1276, %v1341, %v1342
        %v1344 = vrot.slane %v1342, 4
        %v1345 = vrot.slane %v231, 5
        %v1346 = vsel %vm1276, %v1344, %v1345
        %v1347 = vrot.slane %v232, 5
        %v1348 = vrot.slane %v1347, 4
        %v1349 = vrot.slane %v233, 5
        %v1350 = vsel %vm1276, %v1348, %v1349
        %v1351 = vrot.slane %v1349, 4
        %v1352 = vrot.slane %v234, 5
        %v1353 = vsel %vm1276, %v1351, %v1352
        %v1354 = vrot.slane %v235, 5
        %v1355 = vrot.slane %v1354, 4
        %v1356 = vrot.slane %v236, 5
        %v1357 = vsel %vm1276, %v1355, %v1356
        %v1358 = vrot.slane %v1356, 4
        %v1359 = vrot.slane %v237, 5
        %v1360 = vsel %vm1276, %v1358, %v1359
        %v1361 = vrot.slane %v238, 5
        %v1362 = vrot.slane %v1361, 4
        %v1363 = vrot.slane %v239, 5
        %v1364 = vsel %vm1276, %v1362, %v1363
        %v1365 = vrot.slane %v1363, 4
        %v1366 = vrot.slane %v240, 5
        %v1367 = vsel %vm1276, %v1365, %v1366
        %v1368 = vrot.slane %v241, 5
        %v1369 = vrot.slane %v1368, 4
        %v1370 = vrot.slane %v242, 5
        %v1371 = vsel %vm1276, %v1369, %v1370
        %v1372 = vrot.slane %v1370, 4
        %v1373 = vrot.slane %v243, 5
        %v1374 = vsel %vm1276, %v1372, %v1373
        %v1375 = vrot.slane %v244, 5
        %v1376 = vrot.slane %v1375, 4
        %v1377 = vrot.slane %v245, 5
        %v1378 = vsel %vm1276, %v1376, %v1377
        %v1379 = vrot.slane %v1377, 4
        %v1380 = vrot.slane %v246, 5
        %v1381 = vsel %vm1276, %v1379, %v1380
        %v1382 = vrot.slane %v247, 5
        %v1383 = vrot.slane %v1382, 4
        %v1384 = vrot.slane %v248, 5
        %v1385 = vsel %vm1276, %v1383, %v1384
        %v1386 = vrot.slane %v1384, 4
        %v1387 = vrot.slane %v249, 5
        %v1388 = vsel %vm1276, %v1386, %v1387
        %s1389 = scalar_lea.vmem %s1, 4
        %v1390 = vld [vmem:[%s1389] sm:$0x3]
        %v1391 = vunpack.c.l.b16 %v1280
        %v1392 = vunpack.c.l.b16 %v1283
        %v1393 = vunpack.c.l.b16 %v1287
        %v1394 = vunpack.c.l.b16 %v1290
        %v1395 = vunpack.c.l.b16 %v1294
        %v1396 = vunpack.c.l.b16 %v1297
        %v1397 = vunpack.c.l.b16 %v1301
        %v1398 = vunpack.c.l.b16 %v1304
        %v1399 = vunpack.c.l.b16 %v1308
        %v1400 = vunpack.c.l.b16 %v1311
        %v1401 = vunpack.c.l.b16 %v1315
        %v1402 = vunpack.c.l.b16 %v1318
        %v1403 = vunpack.c.l.b16 %v1322
        %v1404 = vunpack.c.l.b16 %v1325
        %v1405 = vunpack.c.l.b16 %v1329
        %v1406 = vunpack.c.l.b16 %v1332
        %v1407 = vunpack.c.l.b16 %v1336
        %v1408 = vunpack.c.l.b16 %v1339
        %v1409 = vunpack.c.l.b16 %v1343
        %v1410 = vunpack.c.l.b16 %v1346
        %v1411 = vunpack.c.l.b16 %v1350
        %v1412 = vunpack.c.l.b16 %v1353
        %v1413 = vunpack.c.l.b16 %v1357
        %v1414 = vunpack.c.l.b16 %v1360
        %v1415 = vunpack.c.l.b16 %v1364
        %v1416 = vunpack.c.l.b16 %v1367
        %v1417 = vunpack.c.l.b16 %v1371
        %v1418 = vunpack.c.l.b16 %v1374
        %v1419 = vunpack.c.l.b16 %v1378
        %v1420 = vunpack.c.l.b16 %v1381
        %v1421 = vunpack.c.l.b16 %v1385
        %v1422 = vunpack.c.l.b16 %v1388
        %v1423 = vpack.c.b16 %v1392, %v1391
        %v1424 = vpack.c.b16 %v1394, %v1393
        %v1425 = vpack.c.b16 %v1396, %v1395
        %v1426 = vpack.c.b16 %v1398, %v1397
        %v1427 = vpack.c.b16 %v1400, %v1399
        %v1428 = vpack.c.b16 %v1402, %v1401
        %v1429 = vpack.c.b16 %v1404, %v1403
        %v1430 = vpack.c.b16 %v1406, %v1405
        %v1431 = vpack.c.b16 %v1408, %v1407
        %v1432 = vpack.c.b16 %v1410, %v1409
        %v1433 = vpack.c.b16 %v1412, %v1411
        %v1434 = vpack.c.b16 %v1414, %v1413
        %v1435 = vpack.c.b16 %v1416, %v1415
        %v1436 = vpack.c.b16 %v1418, %v1417
        %v1437 = vpack.c.b16 %v1420, %v1419
        %v1438 = vpack.c.b16 %v1422, %v1421
        %v1440 = vsel %vm331, %v1423, 0
        %v1443 = vsel %vm331, %v1424, 0
        %v1446 = vsel %vm331, %v1425, 0
        %v1449 = vsel %vm331, %v1426, 0
        %v1452 = vsel %vm331, %v1427, 0
        %v1455 = vsel %vm331, %v1428, 0
        %v1458 = vsel %vm331, %v1429, 0
        %v1461 = vsel %vm331, %v1430, 0
        %v1464 = vsel %vm331, %v1431, 0
        %v1467 = vsel %vm331, %v1432, 0
        %v1470 = vsel %vm331, %v1433, 0
        %v1473 = vsel %vm331, %v1434, 0
        %v1476 = vsel %vm331, %v1435, 0
        %v1479 = vsel %vm331, %v1436, 0
        %v1482 = vsel %vm331, %v1437, 0
        %v1485 = vsel %vm331, %v1438, 0
        %v1488 = vsel %vm380, %v1390, 0
        %1490 = vmatprep.subr.bf16.mxu0 0
        %1491 = vmatpush1.bf16.msra.mxu0 0
        %1492 = vmatprep.subr.bf16.mxu0 0
        %1493 = vmatpush1.bf16.msra.mxu0 0
        %1494 = vmatprep.subr.bf16.mxu0 0
        %1495 = vmatpush1.bf16.msra.mxu0 0
        %1496 = vmatprep.subr.bf16.mxu0 0
        %1497 = vmatpush1.bf16.msra.mxu0 0
        %1498 = vmatprep.subr.bf16.mxu0 0
        %1499 = vmatpush1.bf16.msra.mxu0 0
        %1500 = vmatprep.subr.bf16.mxu0 0
        %1501 = vmatpush1.bf16.msra.mxu0 0
        %1502 = vmatprep.subr.bf16.mxu0 0
        %1503 = vmatpush1.bf16.msra.mxu0 0
        %1504 = vmatprep.subr.bf16.mxu0 0
        %1505 = vmatpush1.bf16.msra.mxu0 %v1488
        %1506 = vmatprep.subr.bf16.mxu0 0
        %1507 = vmatpush2.bf16.msra.mxu0 0
        %1508 = vmatprep.subr.bf16.mxu0 0
        %1509 = vmatpush2.bf16.msra.mxu0 0
        %1510 = vmatprep.subr.bf16.mxu0 0
        %1511 = vmatpush2.bf16.msra.mxu0 0
        %1512 = vmatprep.subr.bf16.mxu0 0
        %1513 = vmatpush2.bf16.msra.mxu0 0
        %1514 = vmatprep.subr.bf16.mxu0 0
        %1515 = vmatpush2.bf16.msra.mxu0 0
        %1516 = vmatprep.subr.bf16.mxu0 0
        %1517 = vmatpush2.bf16.msra.mxu0 0
        %1518 = vmatprep.subr.bf16.mxu0 0
        %1519 = vmatpush2.bf16.msra.mxu0 0
        %1520 = vmatprep.subr.bf16.mxu0 0
        %1521 = vmatpush2.bf16.msra.mxu0 0
        %1522 = vmatprep.mubr.bf16.mxu0 0
        %1523 = vmatmul.mubr.bf16.gmra.mxu0 %v1440
        %v1524 = vpop.f32.mrf.mxu0
        %v1525 = vadd.f32 0.0, %v1524
        %v1526 = vpop.f32.mrf.mxu0
        %v1527 = vpop.f32.mrf.mxu0
        %v1528 = vadd.f32 0.0, %v1527
        %v1529 = vpop.f32.mrf.mxu0
        %1530 = vmatprep.mubr.bf16.mxu0 0
        %1531 = vmatmul.mubr.bf16.gmra.mxu0 %v1443
        %v1532 = vpop.f32.mrf.mxu0
        %v1533 = vadd.f32 0.0, %v1532
        %v1534 = vpop.f32.mrf.mxu0
        %v1535 = vpop.f32.mrf.mxu0
        %v1536 = vadd.f32 0.0, %v1535
        %v1537 = vpop.f32.mrf.mxu0
        %1538 = vmatprep.mubr.bf16.mxu0 0
        %1539 = vmatmul.mubr.bf16.gmra.mxu0 %v1446
        %v1540 = vpop.f32.mrf.mxu0
        %v1541 = vadd.f32 0.0, %v1540
        %v1542 = vpop.f32.mrf.mxu0
        %v1543 = vpop.f32.mrf.mxu0
        %v1544 = vadd.f32 0.0, %v1543
        %v1545 = vpop.f32.mrf.mxu0
        %1546 = vmatprep.mubr.bf16.mxu0 0
        %1547 = vmatmul.mubr.bf16.gmra.mxu0 %v1449
        %v1548 = vpop.f32.mrf.mxu0
        %v1549 = vadd.f32 0.0, %v1548
        %v1550 = vpop.f32.mrf.mxu0
        %v1551 = vpop.f32.mrf.mxu0
        %v1552 = vadd.f32 0.0, %v1551
        %v1553 = vpop.f32.mrf.mxu0
        %1554 = vmatprep.mubr.bf16.mxu0 0
        %1555 = vmatmul.mubr.bf16.gmra.mxu0 %v1452
        %v1556 = vpop.f32.mrf.mxu0
        %v1557 = vadd.f32 0.0, %v1556
        %v1558 = vpop.f32.mrf.mxu0
        %v1559 = vpop.f32.mrf.mxu0
        %v1560 = vadd.f32 0.0, %v1559
        %v1561 = vpop.f32.mrf.mxu0
        %1562 = vmatprep.mubr.bf16.mxu0 0
        %1563 = vmatmul.mubr.bf16.gmra.mxu0 %v1455
        %v1564 = vpop.f32.mrf.mxu0
        %v1565 = vadd.f32 0.0, %v1564
        %v1566 = vpop.f32.mrf.mxu0
        %v1567 = vpop.f32.mrf.mxu0
        %v1568 = vadd.f32 0.0, %v1567
        %v1569 = vpop.f32.mrf.mxu0
        %1570 = vmatprep.mubr.bf16.mxu0 0
        %1571 = vmatmul.mubr.bf16.gmra.mxu0 %v1458
        %v1572 = vpop.f32.mrf.mxu0
        %v1573 = vadd.f32 0.0, %v1572
        %v1574 = vpop.f32.mrf.mxu0
        %v1575 = vpop.f32.mrf.mxu0
        %v1576 = vadd.f32 0.0, %v1575
        %v1577 = vpop.f32.mrf.mxu0
        %1578 = vmatprep.mubr.bf16.mxu0 0
        %1579 = vmatmul.mubr.bf16.gmra.mxu0 %v1461
        %v1580 = vpop.f32.mrf.mxu0
        %v1581 = vadd.f32 0.0, %v1580
        %v1582 = vpop.f32.mrf.mxu0
        %v1583 = vpop.f32.mrf.mxu0
        %v1584 = vadd.f32 0.0, %v1583
        %v1585 = vpop.f32.mrf.mxu0
        %1586 = vmatprep.mubr.bf16.mxu0 0
        %1587 = vmatmul.mubr.bf16.gmra.mxu0 %v1464
        %v1588 = vpop.f32.mrf.mxu0
        %v1589 = vadd.f32 0.0, %v1588
        %v1590 = vpop.f32.mrf.mxu0
        %v1591 = vpop.f32.mrf.mxu0
        %v1592 = vadd.f32 0.0, %v1591
        %v1593 = vpop.f32.mrf.mxu0
        %1594 = vmatprep.mubr.bf16.mxu0 0
        %1595 = vmatmul.mubr.bf16.gmra.mxu0 %v1467
        %v1596 = vpop.f32.mrf.mxu0
        %v1597 = vadd.f32 0.0, %v1596
        %v1598 = vpop.f32.mrf.mxu0
        %v1599 = vpop.f32.mrf.mxu0
        %v1600 = vadd.f32 0.0, %v1599
        %v1601 = vpop.f32.mrf.mxu0
        %1602 = vmatprep.mubr.bf16.mxu0 0
        %1603 = vmatmul.mubr.bf16.gmra.mxu0 %v1470
        %v1604 = vpop.f32.mrf.mxu0
        %v1605 = vadd.f32 0.0, %v1604
        %v1606 = vpop.f32.mrf.mxu0
        %v1607 = vpop.f32.mrf.mxu0
        %v1608 = vadd.f32 0.0, %v1607
        %v1609 = vpop.f32.mrf.mxu0
        %1610 = vmatprep.mubr.bf16.mxu0 0
        %1611 = vmatmul.mubr.bf16.gmra.mxu0 %v1473
        %v1612 = vpop.f32.mrf.mxu0
        %v1613 = vadd.f32 0.0, %v1612
        %v1614 = vpop.f32.mrf.mxu0
        %v1615 = vpop.f32.mrf.mxu0
        %v1616 = vadd.f32 0.0, %v1615
        %v1617 = vpop.f32.mrf.mxu0
        %1618 = vmatprep.mubr.bf16.mxu0 0
        %1619 = vmatmul.mubr.bf16.gmra.mxu0 %v1476
        %v1620 = vpop.f32.mrf.mxu0
        %v1621 = vadd.f32 0.0, %v1620
        %v1622 = vpop.f32.mrf.mxu0
        %v1623 = vpop.f32.mrf.mxu0
        %v1624 = vadd.f32 0.0, %v1623
        %v1625 = vpop.f32.mrf.mxu0
        %1626 = vmatprep.mubr.bf16.mxu0 0
        %1627 = vmatmul.mubr.bf16.gmra.mxu0 %v1479
        %v1628 = vpop.f32.mrf.mxu0
        %v1629 = vadd.f32 0.0, %v1628
        %v1630 = vpop.f32.mrf.mxu0
        %v1631 = vpop.f32.mrf.mxu0
        %v1632 = vadd.f32 0.0, %v1631
        %v1633 = vpop.f32.mrf.mxu0
        %1634 = vmatprep.mubr.bf16.mxu0 0
        %1635 = vmatmul.mubr.bf16.gmra.mxu0 %v1482
        %v1636 = vpop.f32.mrf.mxu0
        %v1637 = vadd.f32 0.0, %v1636
        %v1638 = vpop.f32.mrf.mxu0
        %v1639 = vpop.f32.mrf.mxu0
        %v1640 = vadd.f32 0.0, %v1639
        %v1641 = vpop.f32.mrf.mxu0
        %1642 = vmatprep.mubr.bf16.mxu0 0
        %1643 = vmatmul.mubr.bf16.gmra.mxu0 %v1485
        %v1644 = vpop.f32.mrf.mxu0
        %v1645 = vadd.f32 0.0, %v1644
        %v1646 = vpop.f32.mrf.mxu0
        %v1647 = vpop.f32.mrf.mxu0
        %v1648 = vadd.f32 0.0, %v1647
        %v1649 = vpop.f32.mrf.mxu0
        %1650 = vdwg.mxu0
        %v1651 = vadd.f32 %v1226, %v1525
        %v1652 = vadd.f32 %v1227, %v1528
        %v1653 = vadd.f32 %v1228, %v1533
        %v1654 = vadd.f32 %v1229, %v1536
        %v1655 = vadd.f32 %v1230, %v1541
        %v1656 = vadd.f32 %v1231, %v1544
        %v1657 = vadd.f32 %v1232, %v1549
        %v1658 = vadd.f32 %v1233, %v1552
        %v1659 = vadd.f32 %v1234, %v1557
        %v1660 = vadd.f32 %v1235, %v1560
        %v1661 = vadd.f32 %v1236, %v1565
        %v1662 = vadd.f32 %v1237, %v1568
        %v1663 = vadd.f32 %v1238, %v1573
        %v1664 = vadd.f32 %v1239, %v1576
        %v1665 = vadd.f32 %v1240, %v1581
        %v1666 = vadd.f32 %v1241, %v1584
        %v1667 = vadd.f32 %v1242, %v1589
        %v1668 = vadd.f32 %v1243, %v1592
        %v1669 = vadd.f32 %v1244, %v1597
        %v1670 = vadd.f32 %v1245, %v1600
        %v1671 = vadd.f32 %v1246, %v1605
        %v1672 = vadd.f32 %v1247, %v1608
        %v1673 = vadd.f32 %v1248, %v1613
        %v1674 = vadd.f32 %v1249, %v1616
        %v1675 = vadd.f32 %v1250, %v1621
        %v1676 = vadd.f32 %v1251, %v1624
        %v1677 = vadd.f32 %v1252, %v1629
        %v1678 = vadd.f32 %v1253, %v1632
        %v1679 = vadd.f32 %v1254, %v1637
        %v1680 = vadd.f32 %v1255, %v1640
        %v1681 = vadd.f32 %v1256, %v1645
        %v1682 = vadd.f32 %v1257, %v1648
        %s1683 = sadd.s32 %s191, 1
        %s1684 = smul.u32 %s1683, 3
        %s1685 = smul.addr %s1684, 4
        %s1686 = scalar_lea.vmem %s186, %s1685
        %v1687 = vld [vmem:[%s1686] sm:$0xf]
        %v1688 = vld [vmem:[%s1686 + $0x4] sm:$0xf]
        %v1689 = vld [vmem:[%s1686 + $0x8] sm:$0x1]
        %v1690 = vld [vmem:[%s1686 + $0xc] sm:$0xf]
        %v1691 = vld [vmem:[%s1686 + $0x10] sm:$0xf]
        %v1692 = vld [vmem:[%s1686 + $0x14] sm:$0x1]
        %v1693 = vld [vmem:[%s1686 + $0x18] sm:$0xf]
        %v1694 = vld [vmem:[%s1686 + $0x1c] sm:$0xf]
        %v1695 = vld [vmem:[%s1686 + $0x20] sm:$0x1]
        %v1696 = vld [vmem:[%s1686 + $0x24] sm:$0xf]
        %v1697 = vld [vmem:[%s1686 + $0x28] sm:$0xf]
        %v1698 = vld [vmem:[%s1686 + $0x2c] sm:$0x1]
        %v1699 = vld [vmem:[%s1686 + $0x30] sm:$0xf]
        %v1700 = vld [vmem:[%s1686 + $0x34] sm:$0xf]
        %v1701 = vld [vmem:[%s1686 + $0x38] sm:$0x1]
        %v1702 = vld [vmem:[%s1686 + $0x3c] sm:$0xf]
        %v1703 = vld [vmem:[%s1686 + $0x40] sm:$0xf]
        %v1704 = vld [vmem:[%s1686 + $0x44] sm:$0x1]
        %v1705 = vld [vmem:[%s1686 + $0x48] sm:$0xf]
        %v1706 = vld [vmem:[%s1686 + $0x4c] sm:$0xf]
        %v1707 = vld [vmem:[%s1686 + $0x50] sm:$0x1]
        %v1708 = vld [vmem:[%s1686 + $0x54] sm:$0xf]
        %v1709 = vld [vmem:[%s1686 + $0x58] sm:$0xf]
        %v1710 = vld [vmem:[%s1686 + $0x5c] sm:$0x1]
        %v1711 = vld [vmem:[%s1686 + $0x60] sm:$0xf]
        %v1712 = vld [vmem:[%s1686 + $0x64] sm:$0xf]
        %v1713 = vld [vmem:[%s1686 + $0x68] sm:$0x1]
        %v1714 = vld [vmem:[%s1686 + $0x6c] sm:$0xf]
        %v1715 = vld [vmem:[%s1686 + $0x70] sm:$0xf]
        %v1716 = vld [vmem:[%s1686 + $0x74] sm:$0x1]
        %v1717 = vld [vmem:[%s1686 + $0x78] sm:$0xf]
        %v1718 = vld [vmem:[%s1686 + $0x7c] sm:$0xf]
        %v1719 = vld [vmem:[%s1686 + $0x80] sm:$0x1]
        %v1720 = vld [vmem:[%s1686 + $0x84] sm:$0xf]
        %v1721 = vld [vmem:[%s1686 + $0x88] sm:$0xf]
        %v1722 = vld [vmem:[%s1686 + $0x8c] sm:$0x1]
        %v1723 = vld [vmem:[%s1686 + $0x90] sm:$0xf]
        %v1724 = vld [vmem:[%s1686 + $0x94] sm:$0xf]
        %v1725 = vld [vmem:[%s1686 + $0x98] sm:$0x1]
        %v1726 = vld [vmem:[%s1686 + $0x9c] sm:$0xf]
        %v1727 = vld [vmem:[%s1686 + $0xa0] sm:$0xf]
        %v1728 = vld [vmem:[%s1686 + $0xa4] sm:$0x1]
        %v1729 = vld [vmem:[%s1686 + $0xa8] sm:$0xf]
        %v1730 = vld [vmem:[%s1686 + $0xac] sm:$0xf]
        %v1731 = vld [vmem:[%s1686 + $0xb0] sm:$0x1]
        %v1732 = vld [vmem:[%s1686 + $0xb4] sm:$0xf]
        %v1733 = vld [vmem:[%s1686 + $0xb8] sm:$0xf]
        %v1734 = vld [vmem:[%s1686 + $0xbc] sm:$0x1]
        %s1735 = scalar_lea.vmem %s1, 6
        %v1736 = vld [vmem:[%s1735] sm:$0x3]
        %v1769 = vunpack.c.l.b16 %v1687
        %v1770 = vunpack.c.l.b16 %v1688
        %v1771 = vunpack.c.l.b16 %v1690
        %v1772 = vunpack.c.l.b16 %v1691
        %v1773 = vunpack.c.l.b16 %v1693
        %v1774 = vunpack.c.l.b16 %v1694
        %v1775 = vunpack.c.l.b16 %v1696
        %v1776 = vunpack.c.l.b16 %v1697
        %v1777 = vunpack.c.l.b16 %v1699
        %v1778 = vunpack.c.l.b16 %v1700
        %v1779 = vunpack.c.l.b16 %v1702
        %v1780 = vunpack.c.l.b16 %v1703
        %v1781 = vunpack.c.l.b16 %v1705
        %v1782 = vunpack.c.l.b16 %v1706
        %v1783 = vunpack.c.l.b16 %v1708
        %v1784 = vunpack.c.l.b16 %v1709
        %v1785 = vunpack.c.l.b16 %v1711
        %v1786 = vunpack.c.l.b16 %v1712
        %v1787 = vunpack.c.l.b16 %v1714
        %v1788 = vunpack.c.l.b16 %v1715
        %v1789 = vunpack.c.l.b16 %v1717
        %v1790 = vunpack.c.l.b16 %v1718
        %v1791 = vunpack.c.l.b16 %v1720
        %v1792 = vunpack.c.l.b16 %v1721
        %v1793 = vunpack.c.l.b16 %v1723
        %v1794 = vunpack.c.l.b16 %v1724
        %v1795 = vunpack.c.l.b16 %v1726
        %v1796 = vunpack.c.l.b16 %v1727
        %v1797 = vunpack.c.l.b16 %v1729
        %v1798 = vunpack.c.l.b16 %v1730
        %v1799 = vunpack.c.l.b16 %v1732
        %v1800 = vunpack.c.l.b16 %v1733
        %v1801 = vpack.c.b16 %v1770, %v1769
        %v1802 = vpack.c.b16 %v1772, %v1771
        %v1803 = vpack.c.b16 %v1774, %v1773
        %v1804 = vpack.c.b16 %v1776, %v1775
        %v1805 = vpack.c.b16 %v1778, %v1777
        %v1806 = vpack.c.b16 %v1780, %v1779
        %v1807 = vpack.c.b16 %v1782, %v1781
        %v1808 = vpack.c.b16 %v1784, %v1783
        %v1809 = vpack.c.b16 %v1786, %v1785
        %v1810 = vpack.c.b16 %v1788, %v1787
        %v1811 = vpack.c.b16 %v1790, %v1789
        %v1812 = vpack.c.b16 %v1792, %v1791
        %v1813 = vpack.c.b16 %v1794, %v1793
        %v1814 = vpack.c.b16 %v1796, %v1795
        %v1815 = vpack.c.b16 %v1798, %v1797
        %v1816 = vpack.c.b16 %v1800, %v1799
        %v1818 = vsel %vm331, %v1801, 0
        %v1821 = vsel %vm331, %v1802, 0
        %v1824 = vsel %vm331, %v1803, 0
        %v1827 = vsel %vm331, %v1804, 0
        %v1830 = vsel %vm331, %v1805, 0
        %v1833 = vsel %vm331, %v1806, 0
        %v1836 = vsel %vm331, %v1807, 0
        %v1839 = vsel %vm331, %v1808, 0
        %v1842 = vsel %vm331, %v1809, 0
        %v1845 = vsel %vm331, %v1810, 0
        %v1848 = vsel %vm331, %v1811, 0
        %v1851 = vsel %vm331, %v1812, 0
        %v1854 = vsel %vm331, %v1813, 0
        %v1857 = vsel %vm331, %v1814, 0
        %v1860 = vsel %vm331, %v1815, 0
        %v1863 = vsel %vm331, %v1816, 0
        %v1866 = vsel %vm380, %v1736, 0
        %1868 = vmatprep.subr.bf16.mxu0 0
        %1869 = vmatpush1.bf16.msra.mxu0 0
        %1870 = vmatprep.subr.bf16.mxu0 0
        %1871 = vmatpush1.bf16.msra.mxu0 0
        %1872 = vmatprep.subr.bf16.mxu0 0
        %1873 = vmatpush1.bf16.msra.mxu0 0
        %1874 = vmatprep.subr.bf16.mxu0 0
        %1875 = vmatpush1.bf16.msra.mxu0 0
        %1876 = vmatprep.subr.bf16.mxu0 0
        %1877 = vmatpush1.bf16.msra.mxu0 0
        %1878 = vmatprep.subr.bf16.mxu0 0
        %1879 = vmatpush1.bf16.msra.mxu0 0
        %1880 = vmatprep.subr.bf16.mxu0 0
        %1881 = vmatpush1.bf16.msra.mxu0 0
        %1882 = vmatprep.subr.bf16.mxu0 0
        %1883 = vmatpush1.bf16.msra.mxu0 %v1866
        %1884 = vmatprep.subr.bf16.mxu0 0
        %1885 = vmatpush2.bf16.msra.mxu0 0
        %1886 = vmatprep.subr.bf16.mxu0 0
        %1887 = vmatpush2.bf16.msra.mxu0 0
        %1888 = vmatprep.subr.bf16.mxu0 0
        %1889 = vmatpush2.bf16.msra.mxu0 0
        %1890 = vmatprep.subr.bf16.mxu0 0
        %1891 = vmatpush2.bf16.msra.mxu0 0
        %1892 = vmatprep.subr.bf16.mxu0 0
        %1893 = vmatpush2.bf16.msra.mxu0 0
        %1894 = vmatprep.subr.bf16.mxu0 0
        %1895 = vmatpush2.bf16.msra.mxu0 0
        %1896 = vmatprep.subr.bf16.mxu0 0
        %1897 = vmatpush2.bf16.msra.mxu0 0
        %1898 = vmatprep.subr.bf16.mxu0 0
        %1899 = vmatpush2.bf16.msra.mxu0 0
        %1900 = vmatprep.mubr.bf16.mxu0 0
        %1901 = vmatmul.mubr.bf16.gmra.mxu0 %v1818
        %v1902 = vpop.f32.mrf.mxu0
        %v1903 = vadd.f32 0.0, %v1902
        %v1904 = vpop.f32.mrf.mxu0
        %v1905 = vpop.f32.mrf.mxu0
        %v1906 = vadd.f32 0.0, %v1905
        %v1907 = vpop.f32.mrf.mxu0
        %1908 = vmatprep.mubr.bf16.mxu0 0
        %1909 = vmatmul.mubr.bf16.gmra.mxu0 %v1821
        %v1910 = vpop.f32.mrf.mxu0
        %v1911 = vadd.f32 0.0, %v1910
        %v1912 = vpop.f32.mrf.mxu0
        %v1913 = vpop.f32.mrf.mxu0
        %v1914 = vadd.f32 0.0, %v1913
        %v1915 = vpop.f32.mrf.mxu0
        %1916 = vmatprep.mubr.bf16.mxu0 0
        %1917 = vmatmul.mubr.bf16.gmra.mxu0 %v1824
        %v1918 = vpop.f32.mrf.mxu0
        %v1919 = vadd.f32 0.0, %v1918
        %v1920 = vpop.f32.mrf.mxu0
        %v1921 = vpop.f32.mrf.mxu0
        %v1922 = vadd.f32 0.0, %v1921
        %v1923 = vpop.f32.mrf.mxu0
        %1924 = vmatprep.mubr.bf16.mxu0 0
        %1925 = vmatmul.mubr.bf16.gmra.mxu0 %v1827
        %v1926 = vpop.f32.mrf.mxu0
        %v1927 = vadd.f32 0.0, %v1926
        %v1928 = vpop.f32.mrf.mxu0
        %v1929 = vpop.f32.mrf.mxu0
        %v1930 = vadd.f32 0.0, %v1929
        %v1931 = vpop.f32.mrf.mxu0
        %1932 = vmatprep.mubr.bf16.mxu0 0
        %1933 = vmatmul.mubr.bf16.gmra.mxu0 %v1830
        %v1934 = vpop.f32.mrf.mxu0
        %v1935 = vadd.f32 0.0, %v1934
        %v1936 = vpop.f32.mrf.mxu0
        %v1937 = vpop.f32.mrf.mxu0
        %v1938 = vadd.f32 0.0, %v1937
        %v1939 = vpop.f32.mrf.mxu0
        %1940 = vmatprep.mubr.bf16.mxu0 0
        %1941 = vmatmul.mubr.bf16.gmra.mxu0 %v1833
        %v1942 = vpop.f32.mrf.mxu0
        %v1943 = vadd.f32 0.0, %v1942
        %v1944 = vpop.f32.mrf.mxu0
        %v1945 = vpop.f32.mrf.mxu0
        %v1946 = vadd.f32 0.0, %v1945
        %v1947 = vpop.f32.mrf.mxu0
        %1948 = vmatprep.mubr.bf16.mxu0 0
        %1949 = vmatmul.mubr.bf16.gmra.mxu0 %v1836
        %v1950 = vpop.f32.mrf.mxu0
        %v1951 = vadd.f32 0.0, %v1950
        %v1952 = vpop.f32.mrf.mxu0
        %v1953 = vpop.f32.mrf.mxu0
        %v1954 = vadd.f32 0.0, %v1953
        %v1955 = vpop.f32.mrf.mxu0
        %1956 = vmatprep.mubr.bf16.mxu0 0
        %1957 = vmatmul.mubr.bf16.gmra.mxu0 %v1839
        %v1958 = vpop.f32.mrf.mxu0
        %v1959 = vadd.f32 0.0, %v1958
        %v1960 = vpop.f32.mrf.mxu0
        %v1961 = vpop.f32.mrf.mxu0
        %v1962 = vadd.f32 0.0, %v1961
        %v1963 = vpop.f32.mrf.mxu0
        %1964 = vmatprep.mubr.bf16.mxu0 0
        %1965 = vmatmul.mubr.bf16.gmra.mxu0 %v1842
        %v1966 = vpop.f32.mrf.mxu0
        %v1967 = vadd.f32 0.0, %v1966
        %v1968 = vpop.f32.mrf.mxu0
        %v1969 = vpop.f32.mrf.mxu0
        %v1970 = vadd.f32 0.0, %v1969
        %v1971 = vpop.f32.mrf.mxu0
        %1972 = vmatprep.mubr.bf16.mxu0 0
        %1973 = vmatmul.mubr.bf16.gmra.mxu0 %v1845
        %v1974 = vpop.f32.mrf.mxu0
        %v1975 = vadd.f32 0.0, %v1974
        %v1976 = vpop.f32.mrf.mxu0
        %v1977 = vpop.f32.mrf.mxu0
        %v1978 = vadd.f32 0.0, %v1977
        %v1979 = vpop.f32.mrf.mxu0
        %1980 = vmatprep.mubr.bf16.mxu0 0
        %1981 = vmatmul.mubr.bf16.gmra.mxu0 %v1848
        %v1982 = vpop.f32.mrf.mxu0
        %v1983 = vadd.f32 0.0, %v1982
        %v1984 = vpop.f32.mrf.mxu0
        %v1985 = vpop.f32.mrf.mxu0
        %v1986 = vadd.f32 0.0, %v1985
        %v1987 = vpop.f32.mrf.mxu0
        %1988 = vmatprep.mubr.bf16.mxu0 0
        %1989 = vmatmul.mubr.bf16.gmra.mxu0 %v1851
        %v1990 = vpop.f32.mrf.mxu0
        %v1991 = vadd.f32 0.0, %v1990
        %v1992 = vpop.f32.mrf.mxu0
        %v1993 = vpop.f32.mrf.mxu0
        %v1994 = vadd.f32 0.0, %v1993
        %v1995 = vpop.f32.mrf.mxu0
        %1996 = vmatprep.mubr.bf16.mxu0 0
        %1997 = vmatmul.mubr.bf16.gmra.mxu0 %v1854
        %v1998 = vpop.f32.mrf.mxu0
        %v1999 = vadd.f32 0.0, %v1998
        %v2000 = vpop.f32.mrf.mxu0
        %v2001 = vpop.f32.mrf.mxu0
        %v2002 = vadd.f32 0.0, %v2001
        %v2003 = vpop.f32.mrf.mxu0
        %2004 = vmatprep.mubr.bf16.mxu0 0
        %2005 = vmatmul.mubr.bf16.gmra.mxu0 %v1857
        %v2006 = vpop.f32.mrf.mxu0
        %v2007 = vadd.f32 0.0, %v2006
        %v2008 = vpop.f32.mrf.mxu0
        %v2009 = vpop.f32.mrf.mxu0
        %v2010 = vadd.f32 0.0, %v2009
        %v2011 = vpop.f32.mrf.mxu0
        %2012 = vmatprep.mubr.bf16.mxu0 0
        %2013 = vmatmul.mubr.bf16.gmra.mxu0 %v1860
        %v2014 = vpop.f32.mrf.mxu0
        %v2015 = vadd.f32 0.0, %v2014
        %v2016 = vpop.f32.mrf.mxu0
        %v2017 = vpop.f32.mrf.mxu0
        %v2018 = vadd.f32 0.0, %v2017
        %v2019 = vpop.f32.mrf.mxu0
        %2020 = vmatprep.mubr.bf16.mxu0 0
        %2021 = vmatmul.mubr.bf16.gmra.mxu0 %v1863
        %v2022 = vpop.f32.mrf.mxu0
        %v2023 = vadd.f32 0.0, %v2022
        %v2024 = vpop.f32.mrf.mxu0
        %v2025 = vpop.f32.mrf.mxu0
        %v2026 = vadd.f32 0.0, %v2025
        %v2027 = vpop.f32.mrf.mxu0
        %2028 = vdwg.mxu0
        %v2029 = vadd.f32 %v1651, %v1903
        %v2030 = vadd.f32 %v1652, %v1906
        %v2031 = vadd.f32 %v1653, %v1911
        %v2032 = vadd.f32 %v1654, %v1914
        %v2033 = vadd.f32 %v1655, %v1919
        %v2034 = vadd.f32 %v1656, %v1922
        %v2035 = vadd.f32 %v1657, %v1927
        %v2036 = vadd.f32 %v1658, %v1930
        %v2037 = vadd.f32 %v1659, %v1935
        %v2038 = vadd.f32 %v1660, %v1938
        %v2039 = vadd.f32 %v1661, %v1943
        %v2040 = vadd.f32 %v1662, %v1946
        %v2041 = vadd.f32 %v1663, %v1951
        %v2042 = vadd.f32 %v1664, %v1954
        %v2043 = vadd.f32 %v1665, %v1959
        %v2044 = vadd.f32 %v1666, %v1962
        %v2045 = vadd.f32 %v1667, %v1967
        %v2046 = vadd.f32 %v1668, %v1970
        %v2047 = vadd.f32 %v1669, %v1975
        %v2048 = vadd.f32 %v1670, %v1978
        %v2049 = vadd.f32 %v1671, %v1983
        %v2050 = vadd.f32 %v1672, %v1986
        %v2051 = vadd.f32 %v1673, %v1991
        %v2052 = vadd.f32 %v1674, %v1994
        %v2053 = vadd.f32 %v1675, %v1999
        %v2054 = vadd.f32 %v1676, %v2002
        %v2055 = vadd.f32 %v1677, %v2007
        %v2056 = vadd.f32 %v1678, %v2010
        %v2057 = vadd.f32 %v1679, %v2015
        %v2058 = vadd.f32 %v1680, %v2018
        %v2059 = vadd.f32 %v1681, %v2023
        %v2060 = vadd.f32 %v1682, %v2026
        %v2062 = vshrl.u32 %v1687, 16
        %v2064 = vrot.slane %v2062, 4
        %v2065 = vshll.u32 %v1687, 16
        %v2067 = vrot.slane %v2065, 5
        %v2068 = vor.u32 %v2064, %v2067
        %v2069 = vrot.slane %v2068, 4
        %v2071 = vshll.u32 %v1688, 16
        %v2073 = vrot.slane %v2071, 5
        %v2074 = vsel %vm579, %v2069, %v2073
        %v2075 = vshrl.u32 %v1688, 16
        %v2077 = vrot.slane %v2075, 4
        %v2078 = vor.u32 %v2077, %v2073
        %v2079 = vrot.slane %v2078, 4
        %v2081 = vshll.u32 %v1689, 16
        %v2083 = vrot.slane %v2081, 5
        %v2084 = vsel %vm579, %v2079, %v2083
        %v2086 = vshrl.u32 %v1690, 16
        %v2088 = vrot.slane %v2086, 4
        %v2089 = vshll.u32 %v1690, 16
        %v2091 = vrot.slane %v2089, 5
        %v2092 = vor.u32 %v2088, %v2091
        %v2093 = vrot.slane %v2092, 4
        %v2095 = vshll.u32 %v1691, 16
        %v2097 = vrot.slane %v2095, 5
        %v2098 = vsel %vm579, %v2093, %v2097
        %v2099 = vshrl.u32 %v1691, 16
        %v2101 = vrot.slane %v2099, 4
        %v2102 = vor.u32 %v2101, %v2097
        %v2103 = vrot.slane %v2102, 4
        %v2105 = vshll.u32 %v1692, 16
        %v2107 = vrot.slane %v2105, 5
        %v2108 = vsel %vm579, %v2103, %v2107
        %v2110 = vshrl.u32 %v1693, 16
        %v2112 = vrot.slane %v2110, 4
        %v2113 = vshll.u32 %v1693, 16
        %v2115 = vrot.slane %v2113, 5
        %v2116 = vor.u32 %v2112, %v2115
        %v2117 = vrot.slane %v2116, 4
        %v2119 = vshll.u32 %v1694, 16
        %v2121 = vrot.slane %v2119, 5
        %v2122 = vsel %vm579, %v2117, %v2121
        %v2123 = vshrl.u32 %v1694, 16
        %v2125 = vrot.slane %v2123, 4
        %v2126 = vor.u32 %v2125, %v2121
        %v2127 = vrot.slane %v2126, 4
        %v2129 = vshll.u32 %v1695, 16
        %v2131 = vrot.slane %v2129, 5
        %v2132 = vsel %vm579, %v2127, %v2131
        %v2134 = vshrl.u32 %v1696, 16
        %v2136 = vrot.slane %v2134, 4
        %v2137 = vshll.u32 %v1696, 16
        %v2139 = vrot.slane %v2137, 5
        %v2140 = vor.u32 %v2136, %v2139
        %v2141 = vrot.slane %v2140, 4
        %v2143 = vshll.u32 %v1697, 16
        %v2145 = vrot.slane %v2143, 5
        %v2146 = vsel %vm579, %v2141, %v2145
        %v2147 = vshrl.u32 %v1697, 16
        %v2149 = vrot.slane %v2147, 4
        %v2150 = vor.u32 %v2149, %v2145
        %v2151 = vrot.slane %v2150, 4
        %v2153 = vshll.u32 %v1698, 16
        %v2155 = vrot.slane %v2153, 5
        %v2156 = vsel %vm579, %v2151, %v2155
        %v2158 = vshrl.u32 %v1699, 16
        %v2160 = vrot.slane %v2158, 4
        %v2161 = vshll.u32 %v1699, 16
        %v2163 = vrot.slane %v2161, 5
        %v2164 = vor.u32 %v2160, %v2163
        %v2165 = vrot.slane %v2164, 4
        %v2167 = vshll.u32 %v1700, 16
        %v2169 = vrot.slane %v2167, 5
        %v2170 = vsel %vm579, %v2165, %v2169
        %v2171 = vshrl.u32 %v1700, 16
        %v2173 = vrot.slane %v2171, 4
        %v2174 = vor.u32 %v2173, %v2169
        %v2175 = vrot.slane %v2174, 4
        %v2177 = vshll.u32 %v1701, 16
        %v2179 = vrot.slane %v2177, 5
        %v2180 = vsel %vm579, %v2175, %v2179
        %v2182 = vshrl.u32 %v1702, 16
        %v2184 = vrot.slane %v2182, 4
        %v2185 = vshll.u32 %v1702, 16
        %v2187 = vrot.slane %v2185, 5
        %v2188 = vor.u32 %v2184, %v2187
        %v2189 = vrot.slane %v2188, 4
        %v2191 = vshll.u32 %v1703, 16
        %v2193 = vrot.slane %v2191, 5
        %v2194 = vsel %vm579, %v2189, %v2193
        %v2195 = vshrl.u32 %v1703, 16
        %v2197 = vrot.slane %v2195, 4
        %v2198 = vor.u32 %v2197, %v2193
        %v2199 = vrot.slane %v2198, 4
        %v2201 = vshll.u32 %v1704, 16
        %v2203 = vrot.slane %v2201, 5
        %v2204 = vsel %vm579, %v2199, %v2203
        %v2206 = vshrl.u32 %v1705, 16
        %v2208 = vrot.slane %v2206, 4
        %v2209 = vshll.u32 %v1705, 16
        %v2211 = vrot.slane %v2209, 5
        %v2212 = vor.u32 %v2208, %v2211
        %v2213 = vrot.slane %v2212, 4
        %v2215 = vshll.u32 %v1706, 16
        %v2217 = vrot.slane %v2215, 5
        %v2218 = vsel %vm579, %v2213, %v2217
        %v2219 = vshrl.u32 %v1706, 16
        %v2221 = vrot.slane %v2219, 4
        %v2222 = vor.u32 %v2221, %v2217
        %v2223 = vrot.slane %v2222, 4
        %v2225 = vshll.u32 %v1707, 16
        %v2227 = vrot.slane %v2225, 5
        %v2228 = vsel %vm579, %v2223, %v2227
        %v2230 = vshrl.u32 %v1708, 16
        %v2232 = vrot.slane %v2230, 4
        %v2233 = vshll.u32 %v1708, 16
        %v2235 = vrot.slane %v2233, 5
        %v2236 = vor.u32 %v2232, %v2235
        %v2237 = vrot.slane %v2236, 4
        %v2239 = vshll.u32 %v1709, 16
        %v2241 = vrot.slane %v2239, 5
        %v2242 = vsel %vm579, %v2237, %v2241
        %v2243 = vshrl.u32 %v1709, 16
        %v2245 = vrot.slane %v2243, 4
        %v2246 = vor.u32 %v2245, %v2241
        %v2247 = vrot.slane %v2246, 4
        %v2249 = vshll.u32 %v1710, 16
        %v2251 = vrot.slane %v2249, 5
        %v2252 = vsel %vm579, %v2247, %v2251
        %v2254 = vshrl.u32 %v1711, 16
        %v2256 = vrot.slane %v2254, 4
        %v2257 = vshll.u32 %v1711, 16
        %v2259 = vrot.slane %v2257, 5
        %v2260 = vor.u32 %v2256, %v2259
        %v2261 = vrot.slane %v2260, 4
        %v2263 = vshll.u32 %v1712, 16
        %v2265 = vrot.slane %v2263, 5
        %v2266 = vsel %vm579, %v2261, %v2265
        %v2267 = vshrl.u32 %v1712, 16
        %v2269 = vrot.slane %v2267, 4
        %v2270 = vor.u32 %v2269, %v2265
        %v2271 = vrot.slane %v2270, 4
        %v2273 = vshll.u32 %v1713, 16
        %v2275 = vrot.slane %v2273, 5
        %v2276 = vsel %vm579, %v2271, %v2275
        %v2278 = vshrl.u32 %v1714, 16
        %v2280 = vrot.slane %v2278, 4
        %v2281 = vshll.u32 %v1714, 16
        %v2283 = vrot.slane %v2281, 5
        %v2284 = vor.u32 %v2280, %v2283
        %v2285 = vrot.slane %v2284, 4
        %v2287 = vshll.u32 %v1715, 16
        %v2289 = vrot.slane %v2287, 5
        %v2290 = vsel %vm579, %v2285, %v2289
        %v2291 = vshrl.u32 %v1715, 16
        %v2293 = vrot.slane %v2291, 4
        %v2294 = vor.u32 %v2293, %v2289
        %v2295 = vrot.slane %v2294, 4
        %v2297 = vshll.u32 %v1716, 16
        %v2299 = vrot.slane %v2297, 5
        %v2300 = vsel %vm579, %v2295, %v2299
        %v2302 = vshrl.u32 %v1717, 16
        %v2304 = vrot.slane %v2302, 4
        %v2305 = vshll.u32 %v1717, 16
        %v2307 = vrot.slane %v2305, 5
        %v2308 = vor.u32 %v2304, %v2307
        %v2309 = vrot.slane %v2308, 4
        %v2311 = vshll.u32 %v1718, 16
        %v2313 = vrot.slane %v2311, 5
        %v2314 = vsel %vm579, %v2309, %v2313
        %v2315 = vshrl.u32 %v1718, 16
        %v2317 = vrot.slane %v2315, 4
        %v2318 = vor.u32 %v2317, %v2313
        %v2319 = vrot.slane %v2318, 4
        %v2321 = vshll.u32 %v1719, 16
        %v2323 = vrot.slane %v2321, 5
        %v2324 = vsel %vm579, %v2319, %v2323
        %v2326 = vshrl.u32 %v1720, 16
        %v2328 = vrot.slane %v2326, 4
        %v2329 = vshll.u32 %v1720, 16
        %v2331 = vrot.slane %v2329, 5
        %v2332 = vor.u32 %v2328, %v2331
        %v2333 = vrot.slane %v2332, 4
        %v2335 = vshll.u32 %v1721, 16
        %v2337 = vrot.slane %v2335, 5
        %v2338 = vsel %vm579, %v2333, %v2337
        %v2339 = vshrl.u32 %v1721, 16
        %v2341 = vrot.slane %v2339, 4
        %v2342 = vor.u32 %v2341, %v2337
        %v2343 = vrot.slane %v2342, 4
        %v2345 = vshll.u32 %v1722, 16
        %v2347 = vrot.slane %v2345, 5
        %v2348 = vsel %vm579, %v2343, %v2347
        %v2350 = vshrl.u32 %v1723, 16
        %v2352 = vrot.slane %v2350, 4
        %v2353 = vshll.u32 %v1723, 16
        %v2355 = vrot.slane %v2353, 5
        %v2356 = vor.u32 %v2352, %v2355
        %v2357 = vrot.slane %v2356, 4
        %v2359 = vshll.u32 %v1724, 16
        %v2361 = vrot.slane %v2359, 5
        %v2362 = vsel %vm579, %v2357, %v2361
        %v2363 = vshrl.u32 %v1724, 16
        %v2365 = vrot.slane %v2363, 4
        %v2366 = vor.u32 %v2365, %v2361
        %v2367 = vrot.slane %v2366, 4
        %v2369 = vshll.u32 %v1725, 16
        %v2371 = vrot.slane %v2369, 5
        %v2372 = vsel %vm579, %v2367, %v2371
        %v2374 = vshrl.u32 %v1726, 16
        %v2376 = vrot.slane %v2374, 4
        %v2377 = vshll.u32 %v1726, 16
        %v2379 = vrot.slane %v2377, 5
        %v2380 = vor.u32 %v2376, %v2379
        %v2381 = vrot.slane %v2380, 4
        %v2383 = vshll.u32 %v1727, 16
        %v2385 = vrot.slane %v2383, 5
        %v2386 = vsel %vm579, %v2381, %v2385
        %v2387 = vshrl.u32 %v1727, 16
        %v2389 = vrot.slane %v2387, 4
        %v2390 = vor.u32 %v2389, %v2385
        %v2391 = vrot.slane %v2390, 4
        %v2393 = vshll.u32 %v1728, 16
        %v2395 = vrot.slane %v2393, 5
        %v2396 = vsel %vm579, %v2391, %v2395
        %v2398 = vshrl.u32 %v1729, 16
        %v2400 = vrot.slane %v2398, 4
        %v2401 = vshll.u32 %v1729, 16
        %v2403 = vrot.slane %v2401, 5
        %v2404 = vor.u32 %v2400, %v2403
        %v2405 = vrot.slane %v2404, 4
        %v2407 = vshll.u32 %v1730, 16
        %v2409 = vrot.slane %v2407, 5
        %v2410 = vsel %vm579, %v2405, %v2409
        %v2411 = vshrl.u32 %v1730, 16
        %v2413 = vrot.slane %v2411, 4
        %v2414 = vor.u32 %v2413, %v2409
        %v2415 = vrot.slane %v2414, 4
        %v2417 = vshll.u32 %v1731, 16
        %v2419 = vrot.slane %v2417, 5
        %v2420 = vsel %vm579, %v2415, %v2419
        %v2422 = vshrl.u32 %v1732, 16
        %v2424 = vrot.slane %v2422, 4
        %v2425 = vshll.u32 %v1732, 16
        %v2427 = vrot.slane %v2425, 5
        %v2428 = vor.u32 %v2424, %v2427
        %v2429 = vrot.slane %v2428, 4
        %v2431 = vshll.u32 %v1733, 16
        %v2433 = vrot.slane %v2431, 5
        %v2434 = vsel %vm579, %v2429, %v2433
        %v2435 = vshrl.u32 %v1733, 16
        %v2437 = vrot.slane %v2435, 4
        %v2438 = vor.u32 %v2437, %v2433
        %v2439 = vrot.slane %v2438, 4
        %v2441 = vshll.u32 %v1734, 16
        %v2443 = vrot.slane %v2441, 5
        %v2444 = vsel %vm579, %v2439, %v2443
        %s2445 = scalar_lea.vmem %s1, 8
        %v2446 = vld [vmem:[%s2445] sm:$0x3]
        %v2447 = vunpack.c.l.b16 %v2074
        %v2448 = vunpack.c.l.b16 %v2084
        %v2449 = vunpack.c.l.b16 %v2098
        %v2450 = vunpack.c.l.b16 %v2108
        %v2451 = vunpack.c.l.b16 %v2122
        %v2452 = vunpack.c.l.b16 %v2132
        %v2453 = vunpack.c.l.b16 %v2146
        %v2454 = vunpack.c.l.b16 %v2156
        %v2455 = vunpack.c.l.b16 %v2170
        %v2456 = vunpack.c.l.b16 %v2180
        %v2457 = vunpack.c.l.b16 %v2194
        %v2458 = vunpack.c.l.b16 %v2204
        %v2459 = vunpack.c.l.b16 %v2218
        %v2460 = vunpack.c.l.b16 %v2228
        %v2461 = vunpack.c.l.b16 %v2242
        %v2462 = vunpack.c.l.b16 %v2252
        %v2463 = vunpack.c.l.b16 %v2266
        %v2464 = vunpack.c.l.b16 %v2276
        %v2465 = vunpack.c.l.b16 %v2290
        %v2466 = vunpack.c.l.b16 %v2300
        %v2467 = vunpack.c.l.b16 %v2314
        %v2468 = vunpack.c.l.b16 %v2324
        %v2469 = vunpack.c.l.b16 %v2338
        %v2470 = vunpack.c.l.b16 %v2348
        %v2471 = vunpack.c.l.b16 %v2362
        %v2472 = vunpack.c.l.b16 %v2372
        %v2473 = vunpack.c.l.b16 %v2386
        %v2474 = vunpack.c.l.b16 %v2396
        %v2475 = vunpack.c.l.b16 %v2410
        %v2476 = vunpack.c.l.b16 %v2420
        %v2477 = vunpack.c.l.b16 %v2434
        %v2478 = vunpack.c.l.b16 %v2444
        %v2479 = vpack.c.b16 %v2448, %v2447
        %v2480 = vpack.c.b16 %v2450, %v2449
        %v2481 = vpack.c.b16 %v2452, %v2451
        %v2482 = vpack.c.b16 %v2454, %v2453
        %v2483 = vpack.c.b16 %v2456, %v2455
        %v2484 = vpack.c.b16 %v2458, %v2457
        %v2485 = vpack.c.b16 %v2460, %v2459
        %v2486 = vpack.c.b16 %v2462, %v2461
        %v2487 = vpack.c.b16 %v2464, %v2463
        %v2488 = vpack.c.b16 %v2466, %v2465
        %v2489 = vpack.c.b16 %v2468, %v2467
        %v2490 = vpack.c.b16 %v2470, %v2469
        %v2491 = vpack.c.b16 %v2472, %v2471
        %v2492 = vpack.c.b16 %v2474, %v2473
        %v2493 = vpack.c.b16 %v2476, %v2475
        %v2494 = vpack.c.b16 %v2478, %v2477
        %v2496 = vsel %vm331, %v2479, 0
        %v2499 = vsel %vm331, %v2480, 0
        %v2502 = vsel %vm331, %v2481, 0
        %v2505 = vsel %vm331, %v2482, 0
        %v2508 = vsel %vm331, %v2483, 0
        %v2511 = vsel %vm331, %v2484, 0
        %v2514 = vsel %vm331, %v2485, 0
        %v2517 = vsel %vm331, %v2486, 0
        %v2520 = vsel %vm331, %v2487, 0
        %v2523 = vsel %vm331, %v2488, 0
        %v2526 = vsel %vm331, %v2489, 0
        %v2529 = vsel %vm331, %v2490, 0
        %v2532 = vsel %vm331, %v2491, 0
        %v2535 = vsel %vm331, %v2492, 0
        %v2538 = vsel %vm331, %v2493, 0
        %v2541 = vsel %vm331, %v2494, 0
        %v2544 = vsel %vm380, %v2446, 0
        %2546 = vmatprep.subr.bf16.mxu0 0
        %2547 = vmatpush1.bf16.msra.mxu0 0
        %2548 = vmatprep.subr.bf16.mxu0 0
        %2549 = vmatpush1.bf16.msra.mxu0 0
        %2550 = vmatprep.subr.bf16.mxu0 0
        %2551 = vmatpush1.bf16.msra.mxu0 0
        %2552 = vmatprep.subr.bf16.mxu0 0
        %2553 = vmatpush1.bf16.msra.mxu0 0
        %2554 = vmatprep.subr.bf16.mxu0 0
        %2555 = vmatpush1.bf16.msra.mxu0 0
        %2556 = vmatprep.subr.bf16.mxu0 0
        %2557 = vmatpush1.bf16.msra.mxu0 0
        %2558 = vmatprep.subr.bf16.mxu0 0
        %2559 = vmatpush1.bf16.msra.mxu0 0
        %2560 = vmatprep.subr.bf16.mxu0 0
        %2561 = vmatpush1.bf16.msra.mxu0 %v2544
        %2562 = vmatprep.subr.bf16.mxu0 0
        %2563 = vmatpush2.bf16.msra.mxu0 0
        %2564 = vmatprep.subr.bf16.mxu0 0
        %2565 = vmatpush2.bf16.msra.mxu0 0
        %2566 = vmatprep.subr.bf16.mxu0 0
        %2567 = vmatpush2.bf16.msra.mxu0 0
        %2568 = vmatprep.subr.bf16.mxu0 0
        %2569 = vmatpush2.bf16.msra.mxu0 0
        %2570 = vmatprep.subr.bf16.mxu0 0
        %2571 = vmatpush2.bf16.msra.mxu0 0
        %2572 = vmatprep.subr.bf16.mxu0 0
        %2573 = vmatpush2.bf16.msra.mxu0 0
        %2574 = vmatprep.subr.bf16.mxu0 0
        %2575 = vmatpush2.bf16.msra.mxu0 0
        %2576 = vmatprep.subr.bf16.mxu0 0
        %2577 = vmatpush2.bf16.msra.mxu0 0
        %2578 = vmatprep.mubr.bf16.mxu0 0
        %2579 = vmatmul.mubr.bf16.gmra.mxu0 %v2496
        %v2580 = vpop.f32.mrf.mxu0
        %v2581 = vadd.f32 0.0, %v2580
        %v2582 = vpop.f32.mrf.mxu0
        %v2583 = vpop.f32.mrf.mxu0
        %v2584 = vadd.f32 0.0, %v2583
        %v2585 = vpop.f32.mrf.mxu0
        %2586 = vmatprep.mubr.bf16.mxu0 0
        %2587 = vmatmul.mubr.bf16.gmra.mxu0 %v2499
        %v2588 = vpop.f32.mrf.mxu0
        %v2589 = vadd.f32 0.0, %v2588
        %v2590 = vpop.f32.mrf.mxu0
        %v2591 = vpop.f32.mrf.mxu0
        %v2592 = vadd.f32 0.0, %v2591
        %v2593 = vpop.f32.mrf.mxu0
        %2594 = vmatprep.mubr.bf16.mxu0 0
        %2595 = vmatmul.mubr.bf16.gmra.mxu0 %v2502
        %v2596 = vpop.f32.mrf.mxu0
        %v2597 = vadd.f32 0.0, %v2596
        %v2598 = vpop.f32.mrf.mxu0
        %v2599 = vpop.f32.mrf.mxu0
        %v2600 = vadd.f32 0.0, %v2599
        %v2601 = vpop.f32.mrf.mxu0
        %2602 = vmatprep.mubr.bf16.mxu0 0
        %2603 = vmatmul.mubr.bf16.gmra.mxu0 %v2505
        %v2604 = vpop.f32.mrf.mxu0
        %v2605 = vadd.f32 0.0, %v2604
        %v2606 = vpop.f32.mrf.mxu0
        %v2607 = vpop.f32.mrf.mxu0
        %v2608 = vadd.f32 0.0, %v2607
        %v2609 = vpop.f32.mrf.mxu0
        %2610 = vmatprep.mubr.bf16.mxu0 0
        %2611 = vmatmul.mubr.bf16.gmra.mxu0 %v2508
        %v2612 = vpop.f32.mrf.mxu0
        %v2613 = vadd.f32 0.0, %v2612
        %v2614 = vpop.f32.mrf.mxu0
        %v2615 = vpop.f32.mrf.mxu0
        %v2616 = vadd.f32 0.0, %v2615
        %v2617 = vpop.f32.mrf.mxu0
        %2618 = vmatprep.mubr.bf16.mxu0 0
        %2619 = vmatmul.mubr.bf16.gmra.mxu0 %v2511
        %v2620 = vpop.f32.mrf.mxu0
        %v2621 = vadd.f32 0.0, %v2620
        %v2622 = vpop.f32.mrf.mxu0
        %v2623 = vpop.f32.mrf.mxu0
        %v2624 = vadd.f32 0.0, %v2623
        %v2625 = vpop.f32.mrf.mxu0
        %2626 = vmatprep.mubr.bf16.mxu0 0
        %2627 = vmatmul.mubr.bf16.gmra.mxu0 %v2514
        %v2628 = vpop.f32.mrf.mxu0
        %v2629 = vadd.f32 0.0, %v2628
        %v2630 = vpop.f32.mrf.mxu0
        %v2631 = vpop.f32.mrf.mxu0
        %v2632 = vadd.f32 0.0, %v2631
        %v2633 = vpop.f32.mrf.mxu0
        %2634 = vmatprep.mubr.bf16.mxu0 0
        %2635 = vmatmul.mubr.bf16.gmra.mxu0 %v2517
        %v2636 = vpop.f32.mrf.mxu0
        %v2637 = vadd.f32 0.0, %v2636
        %v2638 = vpop.f32.mrf.mxu0
        %v2639 = vpop.f32.mrf.mxu0
        %v2640 = vadd.f32 0.0, %v2639
        %v2641 = vpop.f32.mrf.mxu0
        %2642 = vmatprep.mubr.bf16.mxu0 0
        %2643 = vmatmul.mubr.bf16.gmra.mxu0 %v2520
        %v2644 = vpop.f32.mrf.mxu0
        %v2645 = vadd.f32 0.0, %v2644
        %v2646 = vpop.f32.mrf.mxu0
        %v2647 = vpop.f32.mrf.mxu0
        %v2648 = vadd.f32 0.0, %v2647
        %v2649 = vpop.f32.mrf.mxu0
        %2650 = vmatprep.mubr.bf16.mxu0 0
        %2651 = vmatmul.mubr.bf16.gmra.mxu0 %v2523
        %v2652 = vpop.f32.mrf.mxu0
        %v2653 = vadd.f32 0.0, %v2652
        %v2654 = vpop.f32.mrf.mxu0
        %v2655 = vpop.f32.mrf.mxu0
        %v2656 = vadd.f32 0.0, %v2655
        %v2657 = vpop.f32.mrf.mxu0
        %2658 = vmatprep.mubr.bf16.mxu0 0
        %2659 = vmatmul.mubr.bf16.gmra.mxu0 %v2526
        %v2660 = vpop.f32.mrf.mxu0
        %v2661 = vadd.f32 0.0, %v2660
        %v2662 = vpop.f32.mrf.mxu0
        %v2663 = vpop.f32.mrf.mxu0
        %v2664 = vadd.f32 0.0, %v2663
        %v2665 = vpop.f32.mrf.mxu0
        %2666 = vmatprep.mubr.bf16.mxu0 0
        %2667 = vmatmul.mubr.bf16.gmra.mxu0 %v2529
        %v2668 = vpop.f32.mrf.mxu0
        %v2669 = vadd.f32 0.0, %v2668
        %v2670 = vpop.f32.mrf.mxu0
        %v2671 = vpop.f32.mrf.mxu0
        %v2672 = vadd.f32 0.0, %v2671
        %v2673 = vpop.f32.mrf.mxu0
        %2674 = vmatprep.mubr.bf16.mxu0 0
        %2675 = vmatmul.mubr.bf16.gmra.mxu0 %v2532
        %v2676 = vpop.f32.mrf.mxu0
        %v2677 = vadd.f32 0.0, %v2676
        %v2678 = vpop.f32.mrf.mxu0
        %v2679 = vpop.f32.mrf.mxu0
        %v2680 = vadd.f32 0.0, %v2679
        %v2681 = vpop.f32.mrf.mxu0
        %2682 = vmatprep.mubr.bf16.mxu0 0
        %2683 = vmatmul.mubr.bf16.gmra.mxu0 %v2535
        %v2684 = vpop.f32.mrf.mxu0
        %v2685 = vadd.f32 0.0, %v2684
        %v2686 = vpop.f32.mrf.mxu0
        %v2687 = vpop.f32.mrf.mxu0
        %v2688 = vadd.f32 0.0, %v2687
        %v2689 = vpop.f32.mrf.mxu0
        %2690 = vmatprep.mubr.bf16.mxu0 0
        %2691 = vmatmul.mubr.bf16.gmra.mxu0 %v2538
        %v2692 = vpop.f32.mrf.mxu0
        %v2693 = vadd.f32 0.0, %v2692
        %v2694 = vpop.f32.mrf.mxu0
        %v2695 = vpop.f32.mrf.mxu0
        %v2696 = vadd.f32 0.0, %v2695
        %v2697 = vpop.f32.mrf.mxu0
        %2698 = vmatprep.mubr.bf16.mxu0 0
        %2699 = vmatmul.mubr.bf16.gmra.mxu0 %v2541
        %v2700 = vpop.f32.mrf.mxu0
        %v2701 = vadd.f32 0.0, %v2700
        %v2702 = vpop.f32.mrf.mxu0
        %v2703 = vpop.f32.mrf.mxu0
        %v2704 = vadd.f32 0.0, %v2703
        %v2705 = vpop.f32.mrf.mxu0
        %2706 = vdwg.mxu0
        %v2707 = vadd.f32 %v2029, %v2581
        %v2708 = vadd.f32 %v2030, %v2584
        %v2709 = vadd.f32 %v2031, %v2589
        %v2710 = vadd.f32 %v2032, %v2592
        %v2711 = vadd.f32 %v2033, %v2597
        %v2712 = vadd.f32 %v2034, %v2600
        %v2713 = vadd.f32 %v2035, %v2605
        %v2714 = vadd.f32 %v2036, %v2608
        %v2715 = vadd.f32 %v2037, %v2613
        %v2716 = vadd.f32 %v2038, %v2616
        %v2717 = vadd.f32 %v2039, %v2621
        %v2718 = vadd.f32 %v2040, %v2624
        %v2719 = vadd.f32 %v2041, %v2629
        %v2720 = vadd.f32 %v2042, %v2632
        %v2721 = vadd.f32 %v2043, %v2637
        %v2722 = vadd.f32 %v2044, %v2640
        %v2723 = vadd.f32 %v2045, %v2645
        %v2724 = vadd.f32 %v2046, %v2648
        %v2725 = vadd.f32 %v2047, %v2653
        %v2726 = vadd.f32 %v2048, %v2656
        %v2727 = vadd.f32 %v2049, %v2661
        %v2728 = vadd.f32 %v2050, %v2664
        %v2729 = vadd.f32 %v2051, %v2669
        %v2730 = vadd.f32 %v2052, %v2672
        %v2731 = vadd.f32 %v2053, %v2677
        %v2732 = vadd.f32 %v2054, %v2680
        %v2733 = vadd.f32 %v2055, %v2685
        %v2734 = vadd.f32 %v2056, %v2688
        %v2735 = vadd.f32 %v2057, %v2693
        %v2736 = vadd.f32 %v2058, %v2696
        %v2737 = vadd.f32 %v2059, %v2701
        %v2738 = vadd.f32 %v2060, %v2704
        %v2755 = vrot.slane %v1687, 5
        %v2756 = vrot.slane %v2755, 4
        %v2757 = vrot.slane %v1688, 5
        %v2758 = vsel %vm1276, %v2756, %v2757
        %v2759 = vrot.slane %v2757, 4
        %v2760 = vrot.slane %v1689, 5
        %v2761 = vsel %vm1276, %v2759, %v2760
        %v2762 = vrot.slane %v1690, 5
        %v2763 = vrot.slane %v2762, 4
        %v2764 = vrot.slane %v1691, 5
        %v2765 = vsel %vm1276, %v2763, %v2764
        %v2766 = vrot.slane %v2764, 4
        %v2767 = vrot.slane %v1692, 5
        %v2768 = vsel %vm1276, %v2766, %v2767
        %v2769 = vrot.slane %v1693, 5
        %v2770 = vrot.slane %v2769, 4
        %v2771 = vrot.slane %v1694, 5
        %v2772 = vsel %vm1276, %v2770, %v2771
        %v2773 = vrot.slane %v2771, 4
        %v2774 = vrot.slane %v1695, 5
        %v2775 = vsel %vm1276, %v2773, %v2774
        %v2776 = vrot.slane %v1696, 5
        %v2777 = vrot.slane %v2776, 4
        %v2778 = vrot.slane %v1697, 5
        %v2779 = vsel %vm1276, %v2777, %v2778
        %v2780 = vrot.slane %v2778, 4
        %v2781 = vrot.slane %v1698, 5
        %v2782 = vsel %vm1276, %v2780, %v2781
        %v2783 = vrot.slane %v1699, 5
        %v2784 = vrot.slane %v2783, 4
        %v2785 = vrot.slane %v1700, 5
        %v2786 = vsel %vm1276, %v2784, %v2785
        %v2787 = vrot.slane %v2785, 4
        %v2788 = vrot.slane %v1701, 5
        %v2789 = vsel %vm1276, %v2787, %v2788
        %v2790 = vrot.slane %v1702, 5
        %v2791 = vrot.slane %v2790, 4
        %v2792 = vrot.slane %v1703, 5
        %v2793 = vsel %vm1276, %v2791, %v2792
        %v2794 = vrot.slane %v2792, 4
        %v2795 = vrot.slane %v1704, 5
        %v2796 = vsel %vm1276, %v2794, %v2795
        %v2797 = vrot.slane %v1705, 5
        %v2798 = vrot.slane %v2797, 4
        %v2799 = vrot.slane %v1706, 5
        %v2800 = vsel %vm1276, %v2798, %v2799
        %v2801 = vrot.slane %v2799, 4
        %v2802 = vrot.slane %v1707, 5
        %v2803 = vsel %vm1276, %v2801, %v2802
        %v2804 = vrot.slane %v1708, 5
        %v2805 = vrot.slane %v2804, 4
        %v2806 = vrot.slane %v1709, 5
        %v2807 = vsel %vm1276, %v2805, %v2806
        %v2808 = vrot.slane %v2806, 4
        %v2809 = vrot.slane %v1710, 5
        %v2810 = vsel %vm1276, %v2808, %v2809
        %v2811 = vrot.slane %v1711, 5
        %v2812 = vrot.slane %v2811, 4
        %v2813 = vrot.slane %v1712, 5
        %v2814 = vsel %vm1276, %v2812, %v2813
        %v2815 = vrot.slane %v2813, 4
        %v2816 = vrot.slane %v1713, 5
        %v2817 = vsel %vm1276, %v2815, %v2816
        %v2818 = vrot.slane %v1714, 5
        %v2819 = vrot.slane %v2818, 4
        %v2820 = vrot.slane %v1715, 5
        %v2821 = vsel %vm1276, %v2819, %v2820
        %v2822 = vrot.slane %v2820, 4
        %v2823 = vrot.slane %v1716, 5
        %v2824 = vsel %vm1276, %v2822, %v2823
        %v2825 = vrot.slane %v1717, 5
        %v2826 = vrot.slane %v2825, 4
        %v2827 = vrot.slane %v1718, 5
        %v2828 = vsel %vm1276, %v2826, %v2827
        %v2829 = vrot.slane %v2827, 4
        %v2830 = vrot.slane %v1719, 5
        %v2831 = vsel %vm1276, %v2829, %v2830
        %v2832 = vrot.slane %v1720, 5
        %v2833 = vrot.slane %v2832, 4
        %v2834 = vrot.slane %v1721, 5
        %v2835 = vsel %vm1276, %v2833, %v2834
        %v2836 = vrot.slane %v2834, 4
        %v2837 = vrot.slane %v1722, 5
        %v2838 = vsel %vm1276, %v2836, %v2837
        %v2839 = vrot.slane %v1723, 5
        %v2840 = vrot.slane %v2839, 4
        %v2841 = vrot.slane %v1724, 5
        %v2842 = vsel %vm1276, %v2840, %v2841
        %v2843 = vrot.slane %v2841, 4
        %v2844 = vrot.slane %v1725, 5
        %v2845 = vsel %vm1276, %v2843, %v2844
        %v2846 = vrot.slane %v1726, 5
        %v2847 = vrot.slane %v2846, 4
        %v2848 = vrot.slane %v1727, 5
        %v2849 = vsel %vm1276, %v2847, %v2848
        %v2850 = vrot.slane %v2848, 4
        %v2851 = vrot.slane %v1728, 5
        %v2852 = vsel %vm1276, %v2850, %v2851
        %v2853 = vrot.slane %v1729, 5
        %v2854 = vrot.slane %v2853, 4
        %v2855 = vrot.slane %v1730, 5
        %v2856 = vsel %vm1276, %v2854, %v2855
        %v2857 = vrot.slane %v2855, 4
        %v2858 = vrot.slane %v1731, 5
        %v2859 = vsel %vm1276, %v2857, %v2858
        %v2860 = vrot.slane %v1732, 5
        %v2861 = vrot.slane %v2860, 4
        %v2862 = vrot.slane %v1733, 5
        %v2863 = vsel %vm1276, %v2861, %v2862
        %v2864 = vrot.slane %v2862, 4
        %v2865 = vrot.slane %v1734, 5
        %v2866 = vsel %vm1276, %v2864, %v2865
        %s2867 = scalar_lea.vmem %s1, 10
        %v2868 = vld [vmem:[%s2867] sm:$0x3]
        %v2869 = vunpack.c.l.b16 %v2758
        %v2870 = vunpack.c.l.b16 %v2761
        %v2871 = vunpack.c.l.b16 %v2765
        %v2872 = vunpack.c.l.b16 %v2768
        %v2873 = vunpack.c.l.b16 %v2772
        %v2874 = vunpack.c.l.b16 %v2775
        %v2875 = vunpack.c.l.b16 %v2779
        %v2876 = vunpack.c.l.b16 %v2782
        %v2877 = vunpack.c.l.b16 %v2786
        %v2878 = vunpack.c.l.b16 %v2789
        %v2879 = vunpack.c.l.b16 %v2793
        %v2880 = vunpack.c.l.b16 %v2796
        %v2881 = vunpack.c.l.b16 %v2800
        %v2882 = vunpack.c.l.b16 %v2803
        %v2883 = vunpack.c.l.b16 %v2807
        %v2884 = vunpack.c.l.b16 %v2810
        %v2885 = vunpack.c.l.b16 %v2814
        %v2886 = vunpack.c.l.b16 %v2817
        %v2887 = vunpack.c.l.b16 %v2821
        %v2888 = vunpack.c.l.b16 %v2824
        %v2889 = vunpack.c.l.b16 %v2828
        %v2890 = vunpack.c.l.b16 %v2831
        %v2891 = vunpack.c.l.b16 %v2835
        %v2892 = vunpack.c.l.b16 %v2838
        %v2893 = vunpack.c.l.b16 %v2842
        %v2894 = vunpack.c.l.b16 %v2845
        %v2895 = vunpack.c.l.b16 %v2849
        %v2896 = vunpack.c.l.b16 %v2852
        %v2897 = vunpack.c.l.b16 %v2856
        %v2898 = vunpack.c.l.b16 %v2859
        %v2899 = vunpack.c.l.b16 %v2863
        %v2900 = vunpack.c.l.b16 %v2866
        %v2901 = vpack.c.b16 %v2870, %v2869
        %v2902 = vpack.c.b16 %v2872, %v2871
        %v2903 = vpack.c.b16 %v2874, %v2873
        %v2904 = vpack.c.b16 %v2876, %v2875
        %v2905 = vpack.c.b16 %v2878, %v2877
        %v2906 = vpack.c.b16 %v2880, %v2879
        %v2907 = vpack.c.b16 %v2882, %v2881
        %v2908 = vpack.c.b16 %v2884, %v2883
        %v2909 = vpack.c.b16 %v2886, %v2885
        %v2910 = vpack.c.b16 %v2888, %v2887
        %v2911 = vpack.c.b16 %v2890, %v2889
        %v2912 = vpack.c.b16 %v2892, %v2891
        %v2913 = vpack.c.b16 %v2894, %v2893
        %v2914 = vpack.c.b16 %v2896, %v2895
        %v2915 = vpack.c.b16 %v2898, %v2897
        %v2916 = vpack.c.b16 %v2900, %v2899
        %v2918 = vsel %vm331, %v2901, 0
        %v2921 = vsel %vm331, %v2902, 0
        %v2924 = vsel %vm331, %v2903, 0
        %v2927 = vsel %vm331, %v2904, 0
        %v2930 = vsel %vm331, %v2905, 0
        %v2933 = vsel %vm331, %v2906, 0
        %v2936 = vsel %vm331, %v2907, 0
        %v2939 = vsel %vm331, %v2908, 0
        %v2942 = vsel %vm331, %v2909, 0
        %v2945 = vsel %vm331, %v2910, 0
        %v2948 = vsel %vm331, %v2911, 0
        %v2951 = vsel %vm331, %v2912, 0
        %v2954 = vsel %vm331, %v2913, 0
        %v2957 = vsel %vm331, %v2914, 0
        %v2960 = vsel %vm331, %v2915, 0
        %v2963 = vsel %vm331, %v2916, 0
        %v2966 = vsel %vm380, %v2868, 0
        %2968 = vmatprep.subr.bf16.mxu0 0
        %2969 = vmatpush1.bf16.msra.mxu0 0
        %2970 = vmatprep.subr.bf16.mxu0 0
        %2971 = vmatpush1.bf16.msra.mxu0 0
        %2972 = vmatprep.subr.bf16.mxu0 0
        %2973 = vmatpush1.bf16.msra.mxu0 0
        %2974 = vmatprep.subr.bf16.mxu0 0
        %2975 = vmatpush1.bf16.msra.mxu0 0
        %2976 = vmatprep.subr.bf16.mxu0 0
        %2977 = vmatpush1.bf16.msra.mxu0 0
        %2978 = vmatprep.subr.bf16.mxu0 0
        %2979 = vmatpush1.bf16.msra.mxu0 0
        %2980 = vmatprep.subr.bf16.mxu0 0
        %2981 = vmatpush1.bf16.msra.mxu0 0
        %2982 = vmatprep.subr.bf16.mxu0 0
        %2983 = vmatpush1.bf16.msra.mxu0 %v2966
        %2984 = vmatprep.subr.bf16.mxu0 0
        %2985 = vmatpush2.bf16.msra.mxu0 0
        %2986 = vmatprep.subr.bf16.mxu0 0
        %2987 = vmatpush2.bf16.msra.mxu0 0
        %2988 = vmatprep.subr.bf16.mxu0 0
        %2989 = vmatpush2.bf16.msra.mxu0 0
        %2990 = vmatprep.subr.bf16.mxu0 0
        %2991 = vmatpush2.bf16.msra.mxu0 0
        %2992 = vmatprep.subr.bf16.mxu0 0
        %2993 = vmatpush2.bf16.msra.mxu0 0
        %2994 = vmatprep.subr.bf16.mxu0 0
        %2995 = vmatpush2.bf16.msra.mxu0 0
        %2996 = vmatprep.subr.bf16.mxu0 0
        %2997 = vmatpush2.bf16.msra.mxu0 0
        %2998 = vmatprep.subr.bf16.mxu0 0
        %2999 = vmatpush2.bf16.msra.mxu0 0
        %3000 = vmatprep.mubr.bf16.mxu0 0
        %3001 = vmatmul.mubr.bf16.gmra.mxu0 %v2918
        %v3002 = vpop.f32.mrf.mxu0
        %v3003 = vadd.f32 0.0, %v3002
        %v3004 = vpop.f32.mrf.mxu0
        %v3005 = vpop.f32.mrf.mxu0
        %v3006 = vadd.f32 0.0, %v3005
        %v3007 = vpop.f32.mrf.mxu0
        %3008 = vmatprep.mubr.bf16.mxu0 0
        %3009 = vmatmul.mubr.bf16.gmra.mxu0 %v2921
        %v3010 = vpop.f32.mrf.mxu0
        %v3011 = vadd.f32 0.0, %v3010
        %v3012 = vpop.f32.mrf.mxu0
        %v3013 = vpop.f32.mrf.mxu0
        %v3014 = vadd.f32 0.0, %v3013
        %v3015 = vpop.f32.mrf.mxu0
        %3016 = vmatprep.mubr.bf16.mxu0 0
        %3017 = vmatmul.mubr.bf16.gmra.mxu0 %v2924
        %v3018 = vpop.f32.mrf.mxu0
        %v3019 = vadd.f32 0.0, %v3018
        %v3020 = vpop.f32.mrf.mxu0
        %v3021 = vpop.f32.mrf.mxu0
        %v3022 = vadd.f32 0.0, %v3021
        %v3023 = vpop.f32.mrf.mxu0
        %3024 = vmatprep.mubr.bf16.mxu0 0
        %3025 = vmatmul.mubr.bf16.gmra.mxu0 %v2927
        %v3026 = vpop.f32.mrf.mxu0
        %v3027 = vadd.f32 0.0, %v3026
        %v3028 = vpop.f32.mrf.mxu0
        %v3029 = vpop.f32.mrf.mxu0
        %v3030 = vadd.f32 0.0, %v3029
        %v3031 = vpop.f32.mrf.mxu0
        %3032 = vmatprep.mubr.bf16.mxu0 0
        %3033 = vmatmul.mubr.bf16.gmra.mxu0 %v2930
        %v3034 = vpop.f32.mrf.mxu0
        %v3035 = vadd.f32 0.0, %v3034
        %v3036 = vpop.f32.mrf.mxu0
        %v3037 = vpop.f32.mrf.mxu0
        %v3038 = vadd.f32 0.0, %v3037
        %v3039 = vpop.f32.mrf.mxu0
        %3040 = vmatprep.mubr.bf16.mxu0 0
        %3041 = vmatmul.mubr.bf16.gmra.mxu0 %v2933
        %v3042 = vpop.f32.mrf.mxu0
        %v3043 = vadd.f32 0.0, %v3042
        %v3044 = vpop.f32.mrf.mxu0
        %v3045 = vpop.f32.mrf.mxu0
        %v3046 = vadd.f32 0.0, %v3045
        %v3047 = vpop.f32.mrf.mxu0
        %3048 = vmatprep.mubr.bf16.mxu0 0
        %3049 = vmatmul.mubr.bf16.gmra.mxu0 %v2936
        %v3050 = vpop.f32.mrf.mxu0
        %v3051 = vadd.f32 0.0, %v3050
        %v3052 = vpop.f32.mrf.mxu0
        %v3053 = vpop.f32.mrf.mxu0
        %v3054 = vadd.f32 0.0, %v3053
        %v3055 = vpop.f32.mrf.mxu0
        %3056 = vmatprep.mubr.bf16.mxu0 0
        %3057 = vmatmul.mubr.bf16.gmra.mxu0 %v2939
        %v3058 = vpop.f32.mrf.mxu0
        %v3059 = vadd.f32 0.0, %v3058
        %v3060 = vpop.f32.mrf.mxu0
        %v3061 = vpop.f32.mrf.mxu0
        %v3062 = vadd.f32 0.0, %v3061
        %v3063 = vpop.f32.mrf.mxu0
        %3064 = vmatprep.mubr.bf16.mxu0 0
        %3065 = vmatmul.mubr.bf16.gmra.mxu0 %v2942
        %v3066 = vpop.f32.mrf.mxu0
        %v3067 = vadd.f32 0.0, %v3066
        %v3068 = vpop.f32.mrf.mxu0
        %v3069 = vpop.f32.mrf.mxu0
        %v3070 = vadd.f32 0.0, %v3069
        %v3071 = vpop.f32.mrf.mxu0
        %3072 = vmatprep.mubr.bf16.mxu0 0
        %3073 = vmatmul.mubr.bf16.gmra.mxu0 %v2945
        %v3074 = vpop.f32.mrf.mxu0
        %v3075 = vadd.f32 0.0, %v3074
        %v3076 = vpop.f32.mrf.mxu0
        %v3077 = vpop.f32.mrf.mxu0
        %v3078 = vadd.f32 0.0, %v3077
        %v3079 = vpop.f32.mrf.mxu0
        %3080 = vmatprep.mubr.bf16.mxu0 0
        %3081 = vmatmul.mubr.bf16.gmra.mxu0 %v2948
        %v3082 = vpop.f32.mrf.mxu0
        %v3083 = vadd.f32 0.0, %v3082
        %v3084 = vpop.f32.mrf.mxu0
        %v3085 = vpop.f32.mrf.mxu0
        %v3086 = vadd.f32 0.0, %v3085
        %v3087 = vpop.f32.mrf.mxu0
        %3088 = vmatprep.mubr.bf16.mxu0 0
        %3089 = vmatmul.mubr.bf16.gmra.mxu0 %v2951
        %v3090 = vpop.f32.mrf.mxu0
        %v3091 = vadd.f32 0.0, %v3090
        %v3092 = vpop.f32.mrf.mxu0
        %v3093 = vpop.f32.mrf.mxu0
        %v3094 = vadd.f32 0.0, %v3093
        %v3095 = vpop.f32.mrf.mxu0
        %3096 = vmatprep.mubr.bf16.mxu0 0
        %3097 = vmatmul.mubr.bf16.gmra.mxu0 %v2954
        %v3098 = vpop.f32.mrf.mxu0
        %v3099 = vadd.f32 0.0, %v3098
        %v3100 = vpop.f32.mrf.mxu0
        %v3101 = vpop.f32.mrf.mxu0
        %v3102 = vadd.f32 0.0, %v3101
        %v3103 = vpop.f32.mrf.mxu0
        %3104 = vmatprep.mubr.bf16.mxu0 0
        %3105 = vmatmul.mubr.bf16.gmra.mxu0 %v2957
        %v3106 = vpop.f32.mrf.mxu0
        %v3107 = vadd.f32 0.0, %v3106
        %v3108 = vpop.f32.mrf.mxu0
        %v3109 = vpop.f32.mrf.mxu0
        %v3110 = vadd.f32 0.0, %v3109
        %v3111 = vpop.f32.mrf.mxu0
        %3112 = vmatprep.mubr.bf16.mxu0 0
        %3113 = vmatmul.mubr.bf16.gmra.mxu0 %v2960
        %v3114 = vpop.f32.mrf.mxu0
        %v3115 = vadd.f32 0.0, %v3114
        %v3116 = vpop.f32.mrf.mxu0
        %v3117 = vpop.f32.mrf.mxu0
        %v3118 = vadd.f32 0.0, %v3117
        %v3119 = vpop.f32.mrf.mxu0
        %3120 = vmatprep.mubr.bf16.mxu0 0
        %3121 = vmatmul.mubr.bf16.gmra.mxu0 %v2963
        %v3122 = vpop.f32.mrf.mxu0
        %v3123 = vadd.f32 0.0, %v3122
        %v3124 = vpop.f32.mrf.mxu0
        %v3125 = vpop.f32.mrf.mxu0
        %v3126 = vadd.f32 0.0, %v3125
        %v3127 = vpop.f32.mrf.mxu0
        %3128 = vdwg.mxu0
        %v3129 = vadd.f32 %v2707, %v3003
        %v3130 = vadd.f32 %v2708, %v3006
        %v3131 = vadd.f32 %v2709, %v3011
        %v3132 = vadd.f32 %v2710, %v3014
        %v3133 = vadd.f32 %v2711, %v3019
        %v3134 = vadd.f32 %v2712, %v3022
        %v3135 = vadd.f32 %v2713, %v3027
        %v3136 = vadd.f32 %v2714, %v3030
        %v3137 = vadd.f32 %v2715, %v3035
        %v3138 = vadd.f32 %v2716, %v3038
        %v3139 = vadd.f32 %v2717, %v3043
        %v3140 = vadd.f32 %v2718, %v3046
        %v3141 = vadd.f32 %v2719, %v3051
        %v3142 = vadd.f32 %v2720, %v3054
        %v3143 = vadd.f32 %v2721, %v3059
        %v3144 = vadd.f32 %v2722, %v3062
        %v3145 = vadd.f32 %v2723, %v3067
        %v3146 = vadd.f32 %v2724, %v3070
        %v3147 = vadd.f32 %v2725, %v3075
        %v3148 = vadd.f32 %v2726, %v3078
        %v3149 = vadd.f32 %v2727, %v3083
        %v3150 = vadd.f32 %v2728, %v3086
        %v3151 = vadd.f32 %v2729, %v3091
        %v3152 = vadd.f32 %v2730, %v3094
        %v3153 = vadd.f32 %v2731, %v3099
        %v3154 = vadd.f32 %v2732, %v3102
        %v3155 = vadd.f32 %v2733, %v3107
        %v3156 = vadd.f32 %v2734, %v3110
        %v3157 = vadd.f32 %v2735, %v3115
        %v3158 = vadd.f32 %v2736, %v3118
        %v3159 = vadd.f32 %v2737, %v3123
        %v3160 = vadd.f32 %v2738, %v3126
        %s3161 = sadd.s32 %s191, 2
        %s3162 = smul.u32 %s3161, 3
        %s3163 = smul.addr %s3162, 4
        %s3164 = scalar_lea.vmem %s186, %s3163
        %v3165 = vld [vmem:[%s3164] sm:$0xf]
        %v3166 = vld [vmem:[%s3164 + $0x4] sm:$0xf]
        %v3167 = vld [vmem:[%s3164 + $0x8] sm:$0x1]
        %v3168 = vld [vmem:[%s3164 + $0xc] sm:$0xf]
        %v3169 = vld [vmem:[%s3164 + $0x10] sm:$0xf]
        %v3170 = vld [vmem:[%s3164 + $0x14] sm:$0x1]
        %v3171 = vld [vmem:[%s3164 + $0x18] sm:$0xf]
        %v3172 = vld [vmem:[%s3164 + $0x1c] sm:$0xf]
        %v3173 = vld [vmem:[%s3164 + $0x20] sm:$0x1]
        %v3174 = vld [vmem:[%s3164 + $0x24] sm:$0xf]
        %v3175 = vld [vmem:[%s3164 + $0x28] sm:$0xf]
        %v3176 = vld [vmem:[%s3164 + $0x2c] sm:$0x1]
        %v3177 = vld [vmem:[%s3164 + $0x30] sm:$0xf]
        %v3178 = vld [vmem:[%s3164 + $0x34] sm:$0xf]
        %v3179 = vld [vmem:[%s3164 + $0x38] sm:$0x1]
        %v3180 = vld [vmem:[%s3164 + $0x3c] sm:$0xf]
        %v3181 = vld [vmem:[%s3164 + $0x40] sm:$0xf]
        %v3182 = vld [vmem:[%s3164 + $0x44] sm:$0x1]
        %v3183 = vld [vmem:[%s3164 + $0x48] sm:$0xf]
        %v3184 = vld [vmem:[%s3164 + $0x4c] sm:$0xf]
        %v3185 = vld [vmem:[%s3164 + $0x50] sm:$0x1]
        %v3186 = vld [vmem:[%s3164 + $0x54] sm:$0xf]
        %v3187 = vld [vmem:[%s3164 + $0x58] sm:$0xf]
        %v3188 = vld [vmem:[%s3164 + $0x5c] sm:$0x1]
        %v3189 = vld [vmem:[%s3164 + $0x60] sm:$0xf]
        %v3190 = vld [vmem:[%s3164 + $0x64] sm:$0xf]
        %v3191 = vld [vmem:[%s3164 + $0x68] sm:$0x1]
        %v3192 = vld [vmem:[%s3164 + $0x6c] sm:$0xf]
        %v3193 = vld [vmem:[%s3164 + $0x70] sm:$0xf]
        %v3194 = vld [vmem:[%s3164 + $0x74] sm:$0x1]
        %v3195 = vld [vmem:[%s3164 + $0x78] sm:$0xf]
        %v3196 = vld [vmem:[%s3164 + $0x7c] sm:$0xf]
        %v3197 = vld [vmem:[%s3164 + $0x80] sm:$0x1]
        %v3198 = vld [vmem:[%s3164 + $0x84] sm:$0xf]
        %v3199 = vld [vmem:[%s3164 + $0x88] sm:$0xf]
        %v3200 = vld [vmem:[%s3164 + $0x8c] sm:$0x1]
        %v3201 = vld [vmem:[%s3164 + $0x90] sm:$0xf]
        %v3202 = vld [vmem:[%s3164 + $0x94] sm:$0xf]
        %v3203 = vld [vmem:[%s3164 + $0x98] sm:$0x1]
        %v3204 = vld [vmem:[%s3164 + $0x9c] sm:$0xf]
        %v3205 = vld [vmem:[%s3164 + $0xa0] sm:$0xf]
        %v3206 = vld [vmem:[%s3164 + $0xa4] sm:$0x1]
        %v3207 = vld [vmem:[%s3164 + $0xa8] sm:$0xf]
        %v3208 = vld [vmem:[%s3164 + $0xac] sm:$0xf]
        %v3209 = vld [vmem:[%s3164 + $0xb0] sm:$0x1]
        %v3210 = vld [vmem:[%s3164 + $0xb4] sm:$0xf]
        %v3211 = vld [vmem:[%s3164 + $0xb8] sm:$0xf]
        %v3212 = vld [vmem:[%s3164 + $0xbc] sm:$0x1]
        %s3213 = scalar_lea.vmem %s1, 12
        %v3214 = vld [vmem:[%s3213] sm:$0x3]
        %v3247 = vunpack.c.l.b16 %v3165
        %v3248 = vunpack.c.l.b16 %v3166
        %v3249 = vunpack.c.l.b16 %v3168
        %v3250 = vunpack.c.l.b16 %v3169
        %v3251 = vunpack.c.l.b16 %v3171
        %v3252 = vunpack.c.l.b16 %v3172
        %v3253 = vunpack.c.l.b16 %v3174
        %v3254 = vunpack.c.l.b16 %v3175
        %v3255 = vunpack.c.l.b16 %v3177
        %v3256 = vunpack.c.l.b16 %v3178
        %v3257 = vunpack.c.l.b16 %v3180
        %v3258 = vunpack.c.l.b16 %v3181
        %v3259 = vunpack.c.l.b16 %v3183
        %v3260 = vunpack.c.l.b16 %v3184
        %v3261 = vunpack.c.l.b16 %v3186
        %v3262 = vunpack.c.l.b16 %v3187
        %v3263 = vunpack.c.l.b16 %v3189
        %v3264 = vunpack.c.l.b16 %v3190
        %v3265 = vunpack.c.l.b16 %v3192
        %v3266 = vunpack.c.l.b16 %v3193
        %v3267 = vunpack.c.l.b16 %v3195
        %v3268 = vunpack.c.l.b16 %v3196
        %v3269 = vunpack.c.l.b16 %v3198
        %v3270 = vunpack.c.l.b16 %v3199
        %v3271 = vunpack.c.l.b16 %v3201
        %v3272 = vunpack.c.l.b16 %v3202
        %v3273 = vunpack.c.l.b16 %v3204
        %v3274 = vunpack.c.l.b16 %v3205
        %v3275 = vunpack.c.l.b16 %v3207
        %v3276 = vunpack.c.l.b16 %v3208
        %v3277 = vunpack.c.l.b16 %v3210
        %v3278 = vunpack.c.l.b16 %v3211
        %v3279 = vpack.c.b16 %v3248, %v3247
        %v3280 = vpack.c.b16 %v3250, %v3249
        %v3281 = vpack.c.b16 %v3252, %v3251
        %v3282 = vpack.c.b16 %v3254, %v3253
        %v3283 = vpack.c.b16 %v3256, %v3255
        %v3284 = vpack.c.b16 %v3258, %v3257
        %v3285 = vpack.c.b16 %v3260, %v3259
        %v3286 = vpack.c.b16 %v3262, %v3261
        %v3287 = vpack.c.b16 %v3264, %v3263
        %v3288 = vpack.c.b16 %v3266, %v3265
        %v3289 = vpack.c.b16 %v3268, %v3267
        %v3290 = vpack.c.b16 %v3270, %v3269
        %v3291 = vpack.c.b16 %v3272, %v3271
        %v3292 = vpack.c.b16 %v3274, %v3273
        %v3293 = vpack.c.b16 %v3276, %v3275
        %v3294 = vpack.c.b16 %v3278, %v3277
        %v3296 = vsel %vm331, %v3279, 0
        %v3299 = vsel %vm331, %v3280, 0
        %v3302 = vsel %vm331, %v3281, 0
        %v3305 = vsel %vm331, %v3282, 0
        %v3308 = vsel %vm331, %v3283, 0
        %v3311 = vsel %vm331, %v3284, 0
        %v3314 = vsel %vm331, %v3285, 0
        %v3317 = vsel %vm331, %v3286, 0
        %v3320 = vsel %vm331, %v3287, 0
        %v3323 = vsel %vm331, %v3288, 0
        %v3326 = vsel %vm331, %v3289, 0
        %v3329 = vsel %vm331, %v3290, 0
        %v3332 = vsel %vm331, %v3291, 0
        %v3335 = vsel %vm331, %v3292, 0
        %v3338 = vsel %vm331, %v3293, 0
        %v3341 = vsel %vm331, %v3294, 0
        %v3344 = vsel %vm380, %v3214, 0
        %3346 = vmatprep.subr.bf16.mxu0 0
        %3347 = vmatpush1.bf16.msra.mxu0 0
        %3348 = vmatprep.subr.bf16.mxu0 0
        %3349 = vmatpush1.bf16.msra.mxu0 0
        %3350 = vmatprep.subr.bf16.mxu0 0
        %3351 = vmatpush1.bf16.msra.mxu0 0
        %3352 = vmatprep.subr.bf16.mxu0 0
        %3353 = vmatpush1.bf16.msra.mxu0 0
        %3354 = vmatprep.subr.bf16.mxu0 0
        %3355 = vmatpush1.bf16.msra.mxu0 0
        %3356 = vmatprep.subr.bf16.mxu0 0
        %3357 = vmatpush1.bf16.msra.mxu0 0
        %3358 = vmatprep.subr.bf16.mxu0 0
        %3359 = vmatpush1.bf16.msra.mxu0 0
        %3360 = vmatprep.subr.bf16.mxu0 0
        %3361 = vmatpush1.bf16.msra.mxu0 %v3344
        %3362 = vmatprep.subr.bf16.mxu0 0
        %3363 = vmatpush2.bf16.msra.mxu0 0
        %3364 = vmatprep.subr.bf16.mxu0 0
        %3365 = vmatpush2.bf16.msra.mxu0 0
        %3366 = vmatprep.subr.bf16.mxu0 0
        %3367 = vmatpush2.bf16.msra.mxu0 0
        %3368 = vmatprep.subr.bf16.mxu0 0
        %3369 = vmatpush2.bf16.msra.mxu0 0
        %3370 = vmatprep.subr.bf16.mxu0 0
        %3371 = vmatpush2.bf16.msra.mxu0 0
        %3372 = vmatprep.subr.bf16.mxu0 0
        %3373 = vmatpush2.bf16.msra.mxu0 0
        %3374 = vmatprep.subr.bf16.mxu0 0
        %3375 = vmatpush2.bf16.msra.mxu0 0
        %3376 = vmatprep.subr.bf16.mxu0 0
        %3377 = vmatpush2.bf16.msra.mxu0 0
        %3378 = vmatprep.mubr.bf16.mxu0 0
        %3379 = vmatmul.mubr.bf16.gmra.mxu0 %v3296
        %v3380 = vpop.f32.mrf.mxu0
        %v3381 = vadd.f32 0.0, %v3380
        %v3382 = vpop.f32.mrf.mxu0
        %v3383 = vpop.f32.mrf.mxu0
        %v3384 = vadd.f32 0.0, %v3383
        %v3385 = vpop.f32.mrf.mxu0
        %3386 = vmatprep.mubr.bf16.mxu0 0
        %3387 = vmatmul.mubr.bf16.gmra.mxu0 %v3299
        %v3388 = vpop.f32.mrf.mxu0
        %v3389 = vadd.f32 0.0, %v3388
        %v3390 = vpop.f32.mrf.mxu0
        %v3391 = vpop.f32.mrf.mxu0
        %v3392 = vadd.f32 0.0, %v3391
        %v3393 = vpop.f32.mrf.mxu0
        %3394 = vmatprep.mubr.bf16.mxu0 0
        %3395 = vmatmul.mubr.bf16.gmra.mxu0 %v3302
        %v3396 = vpop.f32.mrf.mxu0
        %v3397 = vadd.f32 0.0, %v3396
        %v3398 = vpop.f32.mrf.mxu0
        %v3399 = vpop.f32.mrf.mxu0
        %v3400 = vadd.f32 0.0, %v3399
        %v3401 = vpop.f32.mrf.mxu0
        %3402 = vmatprep.mubr.bf16.mxu0 0
        %3403 = vmatmul.mubr.bf16.gmra.mxu0 %v3305
        %v3404 = vpop.f32.mrf.mxu0
        %v3405 = vadd.f32 0.0, %v3404
        %v3406 = vpop.f32.mrf.mxu0
        %v3407 = vpop.f32.mrf.mxu0
        %v3408 = vadd.f32 0.0, %v3407
        %v3409 = vpop.f32.mrf.mxu0
        %3410 = vmatprep.mubr.bf16.mxu0 0
        %3411 = vmatmul.mubr.bf16.gmra.mxu0 %v3308
        %v3412 = vpop.f32.mrf.mxu0
        %v3413 = vadd.f32 0.0, %v3412
        %v3414 = vpop.f32.mrf.mxu0
        %v3415 = vpop.f32.mrf.mxu0
        %v3416 = vadd.f32 0.0, %v3415
        %v3417 = vpop.f32.mrf.mxu0
        %3418 = vmatprep.mubr.bf16.mxu0 0
        %3419 = vmatmul.mubr.bf16.gmra.mxu0 %v3311
        %v3420 = vpop.f32.mrf.mxu0
        %v3421 = vadd.f32 0.0, %v3420
        %v3422 = vpop.f32.mrf.mxu0
        %v3423 = vpop.f32.mrf.mxu0
        %v3424 = vadd.f32 0.0, %v3423
        %v3425 = vpop.f32.mrf.mxu0
        %3426 = vmatprep.mubr.bf16.mxu0 0
        %3427 = vmatmul.mubr.bf16.gmra.mxu0 %v3314
        %v3428 = vpop.f32.mrf.mxu0
        %v3429 = vadd.f32 0.0, %v3428
        %v3430 = vpop.f32.mrf.mxu0
        %v3431 = vpop.f32.mrf.mxu0
        %v3432 = vadd.f32 0.0, %v3431
        %v3433 = vpop.f32.mrf.mxu0
        %3434 = vmatprep.mubr.bf16.mxu0 0
        %3435 = vmatmul.mubr.bf16.gmra.mxu0 %v3317
        %v3436 = vpop.f32.mrf.mxu0
        %v3437 = vadd.f32 0.0, %v3436
        %v3438 = vpop.f32.mrf.mxu0
        %v3439 = vpop.f32.mrf.mxu0
        %v3440 = vadd.f32 0.0, %v3439
        %v3441 = vpop.f32.mrf.mxu0
        %3442 = vmatprep.mubr.bf16.mxu0 0
        %3443 = vmatmul.mubr.bf16.gmra.mxu0 %v3320
        %v3444 = vpop.f32.mrf.mxu0
        %v3445 = vadd.f32 0.0, %v3444
        %v3446 = vpop.f32.mrf.mxu0
        %v3447 = vpop.f32.mrf.mxu0
        %v3448 = vadd.f32 0.0, %v3447
        %v3449 = vpop.f32.mrf.mxu0
        %3450 = vmatprep.mubr.bf16.mxu0 0
        %3451 = vmatmul.mubr.bf16.gmra.mxu0 %v3323
        %v3452 = vpop.f32.mrf.mxu0
        %v3453 = vadd.f32 0.0, %v3452
        %v3454 = vpop.f32.mrf.mxu0
        %v3455 = vpop.f32.mrf.mxu0
        %v3456 = vadd.f32 0.0, %v3455
        %v3457 = vpop.f32.mrf.mxu0
        %3458 = vmatprep.mubr.bf16.mxu0 0
        %3459 = vmatmul.mubr.bf16.gmra.mxu0 %v3326
        %v3460 = vpop.f32.mrf.mxu0
        %v3461 = vadd.f32 0.0, %v3460
        %v3462 = vpop.f32.mrf.mxu0
        %v3463 = vpop.f32.mrf.mxu0
        %v3464 = vadd.f32 0.0, %v3463
        %v3465 = vpop.f32.mrf.mxu0
        %3466 = vmatprep.mubr.bf16.mxu0 0
        %3467 = vmatmul.mubr.bf16.gmra.mxu0 %v3329
        %v3468 = vpop.f32.mrf.mxu0
        %v3469 = vadd.f32 0.0, %v3468
        %v3470 = vpop.f32.mrf.mxu0
        %v3471 = vpop.f32.mrf.mxu0
        %v3472 = vadd.f32 0.0, %v3471
        %v3473 = vpop.f32.mrf.mxu0
        %3474 = vmatprep.mubr.bf16.mxu0 0
        %3475 = vmatmul.mubr.bf16.gmra.mxu0 %v3332
        %v3476 = vpop.f32.mrf.mxu0
        %v3477 = vadd.f32 0.0, %v3476
        %v3478 = vpop.f32.mrf.mxu0
        %v3479 = vpop.f32.mrf.mxu0
        %v3480 = vadd.f32 0.0, %v3479
        %v3481 = vpop.f32.mrf.mxu0
        %3482 = vmatprep.mubr.bf16.mxu0 0
        %3483 = vmatmul.mubr.bf16.gmra.mxu0 %v3335
        %v3484 = vpop.f32.mrf.mxu0
        %v3485 = vadd.f32 0.0, %v3484
        %v3486 = vpop.f32.mrf.mxu0
        %v3487 = vpop.f32.mrf.mxu0
        %v3488 = vadd.f32 0.0, %v3487
        %v3489 = vpop.f32.mrf.mxu0
        %3490 = vmatprep.mubr.bf16.mxu0 0
        %3491 = vmatmul.mubr.bf16.gmra.mxu0 %v3338
        %v3492 = vpop.f32.mrf.mxu0
        %v3493 = vadd.f32 0.0, %v3492
        %v3494 = vpop.f32.mrf.mxu0
        %v3495 = vpop.f32.mrf.mxu0
        %v3496 = vadd.f32 0.0, %v3495
        %v3497 = vpop.f32.mrf.mxu0
        %3498 = vmatprep.mubr.bf16.mxu0 0
        %3499 = vmatmul.mubr.bf16.gmra.mxu0 %v3341
        %v3500 = vpop.f32.mrf.mxu0
        %v3501 = vadd.f32 0.0, %v3500
        %v3502 = vpop.f32.mrf.mxu0
        %v3503 = vpop.f32.mrf.mxu0
        %v3504 = vadd.f32 0.0, %v3503
        %v3505 = vpop.f32.mrf.mxu0
        %3506 = vdwg.mxu0
        %v3507 = vadd.f32 %v3129, %v3381
        %v3508 = vadd.f32 %v3130, %v3384
        %v3509 = vadd.f32 %v3131, %v3389
        %v3510 = vadd.f32 %v3132, %v3392
        %v3511 = vadd.f32 %v3133, %v3397
        %v3512 = vadd.f32 %v3134, %v3400
        %v3513 = vadd.f32 %v3135, %v3405
        %v3514 = vadd.f32 %v3136, %v3408
        %v3515 = vadd.f32 %v3137, %v3413
        %v3516 = vadd.f32 %v3138, %v3416
        %v3517 = vadd.f32 %v3139, %v3421
        %v3518 = vadd.f32 %v3140, %v3424
        %v3519 = vadd.f32 %v3141, %v3429
        %v3520 = vadd.f32 %v3142, %v3432
        %v3521 = vadd.f32 %v3143, %v3437
        %v3522 = vadd.f32 %v3144, %v3440
        %v3523 = vadd.f32 %v3145, %v3445
        %v3524 = vadd.f32 %v3146, %v3448
        %v3525 = vadd.f32 %v3147, %v3453
        %v3526 = vadd.f32 %v3148, %v3456
        %v3527 = vadd.f32 %v3149, %v3461
        %v3528 = vadd.f32 %v3150, %v3464
        %v3529 = vadd.f32 %v3151, %v3469
        %v3530 = vadd.f32 %v3152, %v3472
        %v3531 = vadd.f32 %v3153, %v3477
        %v3532 = vadd.f32 %v3154, %v3480
        %v3533 = vadd.f32 %v3155, %v3485
        %v3534 = vadd.f32 %v3156, %v3488
        %v3535 = vadd.f32 %v3157, %v3493
        %v3536 = vadd.f32 %v3158, %v3496
        %v3537 = vadd.f32 %v3159, %v3501
        %v3538 = vadd.f32 %v3160, %v3504
        %v3540 = vshrl.u32 %v3165, 16
        %v3542 = vrot.slane %v3540, 4
        %v3543 = vshll.u32 %v3165, 16
        %v3545 = vrot.slane %v3543, 5
        %v3546 = vor.u32 %v3542, %v3545
        %v3547 = vrot.slane %v3546, 4
        %v3549 = vshll.u32 %v3166, 16
        %v3551 = vrot.slane %v3549, 5
        %v3552 = vsel %vm579, %v3547, %v3551
        %v3553 = vshrl.u32 %v3166, 16
        %v3555 = vrot.slane %v3553, 4
        %v3556 = vor.u32 %v3555, %v3551
        %v3557 = vrot.slane %v3556, 4
        %v3559 = vshll.u32 %v3167, 16
        %v3561 = vrot.slane %v3559, 5
        %v3562 = vsel %vm579, %v3557, %v3561
        %v3564 = vshrl.u32 %v3168, 16
        %v3566 = vrot.slane %v3564, 4
        %v3567 = vshll.u32 %v3168, 16
        %v3569 = vrot.slane %v3567, 5
        %v3570 = vor.u32 %v3566, %v3569
        %v3571 = vrot.slane %v3570, 4
        %v3573 = vshll.u32 %v3169, 16
        %v3575 = vrot.slane %v3573, 5
        %v3576 = vsel %vm579, %v3571, %v3575
        %v3577 = vshrl.u32 %v3169, 16
        %v3579 = vrot.slane %v3577, 4
        %v3580 = vor.u32 %v3579, %v3575
        %v3581 = vrot.slane %v3580, 4
        %v3583 = vshll.u32 %v3170, 16
        %v3585 = vrot.slane %v3583, 5
        %v3586 = vsel %vm579, %v3581, %v3585
        %v3588 = vshrl.u32 %v3171, 16
        %v3590 = vrot.slane %v3588, 4
        %v3591 = vshll.u32 %v3171, 16
        %v3593 = vrot.slane %v3591, 5
        %v3594 = vor.u32 %v3590, %v3593
        %v3595 = vrot.slane %v3594, 4
        %v3597 = vshll.u32 %v3172, 16
        %v3599 = vrot.slane %v3597, 5
        %v3600 = vsel %vm579, %v3595, %v3599
        %v3601 = vshrl.u32 %v3172, 16
        %v3603 = vrot.slane %v3601, 4
        %v3604 = vor.u32 %v3603, %v3599
        %v3605 = vrot.slane %v3604, 4
        %v3607 = vshll.u32 %v3173, 16
        %v3609 = vrot.slane %v3607, 5
        %v3610 = vsel %vm579, %v3605, %v3609
        %v3612 = vshrl.u32 %v3174, 16
        %v3614 = vrot.slane %v3612, 4
        %v3615 = vshll.u32 %v3174, 16
        %v3617 = vrot.slane %v3615, 5
        %v3618 = vor.u32 %v3614, %v3617
        %v3619 = vrot.slane %v3618, 4
        %v3621 = vshll.u32 %v3175, 16
        %v3623 = vrot.slane %v3621, 5
        %v3624 = vsel %vm579, %v3619, %v3623
        %v3625 = vshrl.u32 %v3175, 16
        %v3627 = vrot.slane %v3625, 4
        %v3628 = vor.u32 %v3627, %v3623
        %v3629 = vrot.slane %v3628, 4
        %v3631 = vshll.u32 %v3176, 16
        %v3633 = vrot.slane %v3631, 5
        %v3634 = vsel %vm579, %v3629, %v3633
        %v3636 = vshrl.u32 %v3177, 16
        %v3638 = vrot.slane %v3636, 4
        %v3639 = vshll.u32 %v3177, 16
        %v3641 = vrot.slane %v3639, 5
        %v3642 = vor.u32 %v3638, %v3641
        %v3643 = vrot.slane %v3642, 4
        %v3645 = vshll.u32 %v3178, 16
        %v3647 = vrot.slane %v3645, 5
        %v3648 = vsel %vm579, %v3643, %v3647
        %v3649 = vshrl.u32 %v3178, 16
        %v3651 = vrot.slane %v3649, 4
        %v3652 = vor.u32 %v3651, %v3647
        %v3653 = vrot.slane %v3652, 4
        %v3655 = vshll.u32 %v3179, 16
        %v3657 = vrot.slane %v3655, 5
        %v3658 = vsel %vm579, %v3653, %v3657
        %v3660 = vshrl.u32 %v3180, 16
        %v3662 = vrot.slane %v3660, 4
        %v3663 = vshll.u32 %v3180, 16
        %v3665 = vrot.slane %v3663, 5
        %v3666 = vor.u32 %v3662, %v3665
        %v3667 = vrot.slane %v3666, 4
        %v3669 = vshll.u32 %v3181, 16
        %v3671 = vrot.slane %v3669, 5
        %v3672 = vsel %vm579, %v3667, %v3671
        %v3673 = vshrl.u32 %v3181, 16
        %v3675 = vrot.slane %v3673, 4
        %v3676 = vor.u32 %v3675, %v3671
        %v3677 = vrot.slane %v3676, 4
        %v3679 = vshll.u32 %v3182, 16
        %v3681 = vrot.slane %v3679, 5
        %v3682 = vsel %vm579, %v3677, %v3681
        %v3684 = vshrl.u32 %v3183, 16
        %v3686 = vrot.slane %v3684, 4
        %v3687 = vshll.u32 %v3183, 16
        %v3689 = vrot.slane %v3687, 5
        %v3690 = vor.u32 %v3686, %v3689
        %v3691 = vrot.slane %v3690, 4
        %v3693 = vshll.u32 %v3184, 16
        %v3695 = vrot.slane %v3693, 5
        %v3696 = vsel %vm579, %v3691, %v3695
        %v3697 = vshrl.u32 %v3184, 16
        %v3699 = vrot.slane %v3697, 4
        %v3700 = vor.u32 %v3699, %v3695
        %v3701 = vrot.slane %v3700, 4
        %v3703 = vshll.u32 %v3185, 16
        %v3705 = vrot.slane %v3703, 5
        %v3706 = vsel %vm579, %v3701, %v3705
        %v3708 = vshrl.u32 %v3186, 16
        %v3710 = vrot.slane %v3708, 4
        %v3711 = vshll.u32 %v3186, 16
        %v3713 = vrot.slane %v3711, 5
        %v3714 = vor.u32 %v3710, %v3713
        %v3715 = vrot.slane %v3714, 4
        %v3717 = vshll.u32 %v3187, 16
        %v3719 = vrot.slane %v3717, 5
        %v3720 = vsel %vm579, %v3715, %v3719
        %v3721 = vshrl.u32 %v3187, 16
        %v3723 = vrot.slane %v3721, 4
        %v3724 = vor.u32 %v3723, %v3719
        %v3725 = vrot.slane %v3724, 4
        %v3727 = vshll.u32 %v3188, 16
        %v3729 = vrot.slane %v3727, 5
        %v3730 = vsel %vm579, %v3725, %v3729
        %v3732 = vshrl.u32 %v3189, 16
        %v3734 = vrot.slane %v3732, 4
        %v3735 = vshll.u32 %v3189, 16
        %v3737 = vrot.slane %v3735, 5
        %v3738 = vor.u32 %v3734, %v3737
        %v3739 = vrot.slane %v3738, 4
        %v3741 = vshll.u32 %v3190, 16
        %v3743 = vrot.slane %v3741, 5
        %v3744 = vsel %vm579, %v3739, %v3743
        %v3745 = vshrl.u32 %v3190, 16
        %v3747 = vrot.slane %v3745, 4
        %v3748 = vor.u32 %v3747, %v3743
        %v3749 = vrot.slane %v3748, 4
        %v3751 = vshll.u32 %v3191, 16
        %v3753 = vrot.slane %v3751, 5
        %v3754 = vsel %vm579, %v3749, %v3753
        %v3756 = vshrl.u32 %v3192, 16
        %v3758 = vrot.slane %v3756, 4
        %v3759 = vshll.u32 %v3192, 16
        %v3761 = vrot.slane %v3759, 5
        %v3762 = vor.u32 %v3758, %v3761
        %v3763 = vrot.slane %v3762, 4
        %v3765 = vshll.u32 %v3193, 16
        %v3767 = vrot.slane %v3765, 5
        %v3768 = vsel %vm579, %v3763, %v3767
        %v3769 = vshrl.u32 %v3193, 16
        %v3771 = vrot.slane %v3769, 4
        %v3772 = vor.u32 %v3771, %v3767
        %v3773 = vrot.slane %v3772, 4
        %v3775 = vshll.u32 %v3194, 16
        %v3777 = vrot.slane %v3775, 5
        %v3778 = vsel %vm579, %v3773, %v3777
        %v3780 = vshrl.u32 %v3195, 16
        %v3782 = vrot.slane %v3780, 4
        %v3783 = vshll.u32 %v3195, 16
        %v3785 = vrot.slane %v3783, 5
        %v3786 = vor.u32 %v3782, %v3785
        %v3787 = vrot.slane %v3786, 4
        %v3789 = vshll.u32 %v3196, 16
        %v3791 = vrot.slane %v3789, 5
        %v3792 = vsel %vm579, %v3787, %v3791
        %v3793 = vshrl.u32 %v3196, 16
        %v3795 = vrot.slane %v3793, 4
        %v3796 = vor.u32 %v3795, %v3791
        %v3797 = vrot.slane %v3796, 4
        %v3799 = vshll.u32 %v3197, 16
        %v3801 = vrot.slane %v3799, 5
        %v3802 = vsel %vm579, %v3797, %v3801
        %v3804 = vshrl.u32 %v3198, 16
        %v3806 = vrot.slane %v3804, 4
        %v3807 = vshll.u32 %v3198, 16
        %v3809 = vrot.slane %v3807, 5
        %v3810 = vor.u32 %v3806, %v3809
        %v3811 = vrot.slane %v3810, 4
        %v3813 = vshll.u32 %v3199, 16
        %v3815 = vrot.slane %v3813, 5
        %v3816 = vsel %vm579, %v3811, %v3815
        %v3817 = vshrl.u32 %v3199, 16
        %v3819 = vrot.slane %v3817, 4
        %v3820 = vor.u32 %v3819, %v3815
        %v3821 = vrot.slane %v3820, 4
        %v3823 = vshll.u32 %v3200, 16
        %v3825 = vrot.slane %v3823, 5
        %v3826 = vsel %vm579, %v3821, %v3825
        %v3828 = vshrl.u32 %v3201, 16
        %v3830 = vrot.slane %v3828, 4
        %v3831 = vshll.u32 %v3201, 16
        %v3833 = vrot.slane %v3831, 5
        %v3834 = vor.u32 %v3830, %v3833
        %v3835 = vrot.slane %v3834, 4
        %v3837 = vshll.u32 %v3202, 16
        %v3839 = vrot.slane %v3837, 5
        %v3840 = vsel %vm579, %v3835, %v3839
        %v3841 = vshrl.u32 %v3202, 16
        %v3843 = vrot.slane %v3841, 4
        %v3844 = vor.u32 %v3843, %v3839
        %v3845 = vrot.slane %v3844, 4
        %v3847 = vshll.u32 %v3203, 16
        %v3849 = vrot.slane %v3847, 5
        %v3850 = vsel %vm579, %v3845, %v3849
        %v3852 = vshrl.u32 %v3204, 16
        %v3854 = vrot.slane %v3852, 4
        %v3855 = vshll.u32 %v3204, 16
        %v3857 = vrot.slane %v3855, 5
        %v3858 = vor.u32 %v3854, %v3857
        %v3859 = vrot.slane %v3858, 4
        %v3861 = vshll.u32 %v3205, 16
        %v3863 = vrot.slane %v3861, 5
        %v3864 = vsel %vm579, %v3859, %v3863
        %v3865 = vshrl.u32 %v3205, 16
        %v3867 = vrot.slane %v3865, 4
        %v3868 = vor.u32 %v3867, %v3863
        %v3869 = vrot.slane %v3868, 4
        %v3871 = vshll.u32 %v3206, 16
        %v3873 = vrot.slane %v3871, 5
        %v3874 = vsel %vm579, %v3869, %v3873
        %v3876 = vshrl.u32 %v3207, 16
        %v3878 = vrot.slane %v3876, 4
        %v3879 = vshll.u32 %v3207, 16
        %v3881 = vrot.slane %v3879, 5
        %v3882 = vor.u32 %v3878, %v3881
        %v3883 = vrot.slane %v3882, 4
        %v3885 = vshll.u32 %v3208, 16
        %v3887 = vrot.slane %v3885, 5
        %v3888 = vsel %vm579, %v3883, %v3887
        %v3889 = vshrl.u32 %v3208, 16
        %v3891 = vrot.slane %v3889, 4
        %v3892 = vor.u32 %v3891, %v3887
        %v3893 = vrot.slane %v3892, 4
        %v3895 = vshll.u32 %v3209, 16
        %v3897 = vrot.slane %v3895, 5
        %v3898 = vsel %vm579, %v3893, %v3897
        %v3900 = vshrl.u32 %v3210, 16
        %v3902 = vrot.slane %v3900, 4
        %v3903 = vshll.u32 %v3210, 16
        %v3905 = vrot.slane %v3903, 5
        %v3906 = vor.u32 %v3902, %v3905
        %v3907 = vrot.slane %v3906, 4
        %v3909 = vshll.u32 %v3211, 16
        %v3911 = vrot.slane %v3909, 5
        %v3912 = vsel %vm579, %v3907, %v3911
        %v3913 = vshrl.u32 %v3211, 16
        %v3915 = vrot.slane %v3913, 4
        %v3916 = vor.u32 %v3915, %v3911
        %v3917 = vrot.slane %v3916, 4
        %v3919 = vshll.u32 %v3212, 16
        %v3921 = vrot.slane %v3919, 5
        %v3922 = vsel %vm579, %v3917, %v3921
        %s3923 = scalar_lea.vmem %s1, 14
        %v3924 = vld [vmem:[%s3923] sm:$0x3]
        %v3925 = vunpack.c.l.b16 %v3552
        %v3926 = vunpack.c.l.b16 %v3562
        %v3927 = vunpack.c.l.b16 %v3576
        %v3928 = vunpack.c.l.b16 %v3586
        %v3929 = vunpack.c.l.b16 %v3600
        %v3930 = vunpack.c.l.b16 %v3610
        %v3931 = vunpack.c.l.b16 %v3624
        %v3932 = vunpack.c.l.b16 %v3634
        %v3933 = vunpack.c.l.b16 %v3648
        %v3934 = vunpack.c.l.b16 %v3658
        %v3935 = vunpack.c.l.b16 %v3672
        %v3936 = vunpack.c.l.b16 %v3682
        %v3937 = vunpack.c.l.b16 %v3696
        %v3938 = vunpack.c.l.b16 %v3706
        %v3939 = vunpack.c.l.b16 %v3720
        %v3940 = vunpack.c.l.b16 %v3730
        %v3941 = vunpack.c.l.b16 %v3744
        %v3942 = vunpack.c.l.b16 %v3754
        %v3943 = vunpack.c.l.b16 %v3768
        %v3944 = vunpack.c.l.b16 %v3778
        %v3945 = vunpack.c.l.b16 %v3792
        %v3946 = vunpack.c.l.b16 %v3802
        %v3947 = vunpack.c.l.b16 %v3816
        %v3948 = vunpack.c.l.b16 %v3826
        %v3949 = vunpack.c.l.b16 %v3840
        %v3950 = vunpack.c.l.b16 %v3850
        %v3951 = vunpack.c.l.b16 %v3864
        %v3952 = vunpack.c.l.b16 %v3874
        %v3953 = vunpack.c.l.b16 %v3888
        %v3954 = vunpack.c.l.b16 %v3898
        %v3955 = vunpack.c.l.b16 %v3912
        %v3956 = vunpack.c.l.b16 %v3922
        %v3957 = vpack.c.b16 %v3926, %v3925
        %v3958 = vpack.c.b16 %v3928, %v3927
        %v3959 = vpack.c.b16 %v3930, %v3929
        %v3960 = vpack.c.b16 %v3932, %v3931
        %v3961 = vpack.c.b16 %v3934, %v3933
        %v3962 = vpack.c.b16 %v3936, %v3935
        %v3963 = vpack.c.b16 %v3938, %v3937
        %v3964 = vpack.c.b16 %v3940, %v3939
        %v3965 = vpack.c.b16 %v3942, %v3941
        %v3966 = vpack.c.b16 %v3944, %v3943
        %v3967 = vpack.c.b16 %v3946, %v3945
        %v3968 = vpack.c.b16 %v3948, %v3947
        %v3969 = vpack.c.b16 %v3950, %v3949
        %v3970 = vpack.c.b16 %v3952, %v3951
        %v3971 = vpack.c.b16 %v3954, %v3953
        %v3972 = vpack.c.b16 %v3956, %v3955
        %v3974 = vsel %vm331, %v3957, 0
        %v3977 = vsel %vm331, %v3958, 0
        %v3980 = vsel %vm331, %v3959, 0
        %v3983 = vsel %vm331, %v3960, 0
        %v3986 = vsel %vm331, %v3961, 0
        %v3989 = vsel %vm331, %v3962, 0
        %v3992 = vsel %vm331, %v3963, 0
        %v3995 = vsel %vm331, %v3964, 0
        %v3998 = vsel %vm331, %v3965, 0
        %v4001 = vsel %vm331, %v3966, 0
        %v4004 = vsel %vm331, %v3967, 0
        %v4007 = vsel %vm331, %v3968, 0
        %v4010 = vsel %vm331, %v3969, 0
        %v4013 = vsel %vm331, %v3970, 0
        %v4016 = vsel %vm331, %v3971, 0
        %v4019 = vsel %vm331, %v3972, 0
        %v4022 = vsel %vm380, %v3924, 0
        %4024 = vmatprep.subr.bf16.mxu0 0
        %4025 = vmatpush1.bf16.msra.mxu0 0
        %4026 = vmatprep.subr.bf16.mxu0 0
        %4027 = vmatpush1.bf16.msra.mxu0 0
        %4028 = vmatprep.subr.bf16.mxu0 0
        %4029 = vmatpush1.bf16.msra.mxu0 0
        %4030 = vmatprep.subr.bf16.mxu0 0
        %4031 = vmatpush1.bf16.msra.mxu0 0
        %4032 = vmatprep.subr.bf16.mxu0 0
        %4033 = vmatpush1.bf16.msra.mxu0 0
        %4034 = vmatprep.subr.bf16.mxu0 0
        %4035 = vmatpush1.bf16.msra.mxu0 0
        %4036 = vmatprep.subr.bf16.mxu0 0
        %4037 = vmatpush1.bf16.msra.mxu0 0
        %4038 = vmatprep.subr.bf16.mxu0 0
        %4039 = vmatpush1.bf16.msra.mxu0 %v4022
        %4040 = vmatprep.subr.bf16.mxu0 0
        %4041 = vmatpush2.bf16.msra.mxu0 0
        %4042 = vmatprep.subr.bf16.mxu0 0
        %4043 = vmatpush2.bf16.msra.mxu0 0
        %4044 = vmatprep.subr.bf16.mxu0 0
        %4045 = vmatpush2.bf16.msra.mxu0 0
        %4046 = vmatprep.subr.bf16.mxu0 0
        %4047 = vmatpush2.bf16.msra.mxu0 0
        %4048 = vmatprep.subr.bf16.mxu0 0
        %4049 = vmatpush2.bf16.msra.mxu0 0
        %4050 = vmatprep.subr.bf16.mxu0 0
        %4051 = vmatpush2.bf16.msra.mxu0 0
        %4052 = vmatprep.subr.bf16.mxu0 0
        %4053 = vmatpush2.bf16.msra.mxu0 0
        %4054 = vmatprep.subr.bf16.mxu0 0
        %4055 = vmatpush2.bf16.msra.mxu0 0
        %4056 = vmatprep.mubr.bf16.mxu0 0
        %4057 = vmatmul.mubr.bf16.gmra.mxu0 %v3974
        %v4058 = vpop.f32.mrf.mxu0
        %v4059 = vadd.f32 0.0, %v4058
        %v4060 = vpop.f32.mrf.mxu0
        %v4061 = vpop.f32.mrf.mxu0
        %v4062 = vadd.f32 0.0, %v4061
        %v4063 = vpop.f32.mrf.mxu0
        %4064 = vmatprep.mubr.bf16.mxu0 0
        %4065 = vmatmul.mubr.bf16.gmra.mxu0 %v3977
        %v4066 = vpop.f32.mrf.mxu0
        %v4067 = vadd.f32 0.0, %v4066
        %v4068 = vpop.f32.mrf.mxu0
        %v4069 = vpop.f32.mrf.mxu0
        %v4070 = vadd.f32 0.0, %v4069
        %v4071 = vpop.f32.mrf.mxu0
        %4072 = vmatprep.mubr.bf16.mxu0 0
        %4073 = vmatmul.mubr.bf16.gmra.mxu0 %v3980
        %v4074 = vpop.f32.mrf.mxu0
        %v4075 = vadd.f32 0.0, %v4074
        %v4076 = vpop.f32.mrf.mxu0
        %v4077 = vpop.f32.mrf.mxu0
        %v4078 = vadd.f32 0.0, %v4077
        %v4079 = vpop.f32.mrf.mxu0
        %4080 = vmatprep.mubr.bf16.mxu0 0
        %4081 = vmatmul.mubr.bf16.gmra.mxu0 %v3983
        %v4082 = vpop.f32.mrf.mxu0
        %v4083 = vadd.f32 0.0, %v4082
        %v4084 = vpop.f32.mrf.mxu0
        %v4085 = vpop.f32.mrf.mxu0
        %v4086 = vadd.f32 0.0, %v4085
        %v4087 = vpop.f32.mrf.mxu0
        %4088 = vmatprep.mubr.bf16.mxu0 0
        %4089 = vmatmul.mubr.bf16.gmra.mxu0 %v3986
        %v4090 = vpop.f32.mrf.mxu0
        %v4091 = vadd.f32 0.0, %v4090
        %v4092 = vpop.f32.mrf.mxu0
        %v4093 = vpop.f32.mrf.mxu0
        %v4094 = vadd.f32 0.0, %v4093
        %v4095 = vpop.f32.mrf.mxu0
        %4096 = vmatprep.mubr.bf16.mxu0 0
        %4097 = vmatmul.mubr.bf16.gmra.mxu0 %v3989
        %v4098 = vpop.f32.mrf.mxu0
        %v4099 = vadd.f32 0.0, %v4098
        %v4100 = vpop.f32.mrf.mxu0
        %v4101 = vpop.f32.mrf.mxu0
        %v4102 = vadd.f32 0.0, %v4101
        %v4103 = vpop.f32.mrf.mxu0
        %4104 = vmatprep.mubr.bf16.mxu0 0
        %4105 = vmatmul.mubr.bf16.gmra.mxu0 %v3992
        %v4106 = vpop.f32.mrf.mxu0
        %v4107 = vadd.f32 0.0, %v4106
        %v4108 = vpop.f32.mrf.mxu0
        %v4109 = vpop.f32.mrf.mxu0
        %v4110 = vadd.f32 0.0, %v4109
        %v4111 = vpop.f32.mrf.mxu0
        %4112 = vmatprep.mubr.bf16.mxu0 0
        %4113 = vmatmul.mubr.bf16.gmra.mxu0 %v3995
        %v4114 = vpop.f32.mrf.mxu0
        %v4115 = vadd.f32 0.0, %v4114
        %v4116 = vpop.f32.mrf.mxu0
        %v4117 = vpop.f32.mrf.mxu0
        %v4118 = vadd.f32 0.0, %v4117
        %v4119 = vpop.f32.mrf.mxu0
        %4120 = vmatprep.mubr.bf16.mxu0 0
        %4121 = vmatmul.mubr.bf16.gmra.mxu0 %v3998
        %v4122 = vpop.f32.mrf.mxu0
        %v4123 = vadd.f32 0.0, %v4122
        %v4124 = vpop.f32.mrf.mxu0
        %v4125 = vpop.f32.mrf.mxu0
        %v4126 = vadd.f32 0.0, %v4125
        %v4127 = vpop.f32.mrf.mxu0
        %4128 = vmatprep.mubr.bf16.mxu0 0
        %4129 = vmatmul.mubr.bf16.gmra.mxu0 %v4001
        %v4130 = vpop.f32.mrf.mxu0
        %v4131 = vadd.f32 0.0, %v4130
        %v4132 = vpop.f32.mrf.mxu0
        %v4133 = vpop.f32.mrf.mxu0
        %v4134 = vadd.f32 0.0, %v4133
        %v4135 = vpop.f32.mrf.mxu0
        %4136 = vmatprep.mubr.bf16.mxu0 0
        %4137 = vmatmul.mubr.bf16.gmra.mxu0 %v4004
        %v4138 = vpop.f32.mrf.mxu0
        %v4139 = vadd.f32 0.0, %v4138
        %v4140 = vpop.f32.mrf.mxu0
        %v4141 = vpop.f32.mrf.mxu0
        %v4142 = vadd.f32 0.0, %v4141
        %v4143 = vpop.f32.mrf.mxu0
        %4144 = vmatprep.mubr.bf16.mxu0 0
        %4145 = vmatmul.mubr.bf16.gmra.mxu0 %v4007
        %v4146 = vpop.f32.mrf.mxu0
        %v4147 = vadd.f32 0.0, %v4146
        %v4148 = vpop.f32.mrf.mxu0
        %v4149 = vpop.f32.mrf.mxu0
        %v4150 = vadd.f32 0.0, %v4149
        %v4151 = vpop.f32.mrf.mxu0
        %4152 = vmatprep.mubr.bf16.mxu0 0
        %4153 = vmatmul.mubr.bf16.gmra.mxu0 %v4010
        %v4154 = vpop.f32.mrf.mxu0
        %v4155 = vadd.f32 0.0, %v4154
        %v4156 = vpop.f32.mrf.mxu0
        %v4157 = vpop.f32.mrf.mxu0
        %v4158 = vadd.f32 0.0, %v4157
        %v4159 = vpop.f32.mrf.mxu0
        %4160 = vmatprep.mubr.bf16.mxu0 0
        %4161 = vmatmul.mubr.bf16.gmra.mxu0 %v4013
        %v4162 = vpop.f32.mrf.mxu0
        %v4163 = vadd.f32 0.0, %v4162
        %v4164 = vpop.f32.mrf.mxu0
        %v4165 = vpop.f32.mrf.mxu0
        %v4166 = vadd.f32 0.0, %v4165
        %v4167 = vpop.f32.mrf.mxu0
        %4168 = vmatprep.mubr.bf16.mxu0 0
        %4169 = vmatmul.mubr.bf16.gmra.mxu0 %v4016
        %v4170 = vpop.f32.mrf.mxu0
        %v4171 = vadd.f32 0.0, %v4170
        %v4172 = vpop.f32.mrf.mxu0
        %v4173 = vpop.f32.mrf.mxu0
        %v4174 = vadd.f32 0.0, %v4173
        %v4175 = vpop.f32.mrf.mxu0
        %4176 = vmatprep.mubr.bf16.mxu0 0
        %4177 = vmatmul.mubr.bf16.gmra.mxu0 %v4019
        %v4178 = vpop.f32.mrf.mxu0
        %v4179 = vadd.f32 0.0, %v4178
        %v4180 = vpop.f32.mrf.mxu0
        %v4181 = vpop.f32.mrf.mxu0
        %v4182 = vadd.f32 0.0, %v4181
        %v4183 = vpop.f32.mrf.mxu0
        %4184 = vdwg.mxu0
        %v4185 = vadd.f32 %v3507, %v4059
        %v4186 = vadd.f32 %v3508, %v4062
        %v4187 = vadd.f32 %v3509, %v4067
        %v4188 = vadd.f32 %v3510, %v4070
        %v4189 = vadd.f32 %v3511, %v4075
        %v4190 = vadd.f32 %v3512, %v4078
        %v4191 = vadd.f32 %v3513, %v4083
        %v4192 = vadd.f32 %v3514, %v4086
        %v4193 = vadd.f32 %v3515, %v4091
        %v4194 = vadd.f32 %v3516, %v4094
        %v4195 = vadd.f32 %v3517, %v4099
        %v4196 = vadd.f32 %v3518, %v4102
        %v4197 = vadd.f32 %v3519, %v4107
        %v4198 = vadd.f32 %v3520, %v4110
        %v4199 = vadd.f32 %v3521, %v4115
        %v4200 = vadd.f32 %v3522, %v4118
        %v4201 = vadd.f32 %v3523, %v4123
        %v4202 = vadd.f32 %v3524, %v4126
        %v4203 = vadd.f32 %v3525, %v4131
        %v4204 = vadd.f32 %v3526, %v4134
        %v4205 = vadd.f32 %v3527, %v4139
        %v4206 = vadd.f32 %v3528, %v4142
        %v4207 = vadd.f32 %v3529, %v4147
        %v4208 = vadd.f32 %v3530, %v4150
        %v4209 = vadd.f32 %v3531, %v4155
        %v4210 = vadd.f32 %v3532, %v4158
        %v4211 = vadd.f32 %v3533, %v4163
        %v4212 = vadd.f32 %v3534, %v4166
        %v4213 = vadd.f32 %v3535, %v4171
        %v4214 = vadd.f32 %v3536, %v4174
        %v4215 = vadd.f32 %v3537, %v4179
        %v4216 = vadd.f32 %v3538, %v4182
        %v4233 = vrot.slane %v3165, 5
        %v4234 = vrot.slane %v4233, 4
        %v4235 = vrot.slane %v3166, 5
        %v4236 = vsel %vm1276, %v4234, %v4235
        %v4237 = vrot.slane %v4235, 4
        %v4238 = vrot.slane %v3167, 5
        %v4239 = vsel %vm1276, %v4237, %v4238
        %v4240 = vrot.slane %v3168, 5
        %v4241 = vrot.slane %v4240, 4
        %v4242 = vrot.slane %v3169, 5
        %v4243 = vsel %vm1276, %v4241, %v4242
        %v4244 = vrot.slane %v4242, 4
        %v4245 = vrot.slane %v3170, 5
        %v4246 = vsel %vm1276, %v4244, %v4245
        %v4247 = vrot.slane %v3171, 5
        %v4248 = vrot.slane %v4247, 4
        %v4249 = vrot.slane %v3172, 5
        %v4250 = vsel %vm1276, %v4248, %v4249
        %v4251 = vrot.slane %v4249, 4
        %v4252 = vrot.slane %v3173, 5
        %v4253 = vsel %vm1276, %v4251, %v4252
        %v4254 = vrot.slane %v3174, 5
        %v4255 = vrot.slane %v4254, 4
        %v4256 = vrot.slane %v3175, 5
        %v4257 = vsel %vm1276, %v4255, %v4256
        %v4258 = vrot.slane %v4256, 4
        %v4259 = vrot.slane %v3176, 5
        %v4260 = vsel %vm1276, %v4258, %v4259
        %v4261 = vrot.slane %v3177, 5
        %v4262 = vrot.slane %v4261, 4
        %v4263 = vrot.slane %v3178, 5
        %v4264 = vsel %vm1276, %v4262, %v4263
        %v4265 = vrot.slane %v4263, 4
        %v4266 = vrot.slane %v3179, 5
        %v4267 = vsel %vm1276, %v4265, %v4266
        %v4268 = vrot.slane %v3180, 5
        %v4269 = vrot.slane %v4268, 4
        %v4270 = vrot.slane %v3181, 5
        %v4271 = vsel %vm1276, %v4269, %v4270
        %v4272 = vrot.slane %v4270, 4
        %v4273 = vrot.slane %v3182, 5
        %v4274 = vsel %vm1276, %v4272, %v4273
        %v4275 = vrot.slane %v3183, 5
        %v4276 = vrot.slane %v4275, 4
        %v4277 = vrot.slane %v3184, 5
        %v4278 = vsel %vm1276, %v4276, %v4277
        %v4279 = vrot.slane %v4277, 4
        %v4280 = vrot.slane %v3185, 5
        %v4281 = vsel %vm1276, %v4279, %v4280
        %v4282 = vrot.slane %v3186, 5
        %v4283 = vrot.slane %v4282, 4
        %v4284 = vrot.slane %v3187, 5
        %v4285 = vsel %vm1276, %v4283, %v4284
        %v4286 = vrot.slane %v4284, 4
        %v4287 = vrot.slane %v3188, 5
        %v4288 = vsel %vm1276, %v4286, %v4287
        %v4289 = vrot.slane %v3189, 5
        %v4290 = vrot.slane %v4289, 4
        %v4291 = vrot.slane %v3190, 5
        %v4292 = vsel %vm1276, %v4290, %v4291
        %v4293 = vrot.slane %v4291, 4
        %v4294 = vrot.slane %v3191, 5
        %v4295 = vsel %vm1276, %v4293, %v4294
        %v4296 = vrot.slane %v3192, 5
        %v4297 = vrot.slane %v4296, 4
        %v4298 = vrot.slane %v3193, 5
        %v4299 = vsel %vm1276, %v4297, %v4298
        %v4300 = vrot.slane %v4298, 4
        %v4301 = vrot.slane %v3194, 5
        %v4302 = vsel %vm1276, %v4300, %v4301
        %v4303 = vrot.slane %v3195, 5
        %v4304 = vrot.slane %v4303, 4
        %v4305 = vrot.slane %v3196, 5
        %v4306 = vsel %vm1276, %v4304, %v4305
        %v4307 = vrot.slane %v4305, 4
        %v4308 = vrot.slane %v3197, 5
        %v4309 = vsel %vm1276, %v4307, %v4308
        %v4310 = vrot.slane %v3198, 5
        %v4311 = vrot.slane %v4310, 4
        %v4312 = vrot.slane %v3199, 5
        %v4313 = vsel %vm1276, %v4311, %v4312
        %v4314 = vrot.slane %v4312, 4
        %v4315 = vrot.slane %v3200, 5
        %v4316 = vsel %vm1276, %v4314, %v4315
        %v4317 = vrot.slane %v3201, 5
        %v4318 = vrot.slane %v4317, 4
        %v4319 = vrot.slane %v3202, 5
        %v4320 = vsel %vm1276, %v4318, %v4319
        %v4321 = vrot.slane %v4319, 4
        %v4322 = vrot.slane %v3203, 5
        %v4323 = vsel %vm1276, %v4321, %v4322
        %v4324 = vrot.slane %v3204, 5
        %v4325 = vrot.slane %v4324, 4
        %v4326 = vrot.slane %v3205, 5
        %v4327 = vsel %vm1276, %v4325, %v4326
        %v4328 = vrot.slane %v4326, 4
        %v4329 = vrot.slane %v3206, 5
        %v4330 = vsel %vm1276, %v4328, %v4329
        %v4331 = vrot.slane %v3207, 5
        %v4332 = vrot.slane %v4331, 4
        %v4333 = vrot.slane %v3208, 5
        %v4334 = vsel %vm1276, %v4332, %v4333
        %v4335 = vrot.slane %v4333, 4
        %v4336 = vrot.slane %v3209, 5
        %v4337 = vsel %vm1276, %v4335, %v4336
        %v4338 = vrot.slane %v3210, 5
        %v4339 = vrot.slane %v4338, 4
        %v4340 = vrot.slane %v3211, 5
        %v4341 = vsel %vm1276, %v4339, %v4340
        %v4342 = vrot.slane %v4340, 4
        %v4343 = vrot.slane %v3212, 5
        %v4344 = vsel %vm1276, %v4342, %v4343
        %s4345 = scalar_lea.vmem %s1, 16
        %v4346 = vld [vmem:[%s4345] sm:$0x3]
        %v4347 = vunpack.c.l.b16 %v4236
        %v4348 = vunpack.c.l.b16 %v4239
        %v4349 = vunpack.c.l.b16 %v4243
        %v4350 = vunpack.c.l.b16 %v4246
        %v4351 = vunpack.c.l.b16 %v4250
        %v4352 = vunpack.c.l.b16 %v4253
        %v4353 = vunpack.c.l.b16 %v4257
        %v4354 = vunpack.c.l.b16 %v4260
        %v4355 = vunpack.c.l.b16 %v4264
        %v4356 = vunpack.c.l.b16 %v4267
        %v4357 = vunpack.c.l.b16 %v4271
        %v4358 = vunpack.c.l.b16 %v4274
        %v4359 = vunpack.c.l.b16 %v4278
        %v4360 = vunpack.c.l.b16 %v4281
        %v4361 = vunpack.c.l.b16 %v4285
        %v4362 = vunpack.c.l.b16 %v4288
        %v4363 = vunpack.c.l.b16 %v4292
        %v4364 = vunpack.c.l.b16 %v4295
        %v4365 = vunpack.c.l.b16 %v4299
        %v4366 = vunpack.c.l.b16 %v4302
        %v4367 = vunpack.c.l.b16 %v4306
        %v4368 = vunpack.c.l.b16 %v4309
        %v4369 = vunpack.c.l.b16 %v4313
        %v4370 = vunpack.c.l.b16 %v4316
        %v4371 = vunpack.c.l.b16 %v4320
        %v4372 = vunpack.c.l.b16 %v4323
        %v4373 = vunpack.c.l.b16 %v4327
        %v4374 = vunpack.c.l.b16 %v4330
        %v4375 = vunpack.c.l.b16 %v4334
        %v4376 = vunpack.c.l.b16 %v4337
        %v4377 = vunpack.c.l.b16 %v4341
        %v4378 = vunpack.c.l.b16 %v4344
        %v4379 = vpack.c.b16 %v4348, %v4347
        %v4380 = vpack.c.b16 %v4350, %v4349
        %v4381 = vpack.c.b16 %v4352, %v4351
        %v4382 = vpack.c.b16 %v4354, %v4353
        %v4383 = vpack.c.b16 %v4356, %v4355
        %v4384 = vpack.c.b16 %v4358, %v4357
        %v4385 = vpack.c.b16 %v4360, %v4359
        %v4386 = vpack.c.b16 %v4362, %v4361
        %v4387 = vpack.c.b16 %v4364, %v4363
        %v4388 = vpack.c.b16 %v4366, %v4365
        %v4389 = vpack.c.b16 %v4368, %v4367
        %v4390 = vpack.c.b16 %v4370, %v4369
        %v4391 = vpack.c.b16 %v4372, %v4371
        %v4392 = vpack.c.b16 %v4374, %v4373
        %v4393 = vpack.c.b16 %v4376, %v4375
        %v4394 = vpack.c.b16 %v4378, %v4377
        %v4396 = vsel %vm331, %v4379, 0
        %v4399 = vsel %vm331, %v4380, 0
        %v4402 = vsel %vm331, %v4381, 0
        %v4405 = vsel %vm331, %v4382, 0
        %v4408 = vsel %vm331, %v4383, 0
        %v4411 = vsel %vm331, %v4384, 0
        %v4414 = vsel %vm331, %v4385, 0
        %v4417 = vsel %vm331, %v4386, 0
        %v4420 = vsel %vm331, %v4387, 0
        %v4423 = vsel %vm331, %v4388, 0
        %v4426 = vsel %vm331, %v4389, 0
        %v4429 = vsel %vm331, %v4390, 0
        %v4432 = vsel %vm331, %v4391, 0
        %v4435 = vsel %vm331, %v4392, 0
        %v4438 = vsel %vm331, %v4393, 0
        %v4441 = vsel %vm331, %v4394, 0
        %v4444 = vsel %vm380, %v4346, 0
        %4446 = vmatprep.subr.bf16.mxu0 0
        %4447 = vmatpush1.bf16.msra.mxu0 0
        %4448 = vmatprep.subr.bf16.mxu0 0
        %4449 = vmatpush1.bf16.msra.mxu0 0
        %4450 = vmatprep.subr.bf16.mxu0 0
        %4451 = vmatpush1.bf16.msra.mxu0 0
        %4452 = vmatprep.subr.bf16.mxu0 0
        %4453 = vmatpush1.bf16.msra.mxu0 0
        %4454 = vmatprep.subr.bf16.mxu0 0
        %4455 = vmatpush1.bf16.msra.mxu0 0
        %4456 = vmatprep.subr.bf16.mxu0 0
        %4457 = vmatpush1.bf16.msra.mxu0 0
        %4458 = vmatprep.subr.bf16.mxu0 0
        %4459 = vmatpush1.bf16.msra.mxu0 0
        %4460 = vmatprep.subr.bf16.mxu0 0
        %4461 = vmatpush1.bf16.msra.mxu0 %v4444
        %4462 = vmatprep.subr.bf16.mxu0 0
        %4463 = vmatpush2.bf16.msra.mxu0 0
        %4464 = vmatprep.subr.bf16.mxu0 0
        %4465 = vmatpush2.bf16.msra.mxu0 0
        %4466 = vmatprep.subr.bf16.mxu0 0
        %4467 = vmatpush2.bf16.msra.mxu0 0
        %4468 = vmatprep.subr.bf16.mxu0 0
        %4469 = vmatpush2.bf16.msra.mxu0 0
        %4470 = vmatprep.subr.bf16.mxu0 0
        %4471 = vmatpush2.bf16.msra.mxu0 0
        %4472 = vmatprep.subr.bf16.mxu0 0
        %4473 = vmatpush2.bf16.msra.mxu0 0
        %4474 = vmatprep.subr.bf16.mxu0 0
        %4475 = vmatpush2.bf16.msra.mxu0 0
        %4476 = vmatprep.subr.bf16.mxu0 0
        %4477 = vmatpush2.bf16.msra.mxu0 0
        %4478 = vmatprep.mubr.bf16.mxu0 0
        %4479 = vmatmul.mubr.bf16.gmra.mxu0 %v4396
        %v4480 = vpop.f32.mrf.mxu0
        %v4481 = vadd.f32 0.0, %v4480
        %v4482 = vpop.f32.mrf.mxu0
        %v4483 = vpop.f32.mrf.mxu0
        %v4484 = vadd.f32 0.0, %v4483
        %v4485 = vpop.f32.mrf.mxu0
        %4486 = vmatprep.mubr.bf16.mxu0 0
        %4487 = vmatmul.mubr.bf16.gmra.mxu0 %v4399
        %v4488 = vpop.f32.mrf.mxu0
        %v4489 = vadd.f32 0.0, %v4488
        %v4490 = vpop.f32.mrf.mxu0
        %v4491 = vpop.f32.mrf.mxu0
        %v4492 = vadd.f32 0.0, %v4491
        %v4493 = vpop.f32.mrf.mxu0
        %4494 = vmatprep.mubr.bf16.mxu0 0
        %4495 = vmatmul.mubr.bf16.gmra.mxu0 %v4402
        %v4496 = vpop.f32.mrf.mxu0
        %v4497 = vadd.f32 0.0, %v4496
        %v4498 = vpop.f32.mrf.mxu0
        %v4499 = vpop.f32.mrf.mxu0
        %v4500 = vadd.f32 0.0, %v4499
        %v4501 = vpop.f32.mrf.mxu0
        %4502 = vmatprep.mubr.bf16.mxu0 0
        %4503 = vmatmul.mubr.bf16.gmra.mxu0 %v4405
        %v4504 = vpop.f32.mrf.mxu0
        %v4505 = vadd.f32 0.0, %v4504
        %v4506 = vpop.f32.mrf.mxu0
        %v4507 = vpop.f32.mrf.mxu0
        %v4508 = vadd.f32 0.0, %v4507
        %v4509 = vpop.f32.mrf.mxu0
        %4510 = vmatprep.mubr.bf16.mxu0 0
        %4511 = vmatmul.mubr.bf16.gmra.mxu0 %v4408
        %v4512 = vpop.f32.mrf.mxu0
        %v4513 = vadd.f32 0.0, %v4512
        %v4514 = vpop.f32.mrf.mxu0
        %v4515 = vpop.f32.mrf.mxu0
        %v4516 = vadd.f32 0.0, %v4515
        %v4517 = vpop.f32.mrf.mxu0
        %4518 = vmatprep.mubr.bf16.mxu0 0
        %4519 = vmatmul.mubr.bf16.gmra.mxu0 %v4411
        %v4520 = vpop.f32.mrf.mxu0
        %v4521 = vadd.f32 0.0, %v4520
        %v4522 = vpop.f32.mrf.mxu0
        %v4523 = vpop.f32.mrf.mxu0
        %v4524 = vadd.f32 0.0, %v4523
        %v4525 = vpop.f32.mrf.mxu0
        %4526 = vmatprep.mubr.bf16.mxu0 0
        %4527 = vmatmul.mubr.bf16.gmra.mxu0 %v4414
        %v4528 = vpop.f32.mrf.mxu0
        %v4529 = vadd.f32 0.0, %v4528
        %v4530 = vpop.f32.mrf.mxu0
        %v4531 = vpop.f32.mrf.mxu0
        %v4532 = vadd.f32 0.0, %v4531
        %v4533 = vpop.f32.mrf.mxu0
        %4534 = vmatprep.mubr.bf16.mxu0 0
        %4535 = vmatmul.mubr.bf16.gmra.mxu0 %v4417
        %v4536 = vpop.f32.mrf.mxu0
        %v4537 = vadd.f32 0.0, %v4536
        %v4538 = vpop.f32.mrf.mxu0
        %v4539 = vpop.f32.mrf.mxu0
        %v4540 = vadd.f32 0.0, %v4539
        %v4541 = vpop.f32.mrf.mxu0
        %4542 = vmatprep.mubr.bf16.mxu0 0
        %4543 = vmatmul.mubr.bf16.gmra.mxu0 %v4420
        %v4544 = vpop.f32.mrf.mxu0
        %v4545 = vadd.f32 0.0, %v4544
        %v4546 = vpop.f32.mrf.mxu0
        %v4547 = vpop.f32.mrf.mxu0
        %v4548 = vadd.f32 0.0, %v4547
        %v4549 = vpop.f32.mrf.mxu0
        %4550 = vmatprep.mubr.bf16.mxu0 0
        %4551 = vmatmul.mubr.bf16.gmra.mxu0 %v4423
        %v4552 = vpop.f32.mrf.mxu0
        %v4553 = vadd.f32 0.0, %v4552
        %v4554 = vpop.f32.mrf.mxu0
        %v4555 = vpop.f32.mrf.mxu0
        %v4556 = vadd.f32 0.0, %v4555
        %v4557 = vpop.f32.mrf.mxu0
        %4558 = vmatprep.mubr.bf16.mxu0 0
        %4559 = vmatmul.mubr.bf16.gmra.mxu0 %v4426
        %v4560 = vpop.f32.mrf.mxu0
        %v4561 = vadd.f32 0.0, %v4560
        %v4562 = vpop.f32.mrf.mxu0
        %v4563 = vpop.f32.mrf.mxu0
        %v4564 = vadd.f32 0.0, %v4563
        %v4565 = vpop.f32.mrf.mxu0
        %4566 = vmatprep.mubr.bf16.mxu0 0
        %4567 = vmatmul.mubr.bf16.gmra.mxu0 %v4429
        %v4568 = vpop.f32.mrf.mxu0
        %v4569 = vadd.f32 0.0, %v4568
        %v4570 = vpop.f32.mrf.mxu0
        %v4571 = vpop.f32.mrf.mxu0
        %v4572 = vadd.f32 0.0, %v4571
        %v4573 = vpop.f32.mrf.mxu0
        %4574 = vmatprep.mubr.bf16.mxu0 0
        %4575 = vmatmul.mubr.bf16.gmra.mxu0 %v4432
        %v4576 = vpop.f32.mrf.mxu0
        %v4577 = vadd.f32 0.0, %v4576
        %v4578 = vpop.f32.mrf.mxu0
        %v4579 = vpop.f32.mrf.mxu0
        %v4580 = vadd.f32 0.0, %v4579
        %v4581 = vpop.f32.mrf.mxu0
        %4582 = vmatprep.mubr.bf16.mxu0 0
        %4583 = vmatmul.mubr.bf16.gmra.mxu0 %v4435
        %v4584 = vpop.f32.mrf.mxu0
        %v4585 = vadd.f32 0.0, %v4584
        %v4586 = vpop.f32.mrf.mxu0
        %v4587 = vpop.f32.mrf.mxu0
        %v4588 = vadd.f32 0.0, %v4587
        %v4589 = vpop.f32.mrf.mxu0
        %4590 = vmatprep.mubr.bf16.mxu0 0
        %4591 = vmatmul.mubr.bf16.gmra.mxu0 %v4438
        %v4592 = vpop.f32.mrf.mxu0
        %v4593 = vadd.f32 0.0, %v4592
        %v4594 = vpop.f32.mrf.mxu0
        %v4595 = vpop.f32.mrf.mxu0
        %v4596 = vadd.f32 0.0, %v4595
        %v4597 = vpop.f32.mrf.mxu0
        %4598 = vmatprep.mubr.bf16.mxu0 0
        %4599 = vmatmul.mubr.bf16.gmra.mxu0 %v4441
        %v4600 = vpop.f32.mrf.mxu0
        %v4601 = vadd.f32 0.0, %v4600
        %v4602 = vpop.f32.mrf.mxu0
        %v4603 = vpop.f32.mrf.mxu0
        %v4604 = vadd.f32 0.0, %v4603
        %v4605 = vpop.f32.mrf.mxu0
        %4606 = vdwg.mxu0
        %v4607 = vadd.f32 %v4185, %v4481
        %v4608 = vadd.f32 %v4186, %v4484
        %v4609 = vadd.f32 %v4187, %v4489
        %v4610 = vadd.f32 %v4188, %v4492
        %v4611 = vadd.f32 %v4189, %v4497
        %v4612 = vadd.f32 %v4190, %v4500
        %v4613 = vadd.f32 %v4191, %v4505
        %v4614 = vadd.f32 %v4192, %v4508
        %v4615 = vadd.f32 %v4193, %v4513
        %v4616 = vadd.f32 %v4194, %v4516
        %v4617 = vadd.f32 %v4195, %v4521
        %v4618 = vadd.f32 %v4196, %v4524
        %v4619 = vadd.f32 %v4197, %v4529
        %v4620 = vadd.f32 %v4198, %v4532
        %v4621 = vadd.f32 %v4199, %v4537
        %v4622 = vadd.f32 %v4200, %v4540
        %v4623 = vadd.f32 %v4201, %v4545
        %v4624 = vadd.f32 %v4202, %v4548
        %v4625 = vadd.f32 %v4203, %v4553
        %v4626 = vadd.f32 %v4204, %v4556
        %v4627 = vadd.f32 %v4205, %v4561
        %v4628 = vadd.f32 %v4206, %v4564
        %v4629 = vadd.f32 %v4207, %v4569
        %v4630 = vadd.f32 %v4208, %v4572
        %v4631 = vadd.f32 %v4209, %v4577
        %v4632 = vadd.f32 %v4210, %v4580
        %v4633 = vadd.f32 %v4211, %v4585
        %v4634 = vadd.f32 %v4212, %v4588
        %v4635 = vadd.f32 %v4213, %v4593
        %v4636 = vadd.f32 %v4214, %v4596
        %v4637 = vadd.f32 %v4215, %v4601
        %v4638 = vadd.f32 %v4216, %v4604
        %4639 = vst [vmem:[%s180] sm:$0xff] %v4607
        %4640 = vst [vmem:[%s180 + $0x8] sm:$0xff] %v4608
        %4641 = vst [vmem:[%s180 + $0x10] sm:$0xff] %v4609
        %4642 = vst [vmem:[%s180 + $0x18] sm:$0xff] %v4610
        %4643 = vst [vmem:[%s180 + $0x20] sm:$0xff] %v4611
        %4644 = vst [vmem:[%s180 + $0x28] sm:$0xff] %v4612
        %4645 = vst [vmem:[%s180 + $0x30] sm:$0xff] %v4613
        %4646 = vst [vmem:[%s180 + $0x38] sm:$0xff] %v4614
        %4647 = vst [vmem:[%s180 + $0x40] sm:$0xff] %v4615
        %4648 = vst [vmem:[%s180 + $0x48] sm:$0xff] %v4616
        %4649 = vst [vmem:[%s180 + $0x50] sm:$0xff] %v4617
        %4650 = vst [vmem:[%s180 + $0x58] sm:$0xff] %v4618
        %4651 = vst [vmem:[%s180 + $0x60] sm:$0xff] %v4619
        %4652 = vst [vmem:[%s180 + $0x68] sm:$0xff] %v4620
        %4653 = vst [vmem:[%s180 + $0x70] sm:$0xff] %v4621
        %4654 = vst [vmem:[%s180 + $0x78] sm:$0xff] %v4622
        %4655 = vst [vmem:[%s180 + $0x80] sm:$0xff] %v4623
        %4656 = vst [vmem:[%s180 + $0x88] sm:$0xff] %v4624
        %4657 = vst [vmem:[%s180 + $0x90] sm:$0xff] %v4625
        %4658 = vst [vmem:[%s180 + $0x98] sm:$0xff] %v4626
        %4659 = vst [vmem:[%s180 + $0xa0] sm:$0xff] %v4627
        %4660 = vst [vmem:[%s180 + $0xa8] sm:$0xff] %v4628
        %4661 = vst [vmem:[%s180 + $0xb0] sm:$0xff] %v4629
        %4662 = vst [vmem:[%s180 + $0xb8] sm:$0xff] %v4630
        %4663 = vst [vmem:[%s180 + $0xc0] sm:$0xff] %v4631
        %4664 = vst [vmem:[%s180 + $0xc8] sm:$0xff] %v4632
        %4665 = vst [vmem:[%s180 + $0xd0] sm:$0xff] %v4633
        %4666 = vst [vmem:[%s180 + $0xd8] sm:$0xff] %v4634
        %4667 = vst [vmem:[%s180 + $0xe0] sm:$0xff] %v4635
        %4668 = vst [vmem:[%s180 + $0xe8] sm:$0xff] %v4636
        %4669 = vst [vmem:[%s180 + $0xf0] sm:$0xff] %v4637
        %4670 = vst [vmem:[%s180 + $0xf8] sm:$0xff] %v4638
        %s4671 = sand.u32 %s107, 1
        %s4672 = scalar_lea.sflag [#allocation3], %s4671
        %s4673 = sand.u32 %s107, 1
        %s4674 = smul.addr %s4673, 256
        %s4675 = scalar_lea.vmem [#allocation2], %s4674
        // Predicated region
        $region33: #{tpu_custom_call.1} parent=31 // pred_check
          %p4676 = pneg %p117
        $region34: #{tpu_custom_call.1} parent=31 // pred_check_branch
          %4678 = sbr.rel (%p4676) target = $region36
        $region35: #{tpu_custom_call.1} parent=31 // pred_region
          %s4679 = sadd.s32 %s21, %s22
          %s4680 = smul.u32 16, %s4679
          %s4682 = ssub.s32 4096, 4096
          %4683 = vsyncadd %s4672, %s4682
          %s4684 = smul.addr %s4680, 2
          %s4685 = smul.addr %s4684, 128
          %s4686 = scalar_lea.hbm %s3, %s4685
          %s4687 = sshll.u32 %s4675, 4
          %s4688 = int_to_ptr.vmem [resolvable:$true] %s4687
          %4693 = dma.vmem_to_hbm [thread:$0]  %s4688, 4096, %s4686, %s4672, 128, 128, 8
        $region36: #{tpu_custom_call.1} parent=31 // pred_fallthru
          _
      $region32: #{tpu_custom_call.1} parent=5 // pred_fallthru
        _
      %p4694 = scmp.le.s32.totalorder 2, %s12
      // Predicated region
      $region37: #{tpu_custom_call.1} parent=5 // pred_check
        %p4695 = pneg %p4694
      $region38: #{tpu_custom_call.1} parent=5 // pred_check_branch
        %4697 = sbr.rel (%p4695) target = $region40
      $region39: #{tpu_custom_call.1} parent=5 // pred_region
        %s4698 = ssub.s32 %s12, 2
        // Predicated region
        $region41: #{tpu_custom_call.1} parent=39 // pred_check
          %p4699 = pneg %p123
        $region42: #{tpu_custom_call.1} parent=39 // pred_check_branch
          %4701 = sbr.rel (%p4699) target = $region44
        $region43: #{tpu_custom_call.1} parent=39 // pred_region
          %s4702 = sand.u32 %s108, 1
          %s4703 = scalar_lea.sflag [#allocation3], %s4702
          %s4704 = sand.u32 %s108, 1
          %s4705 = smul.addr %s4704, 256
          %s4706 = scalar_lea.vmem [#allocation2], %s4705
          %4707 = dma.done %s4703, 4096
        $region44: #{tpu_custom_call.1} parent=39 // pred_fallthru
          _
      $region40: #{tpu_custom_call.1} parent=5 // pred_fallthru
        _
    $region6: #{tpu_custom_call.1} parent=1 // loop_footer
      %s16 = sadd.s32 1, %s12
    $region7: #{tpu_custom_call.1} parent=1 // loop_footer_branch
      %11 = sbr.rel target = $region3
    $region8: #{tpu_custom_call.1} parent=1 // loop_exit
      _
    %4708 = vsyncpa [#allocation3], 1
    %s4709 = scalar_lea.sflag [#allocation3], 1
    %4710 = vsyncpa %s4709, 1

</llo_original>
